<compile_context>
chip_gen: v6e
topology: v6e:2x2x1
jax: 0.10.0
libtpu: 0.0.40
codegen_flags: <defaults>
</compile_context>

<pallas_src>
import functools

import jax
import jax.numpy as jnp
from jax import lax
from jax.experimental import pallas as pl
from jax.experimental.pallas import tpu as pltpu

# --- small synthetic config consistent with the module ---------------------
JOINTS_NUM = 8                        # stand-in for len(read_bvh.joint_index)
FRAME_SIZE = 3 + JOINTS_NUM * 4       # 35 = 3 translation + 8 quaternions
HIDDEN = 32
GT_N = 3                              # ground-truth frames per block
COND_N = 2                            # autoregressive (conditioned) frames
PERIOD = GT_N + COND_N

FRAME_PAD = ((FRAME_SIZE + 127) // 128) * 128   # lane-pad the frame axis


def _mask_pattern(T):
    # np.tile(np.concatenate([np.ones(GT_N), np.zeros(COND_N)]), 100)[:T]
    return (([1] * GT_N + [0] * COND_N) * 100)[:T]


# --- the Pallas kernel ------------------------------------------------------
def _aclstm_kernel(seq_ref,                      # (Tc, Bp, Fp)  bf16 chunk
                   w1ih_ref,                     # (Fp, 4H)      bf16
                   whh_ref,                      # (3, H, 4H)    bf16
                   w23ih_ref,                    # (2, H, 4H)    bf16
                   b_ref,                        # (3, 4H)       f32 (b_ih+b_hh)
                   wdec_ref,                     # (H, Fp)       bf16
                   bdec_ref,                     # (1, Fp)       f32
                   q_ref,                        # (Fp, Fp)      bf16 0/1 groups
                   out_ref,                      # (Tc, Bp, Fp)  f32
                   state_ref,                    # VMEM (6, Bp, H) f32 scratch
                   y_ref,                        # VMEM (Bp, Fp)   f32 scratch
                   *, hidden, gt_n, period, frame_size):
    H = hidden
    Tc, B, F = out_ref.shape
    nblk = Tc // period                          # Tc is a multiple of period

    # zero the carried state at the start of the sequence
    @pl.when(pl.program_id(0) == 0)
    def _init():
        state_ref[...] = jnp.zeros_like(state_ref)
        y_ref[...] = jnp.zeros_like(y_ref)

    # ---- loop-invariant loads / broadcasts (hoisted out of the recurrence) --
    w1ih = w1ih_ref[...]
    whh1, whh2, whh3 = whh_ref[0], whh_ref[1], whh_ref[2]
    w2ih, w3ih = w23ih_ref[0], w23ih_ref[1]
    wdec = wdec_ref[...]
    q = q_ref[...]
    b_all = b_ref[...]
    b1 = jnp.broadcast_to(b_all[0:1], (B, 4 * H))
    b2 = jnp.broadcast_to(b_all[1:2], (B, 4 * H))
    b3 = jnp.broadcast_to(b_all[2:3], (B, 4 * H))
    bdec = jnp.broadcast_to(bdec_ref[...], (B, F))
    col = lax.broadcasted_iota(jnp.int32, (B, F), 1)
    # translation columns AND padded columns are never renormalised
    keep = (col < 3) | (col >= frame_size)

    bf16 = jnp.bfloat16

    def cell(x, h, c, wih, whh, bb):
        # two independent lane-aligned dots (no per-step concatenate)
        gates = (jnp.dot(x.astype(bf16), wih, preferred_element_type=jnp.float32)
                 + jnp.dot(h.astype(bf16), whh, preferred_element_type=jnp.float32)
                 + bb)
        sg = jax.nn.sigmoid(gates)               # full-vreg: covers i, f, o
        i = sg[:, 0 * H:1 * H]
        f = sg[:, 1 * H:2 * H]
        o = sg[:, 3 * H:4 * H]
        g = jnp.tanh(gates[:, 2 * H:3 * H])      # tanh only on the g slice
        c_new = f * c + i * g
        h_new = o * jnp.tanh(c_new)
        return h_new, c_new

    def lstm_stack(x, st):
        h1, c1, h2, c2, h3, c3 = st
        h1, c1 = cell(x,  h1, c1, w1ih, whh1, b1)
        h2, c2 = cell(h1, h2, c2, w2ih, whh2, b2)
        h3, c3 = cell(h2, h3, c3, w3ih, whh3, b3)
        return (h1, c1, h2, c2, h3, c3)

    def decode(h3):
        y = jnp.dot(h3.astype(bf16), wdec,
                    preferred_element_type=jnp.float32) + bdec
        # per-column sum of squares of its quaternion group via one matmul
        ss = jnp.dot((y * y).astype(bf16), q, preferred_element_type=jnp.float32)
        return jnp.where(keep, y, y / (jnp.sqrt(ss) + 1e-8))   # matches reference

    def block(bidx, carry):
        st = carry[:6]
        y = carry[6]
        t0 = bidx * period

        # teacher-forced steps: input comes straight from seq (static mask);
        # decoder+renorm of the first gt_n-1 steps is off the critical path.
        for k in range(gt_n):
            x = seq_ref[t0 + k]
            st = lstm_stack(x, st)
            y = decode(st[4])
            out_ref[t0 + k] = y

        # autoregressive steps: feed the previous (renormalised) output back.
        for k in range(gt_n, period):
            st = lstm_stack(y, st)
            y = decode(st[4])
            out_ref[t0 + k] = y

        return (*st, y)

    st0 = tuple(state_ref[i] for i in range(6))
    carry0 = (*st0, y_ref[...])
    final = lax.fori_loop(0, nblk, block, carry0)

    # persist state for the next time chunk
    for i in range(6):
        state_ref[i] = final[i]
    y_ref[...] = final[6]


# --- parameter packing (done once, outside the kernel) -----------------------
def _pack_params(params):
    H, F, Fp = HIDDEN, FRAME_SIZE, FRAME_PAD
    bf16 = jnp.bfloat16

    w1ih = (jnp.zeros((Fp, 4 * H), jnp.float32)
            .at[:F].set(params['w1ih'])).astype(bf16)                   # (Fp, 4H)
    whh = jnp.stack([params['w1hh'], params['w2hh'], params['w3hh']],
                    axis=0).astype(bf16)                                # (3, H, 4H)
    w23ih = jnp.stack([params['w2ih'], params['w3ih']],
                      axis=0).astype(bf16)                              # (2, H, 4H)
    b123 = jnp.concatenate([params['b1'], params['b2'], params['b3']],
                           axis=0).astype(jnp.float32)                  # (3, 4H)

    wdec = (jnp.zeros((H, Fp), jnp.float32)
            .at[:, :F].set(params['wdec'])).astype(bf16)                # (H, Fp)
    bdec = jnp.zeros((1, Fp), jnp.float32).at[:, :F].set(params['bdec'])

    # Q[k, k'] = 1 iff columns k and k' belong to the same quaternion group
    # (0/1 -> exact in bf16). Padded / translation columns are all-zero.
    k = jnp.arange(Fp)
    is_quat = (k >= 3) & (k < F)
    grp = (k - 3) // 4
    qmat = (is_quat[:, None] & is_quat[None, :]
            & (grp[:, None] == grp[None, :])).astype(bf16)              # (Fp, Fp)

    return w1ih, whh, w23ih, b123, wdec, bdec, qmat


# --- wrapper ----------------------------------------------------------------
def aclstm_forward(seq, params, *, t_chunk=80):
    """seq: (B, T, FRAME_SIZE) float32 -> (B, T, FRAME_SIZE) float32."""
    B, T, F = seq.shape
    assert F == FRAME_SIZE
    H = HIDDEN
    Bp = ((B + 7) // 8) * 8                       # pad batch to sublane width
    Fp = FRAME_PAD                                # pad frame axis to lane width

    # chunk the time axis; chunk length is a multiple of the forcing period so
    # the static per-slot masks stay valid across chunks.
    t_chunk = max(PERIOD, (t_chunk // PERIOD) * PERIOD)
    Tp = ((T + PERIOD - 1) // PERIOD) * PERIOD
    Tc = min(t_chunk, Tp)
    Tp = ((Tp + Tc - 1) // Tc) * Tc
    n_chunks = Tp // Tc

    # time-major, padded; streamed as bf16 (it only ever feeds bf16 matmuls)
    seq_tm = jnp.transpose(seq.astype(jnp.float32), (1, 0, 2))          # (T,B,F)
    seq_p = (jnp.zeros((Tp, Bp, Fp), jnp.bfloat16)
             .at[:T, :B, :F].set(seq_tm.astype(jnp.bfloat16)))

    w1ih, whh, w23ih, b123, wdec, bdec, qmat = _pack_params(params)

    def fullspec(shape):
        nd = len(shape)
        return pl.BlockSpec(shape, lambda i, nd=nd: (0,) * nd)

    # explicit VMEM budget: double-buffered bf16 seq chunk + f32 out chunk +
    # weights/scratch slack; clamp well under every generation's physical VMEM.
    vmem_bytes = int(min(100 << 20,
                         max(32 << 20,
                             2 * Tc * Bp * Fp * (2 + 4) + (4 << 20))))

    kernel = functools.partial(_aclstm_kernel, hidden=H, gt_n=GT_N,
                               period=PERIOD, frame_size=FRAME_SIZE)

    out_tm = pl.pallas_call(
        kernel,
        out_shape=jax.ShapeDtypeStruct((Tp, Bp, Fp), jnp.float32),
        grid_spec=pltpu.PrefetchScalarGridSpec(
            num_scalar_prefetch=0,
            grid=(n_chunks,),
            in_specs=[
                pl.BlockSpec((Tc, Bp, Fp), lambda i: (i, 0, 0)),  # seq chunk
                fullspec((Fp, 4 * H)),           # layer-1 W_ih (frame rows padded)
                fullspec((3, H, 4 * H)),         # W_hh for layers 1..3
                fullspec((2, H, 4 * H)),         # W_ih for layers 2, 3
                fullspec((3, 4 * H)),            # merged LSTM biases
                fullspec((H, Fp)),               # decoder weight
                fullspec((1, Fp)),               # decoder bias
                fullspec((Fp, Fp)),              # quaternion group matrix
            ],
            out_specs=pl.BlockSpec((Tc, Bp, Fp), lambda i: (i, 0, 0)),
            scratch_shapes=[
                pltpu.VMEM((6, Bp, H), jnp.float32),   # h1,c1,h2,c2,h3,c3 carry
                pltpu.VMEM((Bp, Fp), jnp.float32),     # y carry
            ]),
        compiler_params=pltpu.CompilerParams(
            dimension_semantics=("arbitrary",),        # recurrent: sequential
            vmem_limit_bytes=vmem_bytes),
    )(seq_p, w1ih, whh, w23ih, b123, wdec, bdec, qmat)

    return jnp.transpose(out_tm[:T, :B, :F], (1, 0, 2))


# --- deterministic parameter init (shapes from acLSTM.__init__) --------------
def init_params(key):
    H, F = HIDDEN, FRAME_SIZE
    s = 1.0 / float(H) ** 0.5
    ks = jax.random.split(key, 11)
    U = lambda k, shape: jax.random.uniform(k, shape, jnp.float32, -s, s)
    return {
        # LSTMCell(F, H), LSTMCell(H, H), LSTMCell(H, H); b = b_ih + b_hh merged
        'w1ih': U(ks[0], (F, 4 * H)), 'w1hh': U(ks[1], (H, 4 * H)), 'b1': U(ks[2], (1, 4 * H)),
        'w2ih': U(ks[3], (H, 4 * H)), 'w2hh': U(ks[4], (H, 4 * H)), 'b2': U(ks[5], (1, 4 * H)),
        'w3ih': U(ks[6], (H, 4 * H)), 'w3hh': U(ks[7], (H, 4 * H)), 'b3': U(ks[8], (1, 4 * H)),
        'wdec': U(ks[9], (H, F)),     'bdec': U(ks[10], (1, F)),
    }


# --- pure-JAX reference (mirrors the PyTorch forward) ------------------------
def aclstm_reference(seq, params):
    B, T, F = seq.shape
    H = HIDDEN
    mask = _mask_pattern(T)

    def cell(x, h, c, wih, whh, b):
        gates = x @ wih + h @ whh + b
        i = jax.nn.sigmoid(gates[:, :H])
        f = jax.nn.sigmoid(gates[:, H:2 * H])
        g = jnp.tanh(gates[:, 2 * H:3 * H])
        o = jax.nn.sigmoid(gates[:, 3 * H:])
        c2 = f * c + i * g
        return o * jnp.tanh(c2), c2

    h = [jnp.zeros((B, H), jnp.float32) for _ in range(3)]
    c = [jnp.zeros((B, H), jnp.float32) for _ in range(3)]
    y = jnp.zeros((B, F), jnp.float32)
    outs = []
    for t in range(T):
        x = seq[:, t] if mask[t] else y
        h[0], c[0] = cell(x,    h[0], c[0], params['w1ih'], params['w1hh'], params['b1'])
        h[1], c[1] = cell(h[0], h[1], c[1], params['w2ih'], params['w2hh'], params['b2'])
        h[2], c[2] = cell(h[1], h[2], c[2], params['w3ih'], params['w3hh'], params['b3'])
        y = h[2] @ params['wdec'] + params['bdec']
        trs = y[:, :3]
        rest = y[:, 3:].reshape(B, -1, 4)
        rest = rest / (jnp.linalg.norm(rest, axis=2, keepdims=True) + 1e-8)
        y = jnp.concatenate([trs, rest.reshape(B, -1)], axis=1)
        outs.append(y)
    return jnp.stack(outs, 1)


if __name__ == "__main__":
    key = jax.random.PRNGKey(0)
    kp, kx = jax.random.split(key)
    B, T = 2, 8
    params = init_params(kp)
    seq = jax.random.normal(kx, (B, T, FRAME_SIZE), jnp.float32)

    out = aclstm_forward(seq, params)
    out = jax.block_until_ready(out)

    ref = aclstm_reference(seq, params)
    assert out.shape == (B, T, FRAME_SIZE), out.shape
    err = float(jnp.max(jnp.abs(out - ref)))
    assert err < 5e-2, f"max abs err vs reference: {err}"
    print("KERNEL_OK")
</pallas_src>

<mosaic_0001>
module attributes {stable_mosaic.version = 11 : i64} {
  func.func @_aclstm_kernel(%arg0: i32, %arg1: memref<10x8x128xbf16, #tpu.memory_space<vmem>>, %arg2: memref<128x128xbf16, #tpu.memory_space<vmem>>, %arg3: memref<3x32x128xbf16, #tpu.memory_space<vmem>>, %arg4: memref<2x32x128xbf16, #tpu.memory_space<vmem>>, %arg5: memref<3x128xf32, #tpu.memory_space<vmem>>, %arg6: memref<32x128xbf16, #tpu.memory_space<vmem>>, %arg7: memref<1x128xf32, #tpu.memory_space<vmem>>, %arg8: memref<128x128xbf16, #tpu.memory_space<vmem>>, %arg9: memref<10x8x128xf32, #tpu.memory_space<vmem>>, %arg10: memref<6x8x32xf32, #tpu.memory_space<vmem>>, %arg11: memref<8x128xf32, #tpu.memory_space<vmem>>) attributes {dimension_semantics = [#tpu.dimension_semantics<arbitrary>], iteration_bounds = array<i64: 1>, scalar_prefetch = 0 : i64, scratch_operands = 2 : i64, tpu.core_type = #tpu.core_type<tc>, window_params = [{transform_indices = @transform_0, window_bounds = array<i64: 10, 8, 128>}, {pipeline_mode = #tpu.pipeline_mode<synchronous>, transform_indices = @transform_1, window_bounds = array<i64: 128, 128>}, {pipeline_mode = #tpu.pipeline_mode<synchronous>, transform_indices = @transform_2, window_bounds = array<i64: 3, 32, 128>}, {pipeline_mode = #tpu.pipeline_mode<synchronous>, transform_indices = @transform_3, window_bounds = array<i64: 2, 32, 128>}, {pipeline_mode = #tpu.pipeline_mode<synchronous>, transform_indices = @transform_4, window_bounds = array<i64: 3, 128>}, {pipeline_mode = #tpu.pipeline_mode<synchronous>, transform_indices = @transform_5, window_bounds = array<i64: 32, 128>}, {pipeline_mode = #tpu.pipeline_mode<synchronous>, transform_indices = @transform_6, window_bounds = array<i64: 1, 128>}, {pipeline_mode = #tpu.pipeline_mode<synchronous>, transform_indices = @transform_7, window_bounds = array<i64: 128, 128>}, {transform_indices = @transform_8, window_bounds = array<i64: 10, 8, 128>}]} {
    %c0_i32 = arith.constant 0 : i32
    %0 = arith.cmpi eq, %arg0, %c0_i32 : i32
    %1 = arith.extui %0 : i1 to i32
    %c0_i32_0 = arith.constant 0 : i32
    %2 = arith.cmpi ne, %1, %c0_i32_0 : i32
    scf.if %2 {
      %cst = arith.constant 0.000000e+00 : f32
      %69 = vector.broadcast %cst : f32 to vector<6x8x32xf32>
      %c0_62 = arith.constant 0 : index
      %c0_63 = arith.constant 0 : index
      %c0_64 = arith.constant 0 : index
      %70 = vector.load %arg10[%c0_62, %c0_63, %c0_64] : memref<6x8x32xf32, #tpu.memory_space<vmem>>, vector<6x8x32xf32>
      tpu.vector_store %arg10[%c0_62, %c0_63, %c0_64], %69 {strides = array<i32>} : memref<6x8x32xf32, #tpu.memory_space<vmem>>, vector<6x8x32xf32>,
      %cst_65 = arith.constant 0.000000e+00 : f32
      %71 = vector.broadcast %cst_65 : f32 to vector<8x128xf32>
      %c0_66 = arith.constant 0 : index
      %c0_67 = arith.constant 0 : index
      %72 = vector.load %arg11[%c0_66, %c0_67] : memref<8x128xf32, #tpu.memory_space<vmem>>, vector<8x128xf32>
      tpu.vector_store %arg11[%c0_66, %c0_67], %71 {strides = array<i32>} : memref<8x128xf32, #tpu.memory_space<vmem>>, vector<8x128xf32>,
    } else {
    }
    %c0 = arith.constant 0 : index
    %c0_1 = arith.constant 0 : index
    %3 = vector.load %arg2[%c0, %c0_1] : memref<128x128xbf16, #tpu.memory_space<vmem>>, vector<128x128xbf16>
    %c0_2 = arith.constant 0 : index
    %c0_3 = arith.constant 0 : index
    %c0_4 = arith.constant 0 : index
    %4 = vector.load %arg3[%c0_2, %c0_3, %c0_4] : memref<3x32x128xbf16, #tpu.memory_space<vmem>>, vector<1x32x128xbf16>
    %5 = vector.shape_cast %4 : vector<1x32x128xbf16> to vector<32x128xbf16>
    %c1 = arith.constant 1 : index
    %c0_5 = arith.constant 0 : index
    %c0_6 = arith.constant 0 : index
    %6 = vector.load %arg3[%c1, %c0_5, %c0_6] : memref<3x32x128xbf16, #tpu.memory_space<vmem>>, vector<1x32x128xbf16>
    %7 = vector.shape_cast %6 : vector<1x32x128xbf16> to vector<32x128xbf16>
    %c2 = arith.constant 2 : index
    %c0_7 = arith.constant 0 : index
    %c0_8 = arith.constant 0 : index
    %8 = vector.load %arg3[%c2, %c0_7, %c0_8] : memref<3x32x128xbf16, #tpu.memory_space<vmem>>, vector<1x32x128xbf16>
    %9 = vector.shape_cast %8 : vector<1x32x128xbf16> to vector<32x128xbf16>
    %c0_9 = arith.constant 0 : index
    %c0_10 = arith.constant 0 : index
    %c0_11 = arith.constant 0 : index
    %10 = vector.load %arg4[%c0_9, %c0_10, %c0_11] : memref<2x32x128xbf16, #tpu.memory_space<vmem>>, vector<1x32x128xbf16>
    %11 = vector.shape_cast %10 : vector<1x32x128xbf16> to vector<32x128xbf16>
    %c1_12 = arith.constant 1 : index
    %c0_13 = arith.constant 0 : index
    %c0_14 = arith.constant 0 : index
    %12 = vector.load %arg4[%c1_12, %c0_13, %c0_14] : memref<2x32x128xbf16, #tpu.memory_space<vmem>>, vector<1x32x128xbf16>
    %13 = vector.shape_cast %12 : vector<1x32x128xbf16> to vector<32x128xbf16>
    %c0_15 = arith.constant 0 : index
    %c0_16 = arith.constant 0 : index
    %14 = vector.load %arg6[%c0_15, %c0_16] : memref<32x128xbf16, #tpu.memory_space<vmem>>, vector<32x128xbf16>
    %c0_17 = arith.constant 0 : index
    %c0_18 = arith.constant 0 : index
    %15 = vector.load %arg8[%c0_17, %c0_18] : memref<128x128xbf16, #tpu.memory_space<vmem>>, vector<128x128xbf16>
    %c0_19 = arith.constant 0 : index
    %c0_20 = arith.constant 0 : index
    %16 = vector.load %arg5[%c0_19, %c0_20] : memref<3x128xf32, #tpu.memory_space<vmem>>, vector<3x128xf32>
    %17 = vector.extract_strided_slice %16 {offsets = [0, 0], sizes = [1, 128], strides = [1, 1]} : vector<3x128xf32> to vector<1x128xf32>
    %18 = vector.shape_cast %17 : vector<1x128xf32> to vector<1x128xf32>
    %19 = vector.broadcast %18 : vector<1x128xf32> to vector<8x128xf32>
    %20 = vector.extract_strided_slice %16 {offsets = [1, 0], sizes = [1, 128], strides = [1, 1]} : vector<3x128xf32> to vector<1x128xf32>
    %21 = vector.shape_cast %20 : vector<1x128xf32> to vector<1x128xf32>
    %22 = vector.broadcast %21 : vector<1x128xf32> to vector<8x128xf32>
    %23 = vector.extract_strided_slice %16 {offsets = [2, 0], sizes = [1, 128], strides = [1, 1]} : vector<3x128xf32> to vector<1x128xf32>
    %24 = vector.shape_cast %23 : vector<1x128xf32> to vector<1x128xf32>
    %25 = vector.broadcast %24 : vector<1x128xf32> to vector<8x128xf32>
    %c0_21 = arith.constant 0 : index
    %c0_22 = arith.constant 0 : index
    %26 = vector.load %arg7[%c0_21, %c0_22] : memref<1x128xf32, #tpu.memory_space<vmem>>, vector<1x128xf32>
    %27 = vector.shape_cast %26 : vector<1x128xf32> to vector<1x128xf32>
    %28 = vector.broadcast %27 : vector<1x128xf32> to vector<8x128xf32>
    %29 = tpu.iota {dimensions = array<i32: 1>} : vector<8x128xi32>
    %c3_i32 = arith.constant 3 : i32
    %30 = vector.broadcast %c3_i32 : i32 to vector<8x128xi32>
    %31 = arith.cmpi slt, %29, %30 : vector<8x128xi32>
    %c35_i32 = arith.constant 35 : i32
    %32 = vector.broadcast %c35_i32 : i32 to vector<8x128xi32>
    %33 = arith.cmpi sge, %29, %32 : vector<8x128xi32>
    %34 = arith.ori %31, %33 : vector<8x128xi1>
    %c0_23 = arith.constant 0 : index
    %c0_24 = arith.constant 0 : index
    %c0_25 = arith.constant 0 : index
    %35 = vector.load %arg10[%c0_23, %c0_24, %c0_25] : memref<6x8x32xf32, #tpu.memory_space<vmem>>, vector<1x8x32xf32>
    %36 = vector.shape_cast %35 : vector<1x8x32xf32> to vector<8x32xf32>
    %c1_26 = arith.constant 1 : index
    %c0_27 = arith.constant 0 : index
    %c0_28 = arith.constant 0 : index
    %37 = vector.load %arg10[%c1_26, %c0_27, %c0_28] : memref<6x8x32xf32, #tpu.memory_space<vmem>>, vector<1x8x32xf32>
    %38 = vector.shape_cast %37 : vector<1x8x32xf32> to vector<8x32xf32>
    %c2_29 = arith.constant 2 : index
    %c0_30 = arith.constant 0 : index
    %c0_31 = arith.constant 0 : index
    %39 = vector.load %arg10[%c2_29, %c0_30, %c0_31] : memref<6x8x32xf32, #tpu.memory_space<vmem>>, vector<1x8x32xf32>
    %40 = vector.shape_cast %39 : vector<1x8x32xf32> to vector<8x32xf32>
    %c3 = arith.constant 3 : index
    %c0_32 = arith.constant 0 : index
    %c0_33 = arith.constant 0 : index
    %41 = vector.load %arg10[%c3, %c0_32, %c0_33] : memref<6x8x32xf32, #tpu.memory_space<vmem>>, vector<1x8x32xf32>
    %42 = vector.shape_cast %41 : vector<1x8x32xf32> to vector<8x32xf32>
    %c4 = arith.constant 4 : index
    %c0_34 = arith.constant 0 : index
    %c0_35 = arith.constant 0 : index
    %43 = vector.load %arg10[%c4, %c0_34, %c0_35] : memref<6x8x32xf32, #tpu.memory_space<vmem>>, vector<1x8x32xf32>
    %44 = vector.shape_cast %43 : vector<1x8x32xf32> to vector<8x32xf32>
    %c5 = arith.constant 5 : index
    %c0_36 = arith.constant 0 : index
    %c0_37 = arith.constant 0 : index
    %45 = vector.load %arg10[%c5, %c0_36, %c0_37] : memref<6x8x32xf32, #tpu.memory_space<vmem>>, vector<1x8x32xf32>
    %46 = vector.shape_cast %45 : vector<1x8x32xf32> to vector<8x32xf32>
    %c0_38 = arith.constant 0 : index
    %c0_39 = arith.constant 0 : index
    %47 = vector.load %arg11[%c0_38, %c0_39] : memref<8x128xf32, #tpu.memory_space<vmem>>, vector<8x128xf32>
    %c0_i32_40 = arith.constant 0 : i32
    %c2_i32 = arith.constant 2 : i32
    %48 = arith.addi %c0_i32_40, %c2_i32 : i32
    %c1_i32 = arith.constant 1 : i32
    %49:7 = scf.for %arg12 = %c0_i32_40 to %48 step %c1_i32 iter_args(%arg13 = %36, %arg14 = %38, %arg15 = %40, %arg16 = %42, %arg17 = %44, %arg18 = %46, %arg19 = %47) -> (vector<8x32xf32>, vector<8x32xf32>, vector<8x32xf32>, vector<8x32xf32>, vector<8x32xf32>, vector<8x32xf32>, vector<8x128xf32>)  : i32 {
      %c5_i32 = arith.constant 5 : i32
      %69 = arith.muli %arg12, %c5_i32 : i32
      %c0_i32_62 = arith.constant 0 : i32
      %70 = arith.addi %69, %c0_i32_62 : i32
      %71 = arith.index_cast %70 : i32 to index
      %c0_63 = arith.constant 0 : index
      %c0_64 = arith.constant 0 : index
      %72 = vector.load %arg1[%71, %c0_63, %c0_64] : memref<10x8x128xbf16, #tpu.memory_space<vmem>>, vector<1x8x128xbf16>
      %73 = vector.shape_cast %72 : vector<1x8x128xbf16> to vector<8x128xbf16>
      %cst = arith.constant dense<0.000000e+00> : vector<8x128xf32>
      %74 = tpu.matmul %73, %3, %cst {dimension_numbers = #tpu.dot_dimension_numbers<[1], [0], [0], [1], [0, 0, 1, 1], [], []>} : vector<8x128xbf16>, vector<128x128xbf16>, vector<8x128xf32> -> vector<8x128xf32>
      %75 = arith.truncf %arg13 : vector<8x32xf32> to vector<8x32xbf16>
      %cst_65 = arith.constant dense<0.000000e+00> : vector<8x128xf32>
      %76 = tpu.matmul %75, %5, %cst_65 {dimension_numbers = #tpu.dot_dimension_numbers<[1], [0], [0], [1], [0, 0, 1, 1], [], []>} : vector<8x32xbf16>, vector<32x128xbf16>, vector<8x128xf32> -> vector<8x128xf32>
      %77 = arith.addf %74, %76 : vector<8x128xf32>
      %78 = arith.addf %77, %19 : vector<8x128xf32>
      %79 = arith.negf %78 : vector<8x128xf32>
      %80 = math.exp %79 : vector<8x128xf32>
      %cst_66 = arith.constant 1.000000e+00 : f32
      %81 = vector.broadcast %cst_66 : f32 to vector<8x128xf32>
      %82 = arith.addf %81, %80 : vector<8x128xf32>
      %83 = arith.divf %81, %82 : vector<8x128xf32>
      %84 = vector.extract_strided_slice %83 {offsets = [0, 0], sizes = [8, 32], strides = [1, 1]} : vector<8x128xf32> to vector<8x32xf32>
      %85 = vector.extract_strided_slice %83 {offsets = [0, 32], sizes = [8, 32], strides = [1, 1]} : vector<8x128xf32> to vector<8x32xf32>
      %86 = vector.extract_strided_slice %83 {offsets = [0, 96], sizes = [8, 32], strides = [1, 1]} : vector<8x128xf32> to vector<8x32xf32>
      %87 = vector.extract_strided_slice %78 {offsets = [0, 64], sizes = [8, 32], strides = [1, 1]} : vector<8x128xf32> to vector<8x32xf32>
      %88 = math.tanh %87 : vector<8x32xf32>
      %89 = arith.mulf %85, %arg14 : vector<8x32xf32>
      %90 = arith.mulf %84, %88 : vector<8x32xf32>
      %91 = arith.addf %89, %90 : vector<8x32xf32>
      %92 = math.tanh %91 : vector<8x32xf32>
      %93 = arith.mulf %86, %92 : vector<8x32xf32>
      %94 = arith.truncf %93 : vector<8x32xf32> to vector<8x32xbf16>
      %cst_67 = arith.constant dense<0.000000e+00> : vector<8x128xf32>
      %95 = tpu.matmul %94, %11, %cst_67 {dimension_numbers = #tpu.dot_dimension_numbers<[1], [0], [0], [1], [0, 0, 1, 1], [], []>} : vector<8x32xbf16>, vector<32x128xbf16>, vector<8x128xf32> -> vector<8x128xf32>
      %96 = arith.truncf %arg15 : vector<8x32xf32> to vector<8x32xbf16>
      %cst_68 = arith.constant dense<0.000000e+00> : vector<8x128xf32>
      %97 = tpu.matmul %96, %7, %cst_68 {dimension_numbers = #tpu.dot_dimension_numbers<[1], [0], [0], [1], [0, 0, 1, 1], [], []>} : vector<8x32xbf16>, vector<32x128xbf16>, vector<8x128xf32> -> vector<8x128xf32>
      %98 = arith.addf %95, %97 : vector<8x128xf32>
      %99 = arith.addf %98, %22 : vector<8x128xf32>
      %100 = arith.negf %99 : vector<8x128xf32>
      %101 = math.exp %100 : vector<8x128xf32>
      %cst_69 = arith.constant 1.000000e+00 : f32
      %102 = vector.broadcast %cst_69 : f32 to vector<8x128xf32>
      %103 = arith.addf %102, %101 : vector<8x128xf32>
      %104 = arith.divf %102, %103 : vector<8x128xf32>
      %105 = vector.extract_strided_slice %104 {offsets = [0, 0], sizes = [8, 32], strides = [1, 1]} : vector<8x128xf32> to vector<8x32xf32>
      %106 = vector.extract_strided_slice %104 {offsets = [0, 32], sizes = [8, 32], strides = [1, 1]} : vector<8x128xf32> to vector<8x32xf32>
      %107 = vector.extract_strided_slice %104 {offsets = [0, 96], sizes = [8, 32], strides = [1, 1]} : vector<8x128xf32> to vector<8x32xf32>
      %108 = vector.extract_strided_slice %99 {offsets = [0, 64], sizes = [8, 32], strides = [1, 1]} : vector<8x128xf32> to vector<8x32xf32>
      %109 = math.tanh %108 : vector<8x32xf32>
      %110 = arith.mulf %106, %arg16 : vector<8x32xf32>
      %111 = arith.mulf %105, %109 : vector<8x32xf32>
      %112 = arith.addf %110, %111 : vector<8x32xf32>
      %113 = math.tanh %112 : vector<8x32xf32>
      %114 = arith.mulf %107, %113 : vector<8x32xf32>
      %115 = arith.truncf %114 : vector<8x32xf32> to vector<8x32xbf16>
      %cst_70 = arith.constant dense<0.000000e+00> : vector<8x128xf32>
      %116 = tpu.matmul %115, %13, %cst_70 {dimension_numbers = #tpu.dot_dimension_numbers<[1], [0], [0], [1], [0, 0, 1, 1], [], []>} : vector<8x32xbf16>, vector<32x128xbf16>, vector<8x128xf32> -> vector<8x128xf32>
      %117 = arith.truncf %arg17 : vector<8x32xf32> to vector<8x32xbf16>
      %cst_71 = arith.constant dense<0.000000e+00> : vector<8x128xf32>
      %118 = tpu.matmul %117, %9, %cst_71 {dimension_numbers = #tpu.dot_dimension_numbers<[1], [0], [0], [1], [0, 0, 1, 1], [], []>} : vector<8x32xbf16>, vector<32x128xbf16>, vector<8x128xf32> -> vector<8x128xf32>
      %119 = arith.addf %116, %118 : vector<8x128xf32>
      %120 = arith.addf %119, %25 : vector<8x128xf32>
      %121 = arith.negf %120 : vector<8x128xf32>
      %122 = math.exp %121 : vector<8x128xf32>
      %cst_72 = arith.constant 1.000000e+00 : f32
      %123 = vector.broadcast %cst_72 : f32 to vector<8x128xf32>
      %124 = arith.addf %123, %122 : vector<8x128xf32>
      %125 = arith.divf %123, %124 : vector<8x128xf32>
      %126 = vector.extract_strided_slice %125 {offsets = [0, 0], sizes = [8, 32], strides = [1, 1]} : vector<8x128xf32> to vector<8x32xf32>
      %127 = vector.extract_strided_slice %125 {offsets = [0, 32], sizes = [8, 32], strides = [1, 1]} : vector<8x128xf32> to vector<8x32xf32>
      %128 = vector.extract_strided_slice %125 {offsets = [0, 96], sizes = [8, 32], strides = [1, 1]} : vector<8x128xf32> to vector<8x32xf32>
      %129 = vector.extract_strided_slice %120 {offsets = [0, 64], sizes = [8, 32], strides = [1, 1]} : vector<8x128xf32> to vector<8x32xf32>
      %130 = math.tanh %129 : vector<8x32xf32>
      %131 = arith.mulf %127, %arg18 : vector<8x32xf32>
      %132 = arith.mulf %126, %130 : vector<8x32xf32>
      %133 = arith.addf %131, %132 : vector<8x32xf32>
      %134 = math.tanh %133 : vector<8x32xf32>
      %135 = arith.mulf %128, %134 : vector<8x32xf32>
      %136 = arith.truncf %135 : vector<8x32xf32> to vector<8x32xbf16>
      %cst_73 = arith.constant dense<0.000000e+00> : vector<8x128xf32>
      %137 = tpu.matmul %136, %14, %cst_73 {dimension_numbers = #tpu.dot_dimension_numbers<[1], [0], [0], [1], [0, 0, 1, 1], [], []>} : vector<8x32xbf16>, vector<32x128xbf16>, vector<8x128xf32> -> vector<8x128xf32>
      %138 = arith.addf %137, %28 : vector<8x128xf32>
      %139 = arith.mulf %138, %138 : vector<8x128xf32>
      %140 = arith.truncf %139 : vector<8x128xf32> to vector<8x128xbf16>
      %cst_74 = arith.constant dense<0.000000e+00> : vector<8x128xf32>
      %141 = tpu.matmul %140, %15, %cst_74 {dimension_numbers = #tpu.dot_dimension_numbers<[1], [0], [0], [1], [0, 0, 1, 1], [], []>} : vector<8x128xbf16>, vector<128x128xbf16>, vector<8x128xf32> -> vector<8x128xf32>
      %142 = math.sqrt %141 : vector<8x128xf32>
      %cst_75 = arith.constant 9.99999993E-9 : f32
      %143 = vector.broadcast %cst_75 : f32 to vector<8x128xf32>
      %144 = arith.addf %142, %143 : vector<8x128xf32>
      %145 = arith.divf %138, %144 : vector<8x128xf32>
      %146 = arith.select %34, %138, %145 : vector<8x128xi1>, vector<8x128xf32>
      %c0_i32_76 = arith.constant 0 : i32
      %147 = arith.addi %69, %c0_i32_76 : i32
      %148 = arith.index_cast %147 : i32 to index
      %c0_77 = arith.constant 0 : index
      %c0_78 = arith.constant 0 : index
      %149 = vector.load %arg9[%148, %c0_77, %c0_78] : memref<10x8x128xf32, #tpu.memory_space<vmem>>, vector<1x8x128xf32>
      %150 = vector.shape_cast %149 : vector<1x8x128xf32> to vector<8x128xf32>
      %151 = vector.shape_cast %146 : vector<8x128xf32> to vector<1x8x128xf32>
      tpu.vector_store %arg9[%148, %c0_77, %c0_78], %151 {strides = array<i32>} : memref<10x8x128xf32, #tpu.memory_space<vmem>>, vector<1x8x128xf32>,
      %c1_i32_79 = arith.constant 1 : i32
      %152 = arith.addi %69, %c1_i32_79 : i32
      %153 = arith.index_cast %152 : i32 to index
      %c0_80 = arith.constant 0 : index
      %c0_81 = arith.constant 0 : index
      %154 = vector.load %arg1[%153, %c0_80, %c0_81] : memref<10x8x128xbf16, #tpu.memory_space<vmem>>, vector<1x8x128xbf16>
      %155 = vector.shape_cast %154 : vector<1x8x128xbf16> to vector<8x128xbf16>
      %cst_82 = arith.constant dense<0.000000e+00> : vector<8x128xf32>
      %156 = tpu.matmul %155, %3, %cst_82 {dimension_numbers = #tpu.dot_dimension_numbers<[1], [0], [0], [1], [0, 0, 1, 1], [], []>} : vector<8x128xbf16>, vector<128x128xbf16>, vector<8x128xf32> -> vector<8x128xf32>
      %157 = arith.truncf %93 : vector<8x32xf32> to vector<8x32xbf16>
      %cst_83 = arith.constant dense<0.000000e+00> : vector<8x128xf32>
      %158 = tpu.matmul %157, %5, %cst_83 {dimension_numbers = #tpu.dot_dimension_numbers<[1], [0], [0], [1], [0, 0, 1, 1], [], []>} : vector<8x32xbf16>, vector<32x128xbf16>, vector<8x128xf32> -> vector<8x128xf32>
      %159 = arith.addf %156, %158 : vector<8x128xf32>
      %160 = arith.addf %159, %19 : vector<8x128xf32>
      %161 = arith.negf %160 : vector<8x128xf32>
      %162 = math.exp %161 : vector<8x128xf32>
      %cst_84 = arith.constant 1.000000e+00 : f32
      %163 = vector.broadcast %cst_84 : f32 to vector<8x128xf32>
      %164 = arith.addf %163, %162 : vector<8x128xf32>
      %165 = arith.divf %163, %164 : vector<8x128xf32>
      %166 = vector.extract_strided_slice %165 {offsets = [0, 0], sizes = [8, 32], strides = [1, 1]} : vector<8x128xf32> to vector<8x32xf32>
      %167 = vector.extract_strided_slice %165 {offsets = [0, 32], sizes = [8, 32], strides = [1, 1]} : vector<8x128xf32> to vector<8x32xf32>
      %168 = vector.extract_strided_slice %165 {offsets = [0, 96], sizes = [8, 32], strides = [1, 1]} : vector<8x128xf32> to vector<8x32xf32>
      %169 = vector.extract_strided_slice %160 {offsets = [0, 64], sizes = [8, 32], strides = [1, 1]} : vector<8x128xf32> to vector<8x32xf32>
      %170 = math.tanh %169 : vector<8x32xf32>
      %171 = arith.mulf %167, %91 : vector<8x32xf32>
      %172 = arith.mulf %166, %170 : vector<8x32xf32>
      %173 = arith.addf %171, %172 : vector<8x32xf32>
      %174 = math.tanh %173 : vector<8x32xf32>
      %175 = arith.mulf %168, %174 : vector<8x32xf32>
      %176 = arith.truncf %175 : vector<8x32xf32> to vector<8x32xbf16>
      %cst_85 = arith.constant dense<0.000000e+00> : vector<8x128xf32>
      %177 = tpu.matmul %176, %11, %cst_85 {dimension_numbers = #tpu.dot_dimension_numbers<[1], [0], [0], [1], [0, 0, 1, 1], [], []>} : vector<8x32xbf16>, vector<32x128xbf16>, vector<8x128xf32> -> vector<8x128xf32>
      %178 = arith.truncf %114 : vector<8x32xf32> to vector<8x32xbf16>
      %cst_86 = arith.constant dense<0.000000e+00> : vector<8x128xf32>
      %179 = tpu.matmul %178, %7, %cst_86 {dimension_numbers = #tpu.dot_dimension_numbers<[1], [0], [0], [1], [0, 0, 1, 1], [], []>} : vector<8x32xbf16>, vector<32x128xbf16>, vector<8x128xf32> -> vector<8x128xf32>
      %180 = arith.addf %177, %179 : vector<8x128xf32>
      %181 = arith.addf %180, %22 : vector<8x128xf32>
      %182 = arith.negf %181 : vector<8x128xf32>
      %183 = math.exp %182 : vector<8x128xf32>
      %cst_87 = arith.constant 1.000000e+00 : f32
      %184 = vector.broadcast %cst_87 : f32 to vector<8x128xf32>
      %185 = arith.addf %184, %183 : vector<8x128xf32>
      %186 = arith.divf %184, %185 : vector<8x128xf32>
      %187 = vector.extract_strided_slice %186 {offsets = [0, 0], sizes = [8, 32], strides = [1, 1]} : vector<8x128xf32> to vector<8x32xf32>
      %188 = vector.extract_strided_slice %186 {offsets = [0, 32], sizes = [8, 32], strides = [1, 1]} : vector<8x128xf32> to vector<8x32xf32>
      %189 = vector.extract_strided_slice %186 {offsets = [0, 96], sizes = [8, 32], strides = [1, 1]} : vector<8x128xf32> to vector<8x32xf32>
      %190 = vector.extract_strided_slice %181 {offsets = [0, 64], sizes = [8, 32], strides = [1, 1]} : vector<8x128xf32> to vector<8x32xf32>
      %191 = math.tanh %190 : vector<8x32xf32>
      %192 = arith.mulf %188, %112 : vector<8x32xf32>
      %193 = arith.mulf %187, %191 : vector<8x32xf32>
      %194 = arith.addf %192, %193 : vector<8x32xf32>
      %195 = math.tanh %194 : vector<8x32xf32>
      %196 = arith.mulf %189, %195 : vector<8x32xf32>
      %197 = arith.truncf %196 : vector<8x32xf32> to vector<8x32xbf16>
      %cst_88 = arith.constant dense<0.000000e+00> : vector<8x128xf32>
      %198 = tpu.matmul %197, %13, %cst_88 {dimension_numbers = #tpu.dot_dimension_numbers<[1], [0], [0], [1], [0, 0, 1, 1], [], []>} : vector<8x32xbf16>, vector<32x128xbf16>, vector<8x128xf32> -> vector<8x128xf32>
      %199 = arith.truncf %135 : vector<8x32xf32> to vector<8x32xbf16>
      %cst_89 = arith.constant dense<0.000000e+00> : vector<8x128xf32>
      %200 = tpu.matmul %199, %9, %cst_89 {dimension_numbers = #tpu.dot_dimension_numbers<[1], [0], [0], [1], [0, 0, 1, 1], [], []>} : vector<8x32xbf16>, vector<32x128xbf16>, vector<8x128xf32> -> vector<8x128xf32>
      %201 = arith.addf %198, %200 : vector<8x128xf32>
      %202 = arith.addf %201, %25 : vector<8x128xf32>
      %203 = arith.negf %202 : vector<8x128xf32>
      %204 = math.exp %203 : vector<8x128xf32>
      %cst_90 = arith.constant 1.000000e+00 : f32
      %205 = vector.broadcast %cst_90 : f32 to vector<8x128xf32>
      %206 = arith.addf %205, %204 : vector<8x128xf32>
      %207 = arith.divf %205, %206 : vector<8x128xf32>
      %208 = vector.extract_strided_slice %207 {offsets = [0, 0], sizes = [8, 32], strides = [1, 1]} : vector<8x128xf32> to vector<8x32xf32>
      %209 = vector.extract_strided_slice %207 {offsets = [0, 32], sizes = [8, 32], strides = [1, 1]} : vector<8x128xf32> to vector<8x32xf32>
      %210 = vector.extract_strided_slice %207 {offsets = [0, 96], sizes = [8, 32], strides = [1, 1]} : vector<8x128xf32> to vector<8x32xf32>
      %211 = vector.extract_strided_slice %202 {offsets = [0, 64], sizes = [8, 32], strides = [1, 1]} : vector<8x128xf32> to vector<8x32xf32>
      %212 = math.tanh %211 : vector<8x32xf32>
      %213 = arith.mulf %209, %133 : vector<8x32xf32>
      %214 = arith.mulf %208, %212 : vector<8x32xf32>
      %215 = arith.addf %213, %214 : vector<8x32xf32>
      %216 = math.tanh %215 : vector<8x32xf32>
      %217 = arith.mulf %210, %216 : vector<8x32xf32>
      %218 = arith.truncf %217 : vector<8x32xf32> to vector<8x32xbf16>
      %cst_91 = arith.constant dense<0.000000e+00> : vector<8x128xf32>
      %219 = tpu.matmul %218, %14, %cst_91 {dimension_numbers = #tpu.dot_dimension_numbers<[1], [0], [0], [1], [0, 0, 1, 1], [], []>} : vector<8x32xbf16>, vector<32x128xbf16>, vector<8x128xf32> -> vector<8x128xf32>
      %220 = arith.addf %219, %28 : vector<8x128xf32>
      %221 = arith.mulf %220, %220 : vector<8x128xf32>
      %222 = arith.truncf %221 : vector<8x128xf32> to vector<8x128xbf16>
      %cst_92 = arith.constant dense<0.000000e+00> : vector<8x128xf32>
      %223 = tpu.matmul %222, %15, %cst_92 {dimension_numbers = #tpu.dot_dimension_numbers<[1], [0], [0], [1], [0, 0, 1, 1], [], []>} : vector<8x128xbf16>, vector<128x128xbf16>, vector<8x128xf32> -> vector<8x128xf32>
      %224 = math.sqrt %223 : vector<8x128xf32>
      %cst_93 = arith.constant 9.99999993E-9 : f32
      %225 = vector.broadcast %cst_93 : f32 to vector<8x128xf32>
      %226 = arith.addf %224, %225 : vector<8x128xf32>
      %227 = arith.divf %220, %226 : vector<8x128xf32>
      %228 = arith.select %34, %220, %227 : vector<8x128xi1>, vector<8x128xf32>
      %c1_i32_94 = arith.constant 1 : i32
      %229 = arith.addi %69, %c1_i32_94 : i32
      %230 = arith.index_cast %229 : i32 to index
      %c0_95 = arith.constant 0 : index
      %c0_96 = arith.constant 0 : index
      %231 = vector.load %arg9[%230, %c0_95, %c0_96] : memref<10x8x128xf32, #tpu.memory_space<vmem>>, vector<1x8x128xf32>
      %232 = vector.shape_cast %231 : vector<1x8x128xf32> to vector<8x128xf32>
      %233 = vector.shape_cast %228 : vector<8x128xf32> to vector<1x8x128xf32>
      tpu.vector_store %arg9[%230, %c0_95, %c0_96], %233 {strides = array<i32>} : memref<10x8x128xf32, #tpu.memory_space<vmem>>, vector<1x8x128xf32>,
      %c2_i32_97 = arith.constant 2 : i32
      %234 = arith.addi %69, %c2_i32_97 : i32
      %235 = arith.index_cast %234 : i32 to index
      %c0_98 = arith.constant 0 : index
      %c0_99 = arith.constant 0 : index
      %236 = vector.load %arg1[%235, %c0_98, %c0_99] : memref<10x8x128xbf16, #tpu.memory_space<vmem>>, vector<1x8x128xbf16>
      %237 = vector.shape_cast %236 : vector<1x8x128xbf16> to vector<8x128xbf16>
      %cst_100 = arith.constant dense<0.000000e+00> : vector<8x128xf32>
      %238 = tpu.matmul %237, %3, %cst_100 {dimension_numbers = #tpu.dot_dimension_numbers<[1], [0], [0], [1], [0, 0, 1, 1], [], []>} : vector<8x128xbf16>, vector<128x128xbf16>, vector<8x128xf32> -> vector<8x128xf32>
      %239 = arith.truncf %175 : vector<8x32xf32> to vector<8x32xbf16>
      %cst_101 = arith.constant dense<0.000000e+00> : vector<8x128xf32>
      %240 = tpu.matmul %239, %5, %cst_101 {dimension_numbers = #tpu.dot_dimension_numbers<[1], [0], [0], [1], [0, 0, 1, 1], [], []>} : vector<8x32xbf16>, vector<32x128xbf16>, vector<8x128xf32> -> vector<8x128xf32>
      %241 = arith.addf %238, %240 : vector<8x128xf32>
      %242 = arith.addf %241, %19 : vector<8x128xf32>
      %243 = arith.negf %242 : vector<8x128xf32>
      %244 = math.exp %243 : vector<8x128xf32>
      %cst_102 = arith.constant 1.000000e+00 : f32
      %245 = vector.broadcast %cst_102 : f32 to vector<8x128xf32>
      %246 = arith.addf %245, %244 : vector<8x128xf32>
      %247 = arith.divf %245, %246 : vector<8x128xf32>
      %248 = vector.extract_strided_slice %247 {offsets = [0, 0], sizes = [8, 32], strides = [1, 1]} : vector<8x128xf32> to vector<8x32xf32>
      %249 = vector.extract_strided_slice %247 {offsets = [0, 32], sizes = [8, 32], strides = [1, 1]} : vector<8x128xf32> to vector<8x32xf32>
      %250 = vector.extract_strided_slice %247 {offsets = [0, 96], sizes = [8, 32], strides = [1, 1]} : vector<8x128xf32> to vector<8x32xf32>
      %251 = vector.extract_strided_slice %242 {offsets = [0, 64], sizes = [8, 32], strides = [1, 1]} : vector<8x128xf32> to vector<8x32xf32>
      %252 = math.tanh %251 : vector<8x32xf32>
      %253 = arith.mulf %249, %173 : vector<8x32xf32>
      %254 = arith.mulf %248, %252 : vector<8x32xf32>
      %255 = arith.addf %253, %254 : vector<8x32xf32>
      %256 = math.tanh %255 : vector<8x32xf32>
      %257 = arith.mulf %250, %256 : vector<8x32xf32>
      %258 = arith.truncf %257 : vector<8x32xf32> to vector<8x32xbf16>
      %cst_103 = arith.constant dense<0.000000e+00> : vector<8x128xf32>
      %259 = tpu.matmul %258, %11, %cst_103 {dimension_numbers = #tpu.dot_dimension_numbers<[1], [0], [0], [1], [0, 0, 1, 1], [], []>} : vector<8x32xbf16>, vector<32x128xbf16>, vector<8x128xf32> -> vector<8x128xf32>
      %260 = arith.truncf %196 : vector<8x32xf32> to vector<8x32xbf16>
      %cst_104 = arith.constant dense<0.000000e+00> : vector<8x128xf32>
      %261 = tpu.matmul %260, %7, %cst_104 {dimension_numbers = #tpu.dot_dimension_numbers<[1], [0], [0], [1], [0, 0, 1, 1], [], []>} : vector<8x32xbf16>, vector<32x128xbf16>, vector<8x128xf32> -> vector<8x128xf32>
      %262 = arith.addf %259, %261 : vector<8x128xf32>
      %263 = arith.addf %262, %22 : vector<8x128xf32>
      %264 = arith.negf %263 : vector<8x128xf32>
      %265 = math.exp %264 : vector<8x128xf32>
      %cst_105 = arith.constant 1.000000e+00 : f32
      %266 = vector.broadcast %cst_105 : f32 to vector<8x128xf32>
      %267 = arith.addf %266, %265 : vector<8x128xf32>
      %268 = arith.divf %266, %267 : vector<8x128xf32>
      %269 = vector.extract_strided_slice %268 {offsets = [0, 0], sizes = [8, 32], strides = [1, 1]} : vector<8x128xf32> to vector<8x32xf32>
      %270 = vector.extract_strided_slice %268 {offsets = [0, 32], sizes = [8, 32], strides = [1, 1]} : vector<8x128xf32> to vector<8x32xf32>
      %271 = vector.extract_strided_slice %268 {offsets = [0, 96], sizes = [8, 32], strides = [1, 1]} : vector<8x128xf32> to vector<8x32xf32>
      %272 = vector.extract_strided_slice %263 {offsets = [0, 64], sizes = [8, 32], strides = [1, 1]} : vector<8x128xf32> to vector<8x32xf32>
      %273 = math.tanh %272 : vector<8x32xf32>
      %274 = arith.mulf %270, %194 : vector<8x32xf32>
      %275 = arith.mulf %269, %273 : vector<8x32xf32>
      %276 = arith.addf %274, %275 : vector<8x32xf32>
      %277 = math.tanh %276 : vector<8x32xf32>
      %278 = arith.mulf %271, %277 : vector<8x32xf32>
      %279 = arith.truncf %278 : vector<8x32xf32> to vector<8x32xbf16>
      %cst_106 = arith.constant dense<0.000000e+00> : vector<8x128xf32>
      %280 = tpu.matmul %279, %13, %cst_106 {dimension_numbers = #tpu.dot_dimension_numbers<[1], [0], [0], [1], [0, 0, 1, 1], [], []>} : vector<8x32xbf16>, vector<32x128xbf16>, vector<8x128xf32> -> vector<8x128xf32>
      %281 = arith.truncf %217 : vector<8x32xf32> to vector<8x32xbf16>
      %cst_107 = arith.constant dense<0.000000e+00> : vector<8x128xf32>
      %282 = tpu.matmul %281, %9, %cst_107 {dimension_numbers = #tpu.dot_dimension_numbers<[1], [0], [0], [1], [0, 0, 1, 1], [], []>} : vector<8x32xbf16>, vector<32x128xbf16>, vector<8x128xf32> -> vector<8x128xf32>
      %283 = arith.addf %280, %282 : vector<8x128xf32>
      %284 = arith.addf %283, %25 : vector<8x128xf32>
      %285 = arith.negf %284 : vector<8x128xf32>
      %286 = math.exp %285 : vector<8x128xf32>
      %cst_108 = arith.constant 1.000000e+00 : f32
      %287 = vector.broadcast %cst_108 : f32 to vector<8x128xf32>
      %288 = arith.addf %287, %286 : vector<8x128xf32>
      %289 = arith.divf %287, %288 : vector<8x128xf32>
      %290 = vector.extract_strided_slice %289 {offsets = [0, 0], sizes = [8, 32], strides = [1, 1]} : vector<8x128xf32> to vector<8x32xf32>
      %291 = vector.extract_strided_slice %289 {offsets = [0, 32], sizes = [8, 32], strides = [1, 1]} : vector<8x128xf32> to vector<8x32xf32>
      %292 = vector.extract_strided_slice %289 {offsets = [0, 96], sizes = [8, 32], strides = [1, 1]} : vector<8x128xf32> to vector<8x32xf32>
      %293 = vector.extract_strided_slice %284 {offsets = [0, 64], sizes = [8, 32], strides = [1, 1]} : vector<8x128xf32> to vector<8x32xf32>
      %294 = math.tanh %293 : vector<8x32xf32>
      %295 = arith.mulf %291, %215 : vector<8x32xf32>
      %296 = arith.mulf %290, %294 : vector<8x32xf32>
      %297 = arith.addf %295, %296 : vector<8x32xf32>
      %298 = math.tanh %297 : vector<8x32xf32>
      %299 = arith.mulf %292, %298 : vector<8x32xf32>
      %300 = arith.truncf %299 : vector<8x32xf32> to vector<8x32xbf16>
      %cst_109 = arith.constant dense<0.000000e+00> : vector<8x128xf32>
      %301 = tpu.matmul %300, %14, %cst_109 {dimension_numbers = #tpu.dot_dimension_numbers<[1], [0], [0], [1], [0, 0, 1, 1], [], []>} : vector<8x32xbf16>, vector<32x128xbf16>, vector<8x128xf32> -> vector<8x128xf32>
      %302 = arith.addf %301, %28 : vector<8x128xf32>
      %303 = arith.mulf %302, %302 : vector<8x128xf32>
      %304 = arith.truncf %303 : vector<8x128xf32> to vector<8x128xbf16>
      %cst_110 = arith.constant dense<0.000000e+00> : vector<8x128xf32>
      %305 = tpu.matmul %304, %15, %cst_110 {dimension_numbers = #tpu.dot_dimension_numbers<[1], [0], [0], [1], [0, 0, 1, 1], [], []>} : vector<8x128xbf16>, vector<128x128xbf16>, vector<8x128xf32> -> vector<8x128xf32>
      %306 = math.sqrt %305 : vector<8x128xf32>
      %cst_111 = arith.constant 9.99999993E-9 : f32
      %307 = vector.broadcast %cst_111 : f32 to vector<8x128xf32>
      %308 = arith.addf %306, %307 : vector<8x128xf32>
      %309 = arith.divf %302, %308 : vector<8x128xf32>
      %310 = arith.select %34, %302, %309 : vector<8x128xi1>, vector<8x128xf32>
      %c2_i32_112 = arith.constant 2 : i32
      %311 = arith.addi %69, %c2_i32_112 : i32
      %312 = arith.index_cast %311 : i32 to index
      %c0_113 = arith.constant 0 : index
      %c0_114 = arith.constant 0 : index
      %313 = vector.load %arg9[%312, %c0_113, %c0_114] : memref<10x8x128xf32, #tpu.memory_space<vmem>>, vector<1x8x128xf32>
      %314 = vector.shape_cast %313 : vector<1x8x128xf32> to vector<8x128xf32>
      %315 = vector.shape_cast %310 : vector<8x128xf32> to vector<1x8x128xf32>
      tpu.vector_store %arg9[%312, %c0_113, %c0_114], %315 {strides = array<i32>} : memref<10x8x128xf32, #tpu.memory_space<vmem>>, vector<1x8x128xf32>,
      %316 = arith.truncf %310 : vector<8x128xf32> to vector<8x128xbf16>
      %cst_115 = arith.constant dense<0.000000e+00> : vector<8x128xf32>
      %317 = tpu.matmul %316, %3, %cst_115 {dimension_numbers = #tpu.dot_dimension_numbers<[1], [0], [0], [1], [0, 0, 1, 1], [], []>} : vector<8x128xbf16>, vector<128x128xbf16>, vector<8x128xf32> -> vector<8x128xf32>
      %318 = arith.truncf %257 : vector<8x32xf32> to vector<8x32xbf16>
      %cst_116 = arith.constant dense<0.000000e+00> : vector<8x128xf32>
      %319 = tpu.matmul %318, %5, %cst_116 {dimension_numbers = #tpu.dot_dimension_numbers<[1], [0], [0], [1], [0, 0, 1, 1], [], []>} : vector<8x32xbf16>, vector<32x128xbf16>, vector<8x128xf32> -> vector<8x128xf32>
      %320 = arith.addf %317, %319 : vector<8x128xf32>
      %321 = arith.addf %320, %19 : vector<8x128xf32>
      %322 = arith.negf %321 : vector<8x128xf32>
      %323 = math.exp %322 : vector<8x128xf32>
      %cst_117 = arith.constant 1.000000e+00 : f32
      %324 = vector.broadcast %cst_117 : f32 to vector<8x128xf32>
      %325 = arith.addf %324, %323 : vector<8x128xf32>
      %326 = arith.divf %324, %325 : vector<8x128xf32>
      %327 = vector.extract_strided_slice %326 {offsets = [0, 0], sizes = [8, 32], strides = [1, 1]} : vector<8x128xf32> to vector<8x32xf32>
      %328 = vector.extract_strided_slice %326 {offsets = [0, 32], sizes = [8, 32], strides = [1, 1]} : vector<8x128xf32> to vector<8x32xf32>
      %329 = vector.extract_strided_slice %326 {offsets = [0, 96], sizes = [8, 32], strides = [1, 1]} : vector<8x128xf32> to vector<8x32xf32>
      %330 = vector.extract_strided_slice %321 {offsets = [0, 64], sizes = [8, 32], strides = [1, 1]} : vector<8x128xf32> to vector<8x32xf32>
      %331 = math.tanh %330 : vector<8x32xf32>
      %332 = arith.mulf %328, %255 : vector<8x32xf32>
      %333 = arith.mulf %327, %331 : vector<8x32xf32>
      %334 = arith.addf %332, %333 : vector<8x32xf32>
      %335 = math.tanh %334 : vector<8x32xf32>
      %336 = arith.mulf %329, %335 : vector<8x32xf32>
      %337 = arith.truncf %336 : vector<8x32xf32> to vector<8x32xbf16>
      %cst_118 = arith.constant dense<0.000000e+00> : vector<8x128xf32>
      %338 = tpu.matmul %337, %11, %cst_118 {dimension_numbers = #tpu.dot_dimension_numbers<[1], [0], [0], [1], [0, 0, 1, 1], [], []>} : vector<8x32xbf16>, vector<32x128xbf16>, vector<8x128xf32> -> vector<8x128xf32>
      %339 = arith.truncf %278 : vector<8x32xf32> to vector<8x32xbf16>
      %cst_119 = arith.constant dense<0.000000e+00> : vector<8x128xf32>
      %340 = tpu.matmul %339, %7, %cst_119 {dimension_numbers = #tpu.dot_dimension_numbers<[1], [0], [0], [1], [0, 0, 1, 1], [], []>} : vector<8x32xbf16>, vector<32x128xbf16>, vector<8x128xf32> -> vector<8x128xf32>
      %341 = arith.addf %338, %340 : vector<8x128xf32>
      %342 = arith.addf %341, %22 : vector<8x128xf32>
      %343 = arith.negf %342 : vector<8x128xf32>
      %344 = math.exp %343 : vector<8x128xf32>
      %cst_120 = arith.constant 1.000000e+00 : f32
      %345 = vector.broadcast %cst_120 : f32 to vector<8x128xf32>
      %346 = arith.addf %345, %344 : vector<8x128xf32>
      %347 = arith.divf %345, %346 : vector<8x128xf32>
      %348 = vector.extract_strided_slice %347 {offsets = [0, 0], sizes = [8, 32], strides = [1, 1]} : vector<8x128xf32> to vector<8x32xf32>
      %349 = vector.extract_strided_slice %347 {offsets = [0, 32], sizes = [8, 32], strides = [1, 1]} : vector<8x128xf32> to vector<8x32xf32>
      %350 = vector.extract_strided_slice %347 {offsets = [0, 96], sizes = [8, 32], strides = [1, 1]} : vector<8x128xf32> to vector<8x32xf32>
      %351 = vector.extract_strided_slice %342 {offsets = [0, 64], sizes = [8, 32], strides = [1, 1]} : vector<8x128xf32> to vector<8x32xf32>
      %352 = math.tanh %351 : vector<8x32xf32>
      %353 = arith.mulf %349, %276 : vector<8x32xf32>
      %354 = arith.mulf %348, %352 : vector<8x32xf32>
      %355 = arith.addf %353, %354 : vector<8x32xf32>
      %356 = math.tanh %355 : vector<8x32xf32>
      %357 = arith.mulf %350, %356 : vector<8x32xf32>
      %358 = arith.truncf %357 : vector<8x32xf32> to vector<8x32xbf16>
      %cst_121 = arith.constant dense<0.000000e+00> : vector<8x128xf32>
      %359 = tpu.matmul %358, %13, %cst_121 {dimension_numbers = #tpu.dot_dimension_numbers<[1], [0], [0], [1], [0, 0, 1, 1], [], []>} : vector<8x32xbf16>, vector<32x128xbf16>, vector<8x128xf32> -> vector<8x128xf32>
      %360 = arith.truncf %299 : vector<8x32xf32> to vector<8x32xbf16>
      %cst_122 = arith.constant dense<0.000000e+00> : vector<8x128xf32>
      %361 = tpu.matmul %360, %9, %cst_122 {dimension_numbers = #tpu.dot_dimension_numbers<[1], [0], [0], [1], [0, 0, 1, 1], [], []>} : vector<8x32xbf16>, vector<32x128xbf16>, vector<8x128xf32> -> vector<8x128xf32>
      %362 = arith.addf %359, %361 : vector<8x128xf32>
      %363 = arith.addf %362, %25 : vector<8x128xf32>
      %364 = arith.negf %363 : vector<8x128xf32>
      %365 = math.exp %364 : vector<8x128xf32>
      %cst_123 = arith.constant 1.000000e+00 : f32
      %366 = vector.broadcast %cst_123 : f32 to vector<8x128xf32>
      %367 = arith.addf %366, %365 : vector<8x128xf32>
      %368 = arith.divf %366, %367 : vector<8x128xf32>
      %369 = vector.extract_strided_slice %368 {offsets = [0, 0], sizes = [8, 32], strides = [1, 1]} : vector<8x128xf32> to vector<8x32xf32>
      %370 = vector.extract_strided_slice %368 {offsets = [0, 32], sizes = [8, 32], strides = [1, 1]} : vector<8x128xf32> to vector<8x32xf32>
      %371 = vector.extract_strided_slice %368 {offsets = [0, 96], sizes = [8, 32], strides = [1, 1]} : vector<8x128xf32> to vector<8x32xf32>
      %372 = vector.extract_strided_slice %363 {offsets = [0, 64], sizes = [8, 32], strides = [1, 1]} : vector<8x128xf32> to vector<8x32xf32>
      %373 = math.tanh %372 : vector<8x32xf32>
      %374 = arith.mulf %370, %297 : vector<8x32xf32>
      %375 = arith.mulf %369, %373 : vector<8x32xf32>
      %376 = arith.addf %374, %375 : vector<8x32xf32>
      %377 = math.tanh %376 : vector<8x32xf32>
      %378 = arith.mulf %371, %377 : vector<8x32xf32>
      %379 = arith.truncf %378 : vector<8x32xf32> to vector<8x32xbf16>
      %cst_124 = arith.constant dense<0.000000e+00> : vector<8x128xf32>
      %380 = tpu.matmul %379, %14, %cst_124 {dimension_numbers = #tpu.dot_dimension_numbers<[1], [0], [0], [1], [0, 0, 1, 1], [], []>} : vector<8x32xbf16>, vector<32x128xbf16>, vector<8x128xf32> -> vector<8x128xf32>
      %381 = arith.addf %380, %28 : vector<8x128xf32>
      %382 = arith.mulf %381, %381 : vector<8x128xf32>
      %383 = arith.truncf %382 : vector<8x128xf32> to vector<8x128xbf16>
      %cst_125 = arith.constant dense<0.000000e+00> : vector<8x128xf32>
      %384 = tpu.matmul %383, %15, %cst_125 {dimension_numbers = #tpu.dot_dimension_numbers<[1], [0], [0], [1], [0, 0, 1, 1], [], []>} : vector<8x128xbf16>, vector<128x128xbf16>, vector<8x128xf32> -> vector<8x128xf32>
      %385 = math.sqrt %384 : vector<8x128xf32>
      %cst_126 = arith.constant 9.99999993E-9 : f32
      %386 = vector.broadcast %cst_126 : f32 to vector<8x128xf32>
      %387 = arith.addf %385, %386 : vector<8x128xf32>
      %388 = arith.divf %381, %387 : vector<8x128xf32>
      %389 = arith.select %34, %381, %388 : vector<8x128xi1>, vector<8x128xf32>
      %c3_i32_127 = arith.constant 3 : i32
      %390 = arith.addi %69, %c3_i32_127 : i32
      %391 = arith.index_cast %390 : i32 to index
      %c0_128 = arith.constant 0 : index
      %c0_129 = arith.constant 0 : index
      %392 = vector.load %arg9[%391, %c0_128, %c0_129] : memref<10x8x128xf32, #tpu.memory_space<vmem>>, vector<1x8x128xf32>
      %393 = vector.shape_cast %392 : vector<1x8x128xf32> to vector<8x128xf32>
      %394 = vector.shape_cast %389 : vector<8x128xf32> to vector<1x8x128xf32>
      tpu.vector_store %arg9[%391, %c0_128, %c0_129], %394 {strides = array<i32>} : memref<10x8x128xf32, #tpu.memory_space<vmem>>, vector<1x8x128xf32>,
      %395 = arith.truncf %389 : vector<8x128xf32> to vector<8x128xbf16>
      %cst_130 = arith.constant dense<0.000000e+00> : vector<8x128xf32>
      %396 = tpu.matmul %395, %3, %cst_130 {dimension_numbers = #tpu.dot_dimension_numbers<[1], [0], [0], [1], [0, 0, 1, 1], [], []>} : vector<8x128xbf16>, vector<128x128xbf16>, vector<8x128xf32> -> vector<8x128xf32>
      %397 = arith.truncf %336 : vector<8x32xf32> to vector<8x32xbf16>
      %cst_131 = arith.constant dense<0.000000e+00> : vector<8x128xf32>
      %398 = tpu.matmul %397, %5, %cst_131 {dimension_numbers = #tpu.dot_dimension_numbers<[1], [0], [0], [1], [0, 0, 1, 1], [], []>} : vector<8x32xbf16>, vector<32x128xbf16>, vector<8x128xf32> -> vector<8x128xf32>
      %399 = arith.addf %396, %398 : vector<8x128xf32>
      %400 = arith.addf %399, %19 : vector<8x128xf32>
      %401 = arith.negf %400 : vector<8x128xf32>
      %402 = math.exp %401 : vector<8x128xf32>
      %cst_132 = arith.constant 1.000000e+00 : f32
      %403 = vector.broadcast %cst_132 : f32 to vector<8x128xf32>
      %404 = arith.addf %403, %402 : vector<8x128xf32>
      %405 = arith.divf %403, %404 : vector<8x128xf32>
      %406 = vector.extract_strided_slice %405 {offsets = [0, 0], sizes = [8, 32], strides = [1, 1]} : vector<8x128xf32> to vector<8x32xf32>
      %407 = vector.extract_strided_slice %405 {offsets = [0, 32], sizes = [8, 32], strides = [1, 1]} : vector<8x128xf32> to vector<8x32xf32>
      %408 = vector.extract_strided_slice %405 {offsets = [0, 96], sizes = [8, 32], strides = [1, 1]} : vector<8x128xf32> to vector<8x32xf32>
      %409 = vector.extract_strided_slice %400 {offsets = [0, 64], sizes = [8, 32], strides = [1, 1]} : vector<8x128xf32> to vector<8x32xf32>
      %410 = math.tanh %409 : vector<8x32xf32>
      %411 = arith.mulf %407, %334 : vector<8x32xf32>
      %412 = arith.mulf %406, %410 : vector<8x32xf32>
      %413 = arith.addf %411, %412 : vector<8x32xf32>
      %414 = math.tanh %413 : vector<8x32xf32>
      %415 = arith.mulf %408, %414 : vector<8x32xf32>
      %416 = arith.truncf %415 : vector<8x32xf32> to vector<8x32xbf16>
      %cst_133 = arith.constant dense<0.000000e+00> : vector<8x128xf32>
      %417 = tpu.matmul %416, %11, %cst_133 {dimension_numbers = #tpu.dot_dimension_numbers<[1], [0], [0], [1], [0, 0, 1, 1], [], []>} : vector<8x32xbf16>, vector<32x128xbf16>, vector<8x128xf32> -> vector<8x128xf32>
      %418 = arith.truncf %357 : vector<8x32xf32> to vector<8x32xbf16>
      %cst_134 = arith.constant dense<0.000000e+00> : vector<8x128xf32>
      %419 = tpu.matmul %418, %7, %cst_134 {dimension_numbers = #tpu.dot_dimension_numbers<[1], [0], [0], [1], [0, 0, 1, 1], [], []>} : vector<8x32xbf16>, vector<32x128xbf16>, vector<8x128xf32> -> vector<8x128xf32>
      %420 = arith.addf %417, %419 : vector<8x128xf32>
      %421 = arith.addf %420, %22 : vector<8x128xf32>
      %422 = arith.negf %421 : vector<8x128xf32>
      %423 = math.exp %422 : vector<8x128xf32>
      %cst_135 = arith.constant 1.000000e+00 : f32
      %424 = vector.broadcast %cst_135 : f32 to vector<8x128xf32>
      %425 = arith.addf %424, %423 : vector<8x128xf32>
      %426 = arith.divf %424, %425 : vector<8x128xf32>
      %427 = vector.extract_strided_slice %426 {offsets = [0, 0], sizes = [8, 32], strides = [1, 1]} : vector<8x128xf32> to vector<8x32xf32>
      %428 = vector.extract_strided_slice %426 {offsets = [0, 32], sizes = [8, 32], strides = [1, 1]} : vector<8x128xf32> to vector<8x32xf32>
      %429 = vector.extract_strided_slice %426 {offsets = [0, 96], sizes = [8, 32], strides = [1, 1]} : vector<8x128xf32> to vector<8x32xf32>
      %430 = vector.extract_strided_slice %421 {offsets = [0, 64], sizes = [8, 32], strides = [1, 1]} : vector<8x128xf32> to vector<8x32xf32>
      %431 = math.tanh %430 : vector<8x32xf32>
      %432 = arith.mulf %428, %355 : vector<8x32xf32>
      %433 = arith.mulf %427, %431 : vector<8x32xf32>
      %434 = arith.addf %432, %433 : vector<8x32xf32>
      %435 = math.tanh %434 : vector<8x32xf32>
      %436 = arith.mulf %429, %435 : vector<8x32xf32>
      %437 = arith.truncf %436 : vector<8x32xf32> to vector<8x32xbf16>
      %cst_136 = arith.constant dense<0.000000e+00> : vector<8x128xf32>
      %438 = tpu.matmul %437, %13, %cst_136 {dimension_numbers = #tpu.dot_dimension_numbers<[1], [0], [0], [1], [0, 0, 1, 1], [], []>} : vector<8x32xbf16>, vector<32x128xbf16>, vector<8x128xf32> -> vector<8x128xf32>
      %439 = arith.truncf %378 : vector<8x32xf32> to vector<8x32xbf16>
      %cst_137 = arith.constant dense<0.000000e+00> : vector<8x128xf32>
      %440 = tpu.matmul %439, %9, %cst_137 {dimension_numbers = #tpu.dot_dimension_numbers<[1], [0], [0], [1], [0, 0, 1, 1], [], []>} : vector<8x32xbf16>, vector<32x128xbf16>, vector<8x128xf32> -> vector<8x128xf32>
      %441 = arith.addf %438, %440 : vector<8x128xf32>
      %442 = arith.addf %441, %25 : vector<8x128xf32>
      %443 = arith.negf %442 : vector<8x128xf32>
      %444 = math.exp %443 : vector<8x128xf32>
      %cst_138 = arith.constant 1.000000e+00 : f32
      %445 = vector.broadcast %cst_138 : f32 to vector<8x128xf32>
      %446 = arith.addf %445, %444 : vector<8x128xf32>
      %447 = arith.divf %445, %446 : vector<8x128xf32>
      %448 = vector.extract_strided_slice %447 {offsets = [0, 0], sizes = [8, 32], strides = [1, 1]} : vector<8x128xf32> to vector<8x32xf32>
      %449 = vector.extract_strided_slice %447 {offsets = [0, 32], sizes = [8, 32], strides = [1, 1]} : vector<8x128xf32> to vector<8x32xf32>
      %450 = vector.extract_strided_slice %447 {offsets = [0, 96], sizes = [8, 32], strides = [1, 1]} : vector<8x128xf32> to vector<8x32xf32>
      %451 = vector.extract_strided_slice %442 {offsets = [0, 64], sizes = [8, 32], strides = [1, 1]} : vector<8x128xf32> to vector<8x32xf32>
      %452 = math.tanh %451 : vector<8x32xf32>
      %453 = arith.mulf %449, %376 : vector<8x32xf32>
      %454 = arith.mulf %448, %452 : vector<8x32xf32>
      %455 = arith.addf %453, %454 : vector<8x32xf32>
      %456 = math.tanh %455 : vector<8x32xf32>
      %457 = arith.mulf %450, %456 : vector<8x32xf32>
      %458 = arith.truncf %457 : vector<8x32xf32> to vector<8x32xbf16>
      %cst_139 = arith.constant dense<0.000000e+00> : vector<8x128xf32>
      %459 = tpu.matmul %458, %14, %cst_139 {dimension_numbers = #tpu.dot_dimension_numbers<[1], [0], [0], [1], [0, 0, 1, 1], [], []>} : vector<8x32xbf16>, vector<32x128xbf16>, vector<8x128xf32> -> vector<8x128xf32>
      %460 = arith.addf %459, %28 : vector<8x128xf32>
      %461 = arith.mulf %460, %460 : vector<8x128xf32>
      %462 = arith.truncf %461 : vector<8x128xf32> to vector<8x128xbf16>
      %cst_140 = arith.constant dense<0.000000e+00> : vector<8x128xf32>
      %463 = tpu.matmul %462, %15, %cst_140 {dimension_numbers = #tpu.dot_dimension_numbers<[1], [0], [0], [1], [0, 0, 1, 1], [], []>} : vector<8x128xbf16>, vector<128x128xbf16>, vector<8x128xf32> -> vector<8x128xf32>
      %464 = math.sqrt %463 : vector<8x128xf32>
      %cst_141 = arith.constant 9.99999993E-9 : f32
      %465 = vector.broadcast %cst_141 : f32 to vector<8x128xf32>
      %466 = arith.addf %464, %465 : vector<8x128xf32>
      %467 = arith.divf %460, %466 : vector<8x128xf32>
      %468 = arith.select %34, %460, %467 : vector<8x128xi1>, vector<8x128xf32>
      %c4_i32 = arith.constant 4 : i32
      %469 = arith.addi %69, %c4_i32 : i32
      %470 = arith.index_cast %469 : i32 to index
      %c0_142 = arith.constant 0 : index
      %c0_143 = arith.constant 0 : index
      %471 = vector.load %arg9[%470, %c0_142, %c0_143] : memref<10x8x128xf32, #tpu.memory_space<vmem>>, vector<1x8x128xf32>
      %472 = vector.shape_cast %471 : vector<1x8x128xf32> to vector<8x128xf32>
      %473 = vector.shape_cast %468 : vector<8x128xf32> to vector<1x8x128xf32>
      tpu.vector_store %arg9[%470, %c0_142, %c0_143], %473 {strides = array<i32>} : memref<10x8x128xf32, #tpu.memory_space<vmem>>, vector<1x8x128xf32>,
      scf.yield %415, %413, %436, %434, %457, %455, %468 : vector<8x32xf32>, vector<8x32xf32>, vector<8x32xf32>, vector<8x32xf32>, vector<8x32xf32>, vector<8x32xf32>, vector<8x128xf32>
    }
    %c2_i32_41 = arith.constant 2 : i32
    %c0_42 = arith.constant 0 : index
    %c0_43 = arith.constant 0 : index
    %c0_44 = arith.constant 0 : index
    %50 = vector.load %arg10[%c0_42, %c0_43, %c0_44] : memref<6x8x32xf32, #tpu.memory_space<vmem>>, vector<1x8x32xf32>
    %51 = vector.shape_cast %50 : vector<1x8x32xf32> to vector<8x32xf32>
    %52 = vector.shape_cast %49#0 : vector<8x32xf32> to vector<1x8x32xf32>
    tpu.vector_store %arg10[%c0_42, %c0_43, %c0_44], %52 {strides = array<i32>} : memref<6x8x32xf32, #tpu.memory_space<vmem>>, vector<1x8x32xf32>,
    %c1_45 = arith.constant 1 : index
    %c0_46 = arith.constant 0 : index
    %c0_47 = arith.constant 0 : index
    %53 = vector.load %arg10[%c1_45, %c0_46, %c0_47] : memref<6x8x32xf32, #tpu.memory_space<vmem>>, vector<1x8x32xf32>
    %54 = vector.shape_cast %53 : vector<1x8x32xf32> to vector<8x32xf32>
    %55 = vector.shape_cast %49#1 : vector<8x32xf32> to vector<1x8x32xf32>
    tpu.vector_store %arg10[%c1_45, %c0_46, %c0_47], %55 {strides = array<i32>} : memref<6x8x32xf32, #tpu.memory_space<vmem>>, vector<1x8x32xf32>,
    %c2_48 = arith.constant 2 : index
    %c0_49 = arith.constant 0 : index
    %c0_50 = arith.constant 0 : index
    %56 = vector.load %arg10[%c2_48, %c0_49, %c0_50] : memref<6x8x32xf32, #tpu.memory_space<vmem>>, vector<1x8x32xf32>
    %57 = vector.shape_cast %56 : vector<1x8x32xf32> to vector<8x32xf32>
    %58 = vector.shape_cast %49#2 : vector<8x32xf32> to vector<1x8x32xf32>
    tpu.vector_store %arg10[%c2_48, %c0_49, %c0_50], %58 {strides = array<i32>} : memref<6x8x32xf32, #tpu.memory_space<vmem>>, vector<1x8x32xf32>,
    %c3_51 = arith.constant 3 : index
    %c0_52 = arith.constant 0 : index
    %c0_53 = arith.constant 0 : index
    %59 = vector.load %arg10[%c3_51, %c0_52, %c0_53] : memref<6x8x32xf32, #tpu.memory_space<vmem>>, vector<1x8x32xf32>
    %60 = vector.shape_cast %59 : vector<1x8x32xf32> to vector<8x32xf32>
    %61 = vector.shape_cast %49#3 : vector<8x32xf32> to vector<1x8x32xf32>
    tpu.vector_store %arg10[%c3_51, %c0_52, %c0_53], %61 {strides = array<i32>} : memref<6x8x32xf32, #tpu.memory_space<vmem>>, vector<1x8x32xf32>,
    %c4_54 = arith.constant 4 : index
    %c0_55 = arith.constant 0 : index
    %c0_56 = arith.constant 0 : index
    %62 = vector.load %arg10[%c4_54, %c0_55, %c0_56] : memref<6x8x32xf32, #tpu.memory_space<vmem>>, vector<1x8x32xf32>
    %63 = vector.shape_cast %62 : vector<1x8x32xf32> to vector<8x32xf32>
    %64 = vector.shape_cast %49#4 : vector<8x32xf32> to vector<1x8x32xf32>
    tpu.vector_store %arg10[%c4_54, %c0_55, %c0_56], %64 {strides = array<i32>} : memref<6x8x32xf32, #tpu.memory_space<vmem>>, vector<1x8x32xf32>,
    %c5_57 = arith.constant 5 : index
    %c0_58 = arith.constant 0 : index
    %c0_59 = arith.constant 0 : index
    %65 = vector.load %arg10[%c5_57, %c0_58, %c0_59] : memref<6x8x32xf32, #tpu.memory_space<vmem>>, vector<1x8x32xf32>
    %66 = vector.shape_cast %65 : vector<1x8x32xf32> to vector<8x32xf32>
    %67 = vector.shape_cast %49#5 : vector<8x32xf32> to vector<1x8x32xf32>
    tpu.vector_store %arg10[%c5_57, %c0_58, %c0_59], %67 {strides = array<i32>} : memref<6x8x32xf32, #tpu.memory_space<vmem>>, vector<1x8x32xf32>,
    %c0_60 = arith.constant 0 : index
    %c0_61 = arith.constant 0 : index
    %68 = vector.load %arg11[%c0_60, %c0_61] : memref<8x128xf32, #tpu.memory_space<vmem>>, vector<8x128xf32>
    tpu.vector_store %arg11[%c0_60, %c0_61], %49#6 {strides = array<i32>} : memref<8x128xf32, #tpu.memory_space<vmem>>, vector<8x128xf32>,
    return
  }
  func.func @transform_0(%arg0: i32) -> (i32, i32, i32) {
    %c0_i32 = arith.constant 0 : i32
    %c0_i32_0 = arith.constant 0 : i32
    %c0_i32_1 = arith.constant 0 : i32
    return %arg0, %c0_i32, %c0_i32_0 : i32, i32, i32
  }
  func.func @transform_1(%arg0: i32) -> (i32, i32) {
    %c0_i32 = arith.constant 0 : i32
    %c0_i32_0 = arith.constant 0 : i32
    %c0_i32_1 = arith.constant 0 : i32
    return %c0_i32, %c0_i32_0 : i32, i32
  }
  func.func @transform_2(%arg0: i32) -> (i32, i32, i32) {
    %c0_i32 = arith.constant 0 : i32
    %c0_i32_0 = arith.constant 0 : i32
    %c0_i32_1 = arith.constant 0 : i32
    %c0_i32_2 = arith.constant 0 : i32
    return %c0_i32, %c0_i32_0, %c0_i32_1 : i32, i32, i32
  }
  func.func @transform_3(%arg0: i32) -> (i32, i32, i32) {
    %c0_i32 = arith.constant 0 : i32
    %c0_i32_0 = arith.constant 0 : i32
    %c0_i32_1 = arith.constant 0 : i32
    %c0_i32_2 = arith.constant 0 : i32
    return %c0_i32, %c0_i32_0, %c0_i32_1 : i32, i32, i32
  }
  func.func @transform_4(%arg0: i32) -> (i32, i32) {
    %c0_i32 = arith.constant 0 : i32
    %c0_i32_0 = arith.constant 0 : i32
    %c0_i32_1 = arith.constant 0 : i32
    return %c0_i32, %c0_i32_0 : i32, i32
  }
  func.func @transform_5(%arg0: i32) -> (i32, i32) {
    %c0_i32 = arith.constant 0 : i32
    %c0_i32_0 = arith.constant 0 : i32
    %c0_i32_1 = arith.constant 0 : i32
    return %c0_i32, %c0_i32_0 : i32, i32
  }
  func.func @transform_6(%arg0: i32) -> (i32, i32) {
    %c0_i32 = arith.constant 0 : i32
    %c0_i32_0 = arith.constant 0 : i32
    %c0_i32_1 = arith.constant 0 : i32
    return %c0_i32, %c0_i32_0 : i32, i32
  }
  func.func @transform_7(%arg0: i32) -> (i32, i32) {
    %c0_i32 = arith.constant 0 : i32
    %c0_i32_0 = arith.constant 0 : i32
    %c0_i32_1 = arith.constant 0 : i32
    return %c0_i32, %c0_i32_0 : i32, i32
  }
  func.func @transform_8(%arg0: i32) -> (i32, i32, i32) {
    %c0_i32 = arith.constant 0 : i32
    %c0_i32_0 = arith.constant 0 : i32
    %c0_i32_1 = arith.constant 0 : i32
    return %arg0, %c0_i32, %c0_i32_0 : i32, i32, i32
  }
}

</mosaic_0001>

<llo_original>
// kernel: tpu_custom_call.1
$region0: #{tpu_custom_call.1}
  #allocation0 [shape = 'u32[]', space=smem, size = 0x4, offset = 0x4, fixed_abs, tag = 'smem constant byte address 0x4 - core index']
  #allocation1 [shape = 'u32[144,128]{1,0:T(1,128)}', space=vmem, size = 0x12000, scoped, tag = 'internal scratch']
  #allocation2 [shape = 'f32[6,8,32]{2,1,0:T(8,128)}', space=vmem, size = 0x6000, scoped, tag = 'scratch operand']
  #allocation3 [shape = 'f32[8,128]{1,0:T(8,128)}', space=vmem, size = 0x1000, scoped, tag = 'scratch operand']
  %s0 = inlined_call_operand.hbm [shape: bf16[10,8,128], index: 0, kind: input, shape index: {}]
  %s1 = inlined_call_operand.hbm [shape: bf16[128,128], index: 1, kind: input, shape index: {}]
  %s2 = inlined_call_operand.hbm [shape: bf16[3,32,128], index: 2, kind: input, shape index: {}]
  %s3 = inlined_call_operand.hbm [shape: bf16[2,32,128], index: 3, kind: input, shape index: {}]
  %s4 = inlined_call_operand.vmem [shape: f32[3,128], index: 4, kind: input, shape index: {}]
  %s5 = inlined_call_operand.hbm [shape: bf16[32,128], index: 5, kind: input, shape index: {}]
  %s6 = inlined_call_operand.vmem [shape: f32[1,128], index: 6, kind: input, shape index: {}]
  %s7 = inlined_call_operand.hbm [shape: bf16[128,128], index: 7, kind: input, shape index: {}]
  %s8 = inlined_call_operand.hbm [shape: f32[10,8,128], index: 8, kind: output, shape index: {}]
  %s9 = sld [smem:[#allocation0]]
  $region77: #{tpu_custom_call.1} parent=0
    _
  %s11 = ssub.s32 1, %s9
  %s12 = scalar_select 0, %s11, %s9
  $region1: #{tpu_custom_call.1} parent=0
    #allocation4 [shape = 'u8[20480]{0}', space=vmem, size = 0x5000, scoped, tag = 'input window, operand 0, single buffered']
    #allocation5 [shape = 's32[1]{0}', space=sflag, size = 0x4, scoped, tag = 'scoped memory for tpu_custom_call.1']
    #allocation6 [shape = 's32[1]{0}', space=sflag, size = 0x4, scoped, tag = 'scoped memory for tpu_custom_call.1']
    #allocation7 [shape = 'u8[32768]{0}', space=vmem, size = 0x8000, scoped, tag = 'input window, operand 1, single buffered']
    #allocation8 [shape = 's32[1]{0}', space=sflag, size = 0x4, scoped, tag = 'scoped memory for tpu_custom_call.1']
    #allocation9 [shape = 'u8[24576]{0}', space=vmem, size = 0x6000, scoped, tag = 'input window, operand 2, single buffered']
    #allocation10 [shape = 'u8[16384]{0}', space=vmem, size = 0x4000, scoped, tag = 'input window, operand 3, single buffered']
    #allocation11 [shape = 's32[1]{0}', space=sflag, size = 0x4, scoped, tag = 'scoped memory for tpu_custom_call.1']
    #allocation12 [shape = 'u8[8192]{0}', space=vmem, size = 0x2000, scoped, tag = 'input window, operand 5, single buffered']
    #allocation13 [shape = 'u8[32768]{0}', space=vmem, size = 0x8000, scoped, tag = 'input window, operand 7, single buffered']
    #allocation14 [shape = 's32[1]{0}', space=sflag, size = 0x4, scoped, tag = 'scoped memory for tpu_custom_call.1']
    #allocation15 [shape = 'u8[40960]{0}', space=vmem, size = 0xa000, scoped, tag = 'output window, operand 0, single buffered']
    %13 = vsyncpa [#allocation5], 0
    %14 = vsyncpa [#allocation8], 0
    %15 = vsyncpa [#allocation11], 0
    %16 = vsyncpa [#allocation14], 0
    %17 = vsyncpa [#allocation6], 0
    // Predicated region
    $region2: #{tpu_custom_call.1} parent=1 // pred_check
      _
    $region3: #{tpu_custom_call.1} parent=1 // pred_check_branch
      %19 = sbr.rel (0) target = $region5
    $region4: #{tpu_custom_call.1} parent=1 // pred_region
      %s21 = ssub.s32 640, 640
      %22 = vsyncadd [#allocation5], %s21
      %s23 = sshll.u32 [#allocation4], 4
      %s24 = int_to_ptr.vmem [resolvable:$true] %s23
      %29 = dma.hbm_to_vmem [thread:$0]  %s0, 640, %s24, [#allocation5], 64, 64, 4
    $region5: #{tpu_custom_call.1} parent=1 // pred_fallthru
      _
    // Predicated region
    $region6: #{tpu_custom_call.1} parent=1 // pred_check
      _
    $region7: #{tpu_custom_call.1} parent=1 // pred_check_branch
      %31 = sbr.rel (0) target = $region9
    $region8: #{tpu_custom_call.1} parent=1 // pred_region
      %s33 = ssub.s32 1024, 1024
      %34 = vsyncadd [#allocation8], %s33
      %s35 = sshll.u32 [#allocation7], 4
      %s36 = int_to_ptr.vmem [resolvable:$true] %s35
      %41 = dma.hbm_to_vmem [thread:$0]  %s1, 1024, %s36, [#allocation8], 64, 64, 4
    $region9: #{tpu_custom_call.1} parent=1 // pred_fallthru
      _
    // Predicated region
    $region10: #{tpu_custom_call.1} parent=1 // pred_check
      _
    $region11: #{tpu_custom_call.1} parent=1 // pred_check_branch
      %43 = sbr.rel (0) target = $region13
    $region12: #{tpu_custom_call.1} parent=1 // pred_region
      %s45 = ssub.s32 768, 768
      %46 = vsyncadd [#allocation8], %s45
      %s47 = sshll.u32 [#allocation9], 4
      %s48 = int_to_ptr.vmem [resolvable:$true] %s47
      %53 = dma.hbm_to_vmem [thread:$0]  %s2, 768, %s48, [#allocation8], 64, 64, 4
    $region13: #{tpu_custom_call.1} parent=1 // pred_fallthru
      _
    // Predicated region
    $region14: #{tpu_custom_call.1} parent=1 // pred_check
      _
    $region15: #{tpu_custom_call.1} parent=1 // pred_check_branch
      %55 = sbr.rel (0) target = $region17
    $region16: #{tpu_custom_call.1} parent=1 // pred_region
      %s57 = ssub.s32 512, 512
      %58 = vsyncadd [#allocation11], %s57
      %s59 = sshll.u32 [#allocation10], 4
      %s60 = int_to_ptr.vmem [resolvable:$true] %s59
      %65 = dma.hbm_to_vmem [thread:$0]  %s3, 512, %s60, [#allocation11], 64, 64, 4
    $region17: #{tpu_custom_call.1} parent=1 // pred_fallthru
      _
    // Predicated region
    $region18: #{tpu_custom_call.1} parent=1 // pred_check
      _
    $region19: #{tpu_custom_call.1} parent=1 // pred_check_branch
      %67 = sbr.rel (0) target = $region21
    $region20: #{tpu_custom_call.1} parent=1 // pred_region
      _
    $region21: #{tpu_custom_call.1} parent=1 // pred_fallthru
      _
    // Predicated region
    $region22: #{tpu_custom_call.1} parent=1 // pred_check
      _
    $region23: #{tpu_custom_call.1} parent=1 // pred_check_branch
      %69 = sbr.rel (0) target = $region25
    $region24: #{tpu_custom_call.1} parent=1 // pred_region
      %s71 = ssub.s32 256, 256
      %72 = vsyncadd [#allocation11], %s71
      %s73 = sshll.u32 [#allocation12], 4
      %s74 = int_to_ptr.vmem [resolvable:$true] %s73
      %79 = dma.hbm_to_vmem [thread:$0]  %s5, 256, %s74, [#allocation11], 64, 64, 4
    $region25: #{tpu_custom_call.1} parent=1 // pred_fallthru
      _
    // Predicated region
    $region26: #{tpu_custom_call.1} parent=1 // pred_check
      _
    $region27: #{tpu_custom_call.1} parent=1 // pred_check_branch
      %81 = sbr.rel (0) target = $region29
    $region28: #{tpu_custom_call.1} parent=1 // pred_region
      _
    $region29: #{tpu_custom_call.1} parent=1 // pred_fallthru
      _
    // Predicated region
    $region30: #{tpu_custom_call.1} parent=1 // pred_check
      _
    $region31: #{tpu_custom_call.1} parent=1 // pred_check_branch
      %83 = sbr.rel (0) target = $region33
    $region32: #{tpu_custom_call.1} parent=1 // pred_region
      %s85 = ssub.s32 1024, 1024
      %86 = vsyncadd [#allocation14], %s85
      %s87 = sshll.u32 [#allocation13], 4
      %s88 = int_to_ptr.vmem [resolvable:$true] %s87
      %93 = dma.hbm_to_vmem [thread:$0]  %s7, 1024, %s88, [#allocation14], 64, 64, 4
    $region33: #{tpu_custom_call.1} parent=1 // pred_fallthru
      _
    // Predicated region
    $region34: #{tpu_custom_call.1} parent=1 // pred_check
      _
    $region35: #{tpu_custom_call.1} parent=1 // pred_check_branch
      %95 = sbr.rel (0) target = $region37
    $region36: #{tpu_custom_call.1} parent=1 // pred_region
      %96 = dma.done [#allocation5], 640
    $region37: #{tpu_custom_call.1} parent=1 // pred_fallthru
      _
    // Predicated region
    $region38: #{tpu_custom_call.1} parent=1 // pred_check
      _
    $region39: #{tpu_custom_call.1} parent=1 // pred_check_branch
      %98 = sbr.rel (0) target = $region41
    $region40: #{tpu_custom_call.1} parent=1 // pred_region
      %99 = dma.done [#allocation8], 1024
    $region41: #{tpu_custom_call.1} parent=1 // pred_fallthru
      _
    // Predicated region
    $region42: #{tpu_custom_call.1} parent=1 // pred_check
      _
    $region43: #{tpu_custom_call.1} parent=1 // pred_check_branch
      %101 = sbr.rel (0) target = $region45
    $region44: #{tpu_custom_call.1} parent=1 // pred_region
      %102 = dma.done [#allocation8], 768
    $region45: #{tpu_custom_call.1} parent=1 // pred_fallthru
      _
    // Predicated region
    $region46: #{tpu_custom_call.1} parent=1 // pred_check
      _
    $region47: #{tpu_custom_call.1} parent=1 // pred_check_branch
      %104 = sbr.rel (0) target = $region49
    $region48: #{tpu_custom_call.1} parent=1 // pred_region
      %105 = dma.done [#allocation11], 512
    $region49: #{tpu_custom_call.1} parent=1 // pred_fallthru
      _
    // Predicated region
    $region50: #{tpu_custom_call.1} parent=1 // pred_check
      _
    $region51: #{tpu_custom_call.1} parent=1 // pred_check_branch
      %107 = sbr.rel (0) target = $region53
    $region52: #{tpu_custom_call.1} parent=1 // pred_region
      %108 = dma.done [#allocation11], 256
    $region53: #{tpu_custom_call.1} parent=1 // pred_fallthru
      _
    // Predicated region
    $region54: #{tpu_custom_call.1} parent=1 // pred_check
      _
    $region55: #{tpu_custom_call.1} parent=1 // pred_check_branch
      %110 = sbr.rel (0) target = $region57
    $region56: #{tpu_custom_call.1} parent=1 // pred_region
      %111 = dma.done [#allocation14], 1024
    $region57: #{tpu_custom_call.1} parent=1 // pred_fallthru
      _
    %p113 = scmp.eq.s32.totalorder 0, 0
    // Predicated region
    $region58: #{tpu_custom_call.1} parent=1 // pred_check
      %p114 = pneg %p113
    $region59: #{tpu_custom_call.1} parent=1 // pred_check_branch
      %116 = sbr.rel (%p114) target = $region61
    $region60: #{tpu_custom_call.1} parent=1 // pred_region
      %vm117 = vcmask 261120
      %118 = vst.msk [vmem:[#allocation2] sm:$0xff] %vm117, 0.0
      %119 = vst.msk [vmem:[#allocation2 + $0x8] sm:$0xff] %vm117, 0.0
      %120 = vst.msk [vmem:[#allocation2 + $0x10] sm:$0xff] %vm117, 0.0
      %121 = vst.msk [vmem:[#allocation2 + $0x18] sm:$0xff] %vm117, 0.0
      %122 = vst.msk [vmem:[#allocation2 + $0x20] sm:$0xff] %vm117, 0.0
      %123 = vst.msk [vmem:[#allocation2 + $0x28] sm:$0xff] %vm117, 0.0
      %124 = vst [vmem:[#allocation3] sm:$0xff] 0.0
    $region61: #{tpu_custom_call.1} parent=1 // pred_fallthru
      _
    %v125 = vld [vmem:[#allocation7] sm:$0xf]
    %v126 = vld [vmem:[#allocation7 + $0x4] sm:$0xf]
    %v127 = vld [vmem:[#allocation7 + $0x8] sm:$0xf]
    %v128 = vld [vmem:[#allocation7 + $0xc] sm:$0xf]
    %v129 = vld [vmem:[#allocation7 + $0x10] sm:$0xf]
    %v130 = vld [vmem:[#allocation7 + $0x14] sm:$0xf]
    %v131 = vld [vmem:[#allocation7 + $0x18] sm:$0xf]
    %v132 = vld [vmem:[#allocation7 + $0x1c] sm:$0xf]
    %v133 = vld [vmem:[#allocation7 + $0x20] sm:$0xf]
    %v134 = vld [vmem:[#allocation7 + $0x24] sm:$0xf]
    %v135 = vld [vmem:[#allocation7 + $0x28] sm:$0xf]
    %v136 = vld [vmem:[#allocation7 + $0x2c] sm:$0xf]
    %v137 = vld [vmem:[#allocation7 + $0x30] sm:$0xf]
    %v138 = vld [vmem:[#allocation7 + $0x34] sm:$0xf]
    %v139 = vld [vmem:[#allocation7 + $0x38] sm:$0xf]
    %v140 = vld [vmem:[#allocation7 + $0x3c] sm:$0xf]
    %v141 = vld [vmem:[#allocation9] sm:$0xf]
    %v142 = vld [vmem:[#allocation9 + $0x4] sm:$0xf]
    %v143 = vld [vmem:[#allocation9 + $0x8] sm:$0xf]
    %v144 = vld [vmem:[#allocation9 + $0xc] sm:$0xf]
    %s145 = scalar_lea.vmem [#allocation9], 16
    %v146 = vld [vmem:[%s145] sm:$0xf]
    %v147 = vld [vmem:[%s145 + $0x4] sm:$0xf]
    %v148 = vld [vmem:[%s145 + $0x8] sm:$0xf]
    %v149 = vld [vmem:[%s145 + $0xc] sm:$0xf]
    %s150 = scalar_lea.vmem [#allocation9], 32
    %v151 = vld [vmem:[%s150] sm:$0xf]
    %v152 = vld [vmem:[%s150 + $0x4] sm:$0xf]
    %v153 = vld [vmem:[%s150 + $0x8] sm:$0xf]
    %v154 = vld [vmem:[%s150 + $0xc] sm:$0xf]
    %v155 = vld [vmem:[#allocation10] sm:$0xf]
    %v156 = vld [vmem:[#allocation10 + $0x4] sm:$0xf]
    %v157 = vld [vmem:[#allocation10 + $0x8] sm:$0xf]
    %v158 = vld [vmem:[#allocation10 + $0xc] sm:$0xf]
    %s159 = scalar_lea.vmem [#allocation10], 16
    %v160 = vld [vmem:[%s159] sm:$0xf]
    %v161 = vld [vmem:[%s159 + $0x4] sm:$0xf]
    %v162 = vld [vmem:[%s159 + $0x8] sm:$0xf]
    %v163 = vld [vmem:[%s159 + $0xc] sm:$0xf]
    %v164 = vld [vmem:[#allocation12] sm:$0xf]
    %v165 = vld [vmem:[#allocation12 + $0x4] sm:$0xf]
    %v166 = vld [vmem:[#allocation12 + $0x8] sm:$0xf]
    %v167 = vld [vmem:[#allocation12 + $0xc] sm:$0xf]
    %v168 = vld [vmem:[#allocation13] sm:$0xf]
    %v169 = vld [vmem:[#allocation13 + $0x4] sm:$0xf]
    %v170 = vld [vmem:[#allocation13 + $0x8] sm:$0xf]
    %v171 = vld [vmem:[#allocation13 + $0xc] sm:$0xf]
    %v172 = vld [vmem:[#allocation13 + $0x10] sm:$0xf]
    %v173 = vld [vmem:[#allocation13 + $0x14] sm:$0xf]
    %v174 = vld [vmem:[#allocation13 + $0x18] sm:$0xf]
    %v175 = vld [vmem:[#allocation13 + $0x1c] sm:$0xf]
    %v176 = vld [vmem:[#allocation13 + $0x20] sm:$0xf]
    %v177 = vld [vmem:[#allocation13 + $0x24] sm:$0xf]
    %v178 = vld [vmem:[#allocation13 + $0x28] sm:$0xf]
    %v179 = vld [vmem:[#allocation13 + $0x2c] sm:$0xf]
    %v180 = vld [vmem:[#allocation13 + $0x30] sm:$0xf]
    %v181 = vld [vmem:[#allocation13 + $0x34] sm:$0xf]
    %v182 = vld [vmem:[#allocation13 + $0x38] sm:$0xf]
    %v183 = vld [vmem:[#allocation13 + $0x3c] sm:$0xf]
    %v184 = vld [vmem:[%s4] sm:$0x7]
    %v185 = vlaneseq
    %v186 = vshrl.u32 %v185, 7
    %v187 = vsub.s32 0, %v186
    %v188 = vrot.slane %v184, %v187
    %v189 = vlaneseq
    %v190 = vshrl.u32 %v189, 7
    %v191 = vsub.s32 1, %v190
    %v192 = vrot.slane %v184, %v191
    %v193 = vlaneseq
    %v194 = vshrl.u32 %v193, 7
    %v195 = vsub.s32 2, %v194
    %v196 = vrot.slane %v184, %v195
    %v197 = vld [vmem:[%s6] sm:$0x1]
    %v199 = vlaneseq
    %v200 = vshrl.u32 %v199, 7
    %v201 = vsub.s32 0, %v200
    %v202 = vrot.slane %v197, %v201
    %v204 = vlaneseq
    %v205 = vand.u32 %v204, 127
    %vm206 = vcmp.lt.s32.totalorder %v205, 3
    %vm207 = vcmp.ge.s32.totalorder %v205, 35
    %vm208 = vmor %vm206, %vm207
    %v209 = vld [vmem:[#allocation2] sm:$0xff]
    %s210 = scalar_lea.vmem [#allocation2], 8
    %v211 = vld [vmem:[%s210] sm:$0xff]
    %s212 = scalar_lea.vmem [#allocation2], 16
    %v213 = vld [vmem:[%s212] sm:$0xff]
    %s214 = scalar_lea.vmem [#allocation2], 24
    %v215 = vld [vmem:[%s214] sm:$0xff]
    %s216 = scalar_lea.vmem [#allocation2], 32
    %v217 = vld [vmem:[%s216] sm:$0xff]
    %s218 = scalar_lea.vmem [#allocation2], 40
    %v219 = vld [vmem:[%s218] sm:$0xff]
    %v220 = vld [vmem:[#allocation3] sm:$0xff]
    loop: start=0, step=1, limit=2
    $region62: #{tpu_custom_call.1} parent=1 // loop_pre_header
      _
    $region63: #{tpu_custom_call.1} parent=1 // loop_header
      %s222 = sphi 0, %s226
      %p223 = scmp.ge.s32.totalorder %s222, 2
      %v227 = vphi %v209, %v2605
      %v228 = vphi %v211, %v2609
      %v229 = vphi %v213, %v2613
      %v230 = vphi %v215, %v2617
      %v231 = vphi %v217, %v2621
      %v232 = vphi %v219, %v2625
      %v233 = vphi %v220, %v2598
    $region64: #{tpu_custom_call.1} parent=1 // loop_header_branch
      %225 = sbr.rel (%p223) target = $region68
    $region65: #{tpu_custom_call.1} parent=1 // loop_body
      %s234 = smul.u32 %s222, 5
      %s235 = smul.addr %s234, 4
      %s236 = scalar_lea.vmem [#allocation4], %s235
      %v237 = vld [vmem:[%s236] sm:$0xf]
      %v238 = vpack.c.bf16 %v227, %v227
      %v243 = vunpack.c.l.b16 %v141
      %v244 = vunpack.c.l.b16 %v142
      %v245 = vunpack.c.l.b16 %v143
      %v246 = vunpack.c.l.b16 %v144
      %v247 = vpack.c.b16 %v244, %v243
      %v248 = vpack.c.b16 %v246, %v245
      %vm251 = vcmask 261120
      %v253 = vsel %vm251, %v238, 0
      %255 = vmatprep.subr.bf16.mxu0 0
      %256 = vmatpush1.bf16.msra.mxu0 0
      %257 = vmatprep.subr.bf16.mxu0 0
      %258 = vmatpush1.bf16.msra.mxu0 0
      %259 = vmatprep.subr.bf16.mxu0 0
      %260 = vmatpush1.bf16.msra.mxu0 0
      %261 = vmatprep.subr.bf16.mxu0 0
      %262 = vmatpush1.bf16.msra.mxu0 0
      %263 = vmatprep.subr.bf16.mxu0 0
      %264 = vmatpush1.bf16.msra.mxu0 0
      %265 = vmatprep.subr.bf16.mxu0 0
      %266 = vmatpush1.bf16.msra.mxu0 0
      %267 = vmatprep.subr.bf16.mxu0 0
      %268 = vmatpush1.bf16.msra.mxu0 %v248
      %269 = vmatprep.subr.bf16.mxu0 0
      %270 = vmatpush1.bf16.msra.mxu0 %v247
      %271 = vmatprep.subr.bf16.mxu0 0
      %272 = vmatpush2.bf16.msra.mxu0 0
      %273 = vmatprep.subr.bf16.mxu0 0
      %274 = vmatpush2.bf16.msra.mxu0 0
      %275 = vmatprep.subr.bf16.mxu0 0
      %276 = vmatpush2.bf16.msra.mxu0 0
      %277 = vmatprep.subr.bf16.mxu0 0
      %278 = vmatpush2.bf16.msra.mxu0 0
      %279 = vmatprep.subr.bf16.mxu0 0
      %280 = vmatpush2.bf16.msra.mxu0 0
      %281 = vmatprep.subr.bf16.mxu0 0
      %282 = vmatpush2.bf16.msra.mxu0 0
      %283 = vmatprep.subr.bf16.mxu0 0
      %284 = vmatpush2.bf16.msra.mxu0 0
      %285 = vmatprep.subr.bf16.mxu0 0
      %286 = vmatpush2.bf16.msra.mxu0 0
      %287 = vmatprep.mubr.bf16.mxu0 0
      %288 = vmatmul.mubr.bf16.gmra.mxu0 %v253
      %v289 = vpop.f32.mrf.mxu0
      %v290 = vadd.f32 0.0, %v289
      %v291 = vpop.f32.mrf.mxu0
      %v292 = vpop.f32.mrf.mxu0
      %v293 = vpop.f32.mrf.mxu0
      %294 = vdwg.mxu0
      %v311 = vunpack.c.l.b16 %v125
      %v312 = vunpack.c.l.b16 %v126
      %v313 = vunpack.c.l.b16 %v127
      %v314 = vunpack.c.l.b16 %v128
      %v315 = vunpack.c.l.b16 %v129
      %v316 = vunpack.c.l.b16 %v130
      %v317 = vunpack.c.l.b16 %v131
      %v318 = vunpack.c.l.b16 %v132
      %v319 = vunpack.c.l.b16 %v133
      %v320 = vunpack.c.l.b16 %v134
      %v321 = vunpack.c.l.b16 %v135
      %v322 = vunpack.c.l.b16 %v136
      %v323 = vunpack.c.l.b16 %v137
      %v324 = vunpack.c.l.b16 %v138
      %v325 = vunpack.c.l.b16 %v139
      %v326 = vunpack.c.l.b16 %v140
      %v327 = vpack.c.b16 %v312, %v311
      %v328 = vpack.c.b16 %v314, %v313
      %v329 = vpack.c.b16 %v316, %v315
      %v330 = vpack.c.b16 %v318, %v317
      %v331 = vpack.c.b16 %v320, %v319
      %v332 = vpack.c.b16 %v322, %v321
      %v333 = vpack.c.b16 %v324, %v323
      %v334 = vpack.c.b16 %v326, %v325
      %343 = vmatprep.subr.bf16.mxu0 0
      %344 = vmatpush1.bf16.msra.mxu0 %v334
      %345 = vmatprep.subr.bf16.mxu0 0
      %346 = vmatpush1.bf16.msra.mxu0 %v333
      %347 = vmatprep.subr.bf16.mxu0 0
      %348 = vmatpush1.bf16.msra.mxu0 %v332
      %349 = vmatprep.subr.bf16.mxu0 0
      %350 = vmatpush1.bf16.msra.mxu0 %v331
      %351 = vmatprep.subr.bf16.mxu0 0
      %352 = vmatpush1.bf16.msra.mxu0 %v330
      %353 = vmatprep.subr.bf16.mxu0 0
      %354 = vmatpush1.bf16.msra.mxu0 %v329
      %355 = vmatprep.subr.bf16.mxu0 0
      %356 = vmatpush1.bf16.msra.mxu0 %v328
      %357 = vmatprep.subr.bf16.mxu0 0
      %358 = vmatpush1.bf16.msra.mxu0 %v327
      %359 = vmatprep.subr.bf16.mxu0 0
      %360 = vmatpush2.bf16.msra.mxu0 0
      %361 = vmatprep.subr.bf16.mxu0 0
      %362 = vmatpush2.bf16.msra.mxu0 0
      %363 = vmatprep.subr.bf16.mxu0 0
      %364 = vmatpush2.bf16.msra.mxu0 0
      %365 = vmatprep.subr.bf16.mxu0 0
      %366 = vmatpush2.bf16.msra.mxu0 0
      %367 = vmatprep.subr.bf16.mxu0 0
      %368 = vmatpush2.bf16.msra.mxu0 0
      %369 = vmatprep.subr.bf16.mxu0 0
      %370 = vmatpush2.bf16.msra.mxu0 0
      %371 = vmatprep.subr.bf16.mxu0 0
      %372 = vmatpush2.bf16.msra.mxu0 0
      %373 = vmatprep.subr.bf16.mxu0 0
      %374 = vmatpush2.bf16.msra.mxu0 0
      %375 = vmatprep.mubr.bf16.mxu0 0
      %376 = vmatmul.mubr.bf16.gmra.mxu0 %v237
      %v377 = vpop.f32.mrf.mxu0
      %v378 = vadd.f32 %v290, %v377
      %v379 = vpop.f32.mrf.mxu0
      %v380 = vpop.f32.mrf.mxu0
      %v381 = vpop.f32.mrf.mxu0
      %382 = vdwg.mxu0
      %v383 = vadd.f32 %v378, %v188
      %v384 = vxor.u32 %v383, 2147483648
      %v385 = vmul.f32 %v384, 1.442695
      %v386 = vpow.pop %v385
      %v387 = vadd.f32 %v386, 1.0
      %v388 = vrcp.pop %v387
      %v389 = vmul.f32 1.0, %v388
      %v390 = vtanh.pop %v383
      %392 = vrot.lane.b32.xlu0 %v228, 32
      %v393 = vpop.permute.xlu0 %392
      %v395 = vmul.f32 %v389, %v393
      %397 = vrot.lane.b32.xlu0 %v390, 64
      %v398 = vpop.permute.xlu0 %397
      %v400 = vmul.f32 %v389, %v398
      %402 = vrot.lane.b32.xlu0 %v400, 32
      %v403 = vpop.permute.xlu0 %402
      %v405 = vadd.f32 %v395, %v403
      %v406 = vtanh.pop %v405
      %408 = vrot.lane.b32.xlu0 %v406, 64
      %v409 = vpop.permute.xlu0 %408
      %v411 = vmul.f32 %v389, %v409
      %v412 = vpack.c.bf16 %v411, %v411
      %v413 = vpack.c.bf16 %v229, %v229
      %v418 = vunpack.c.l.b16 %v146
      %v419 = vunpack.c.l.b16 %v147
      %v420 = vunpack.c.l.b16 %v148
      %v421 = vunpack.c.l.b16 %v149
      %v422 = vpack.c.b16 %v419, %v418
      %v423 = vpack.c.b16 %v421, %v420
      %v427 = vsel %vm251, %v413, 0
      %429 = vmatprep.subr.bf16.mxu0 0
      %430 = vmatpush1.bf16.msra.mxu0 0
      %431 = vmatprep.subr.bf16.mxu0 0
      %432 = vmatpush1.bf16.msra.mxu0 0
      %433 = vmatprep.subr.bf16.mxu0 0
      %434 = vmatpush1.bf16.msra.mxu0 0
      %435 = vmatprep.subr.bf16.mxu0 0
      %436 = vmatpush1.bf16.msra.mxu0 0
      %437 = vmatprep.subr.bf16.mxu0 0
      %438 = vmatpush1.bf16.msra.mxu0 0
      %439 = vmatprep.subr.bf16.mxu0 0
      %440 = vmatpush1.bf16.msra.mxu0 0
      %441 = vmatprep.subr.bf16.mxu0 0
      %442 = vmatpush1.bf16.msra.mxu0 %v423
      %443 = vmatprep.subr.bf16.mxu0 0
      %444 = vmatpush1.bf16.msra.mxu0 %v422
      %445 = vmatprep.subr.bf16.mxu0 0
      %446 = vmatpush2.bf16.msra.mxu0 0
      %447 = vmatprep.subr.bf16.mxu0 0
      %448 = vmatpush2.bf16.msra.mxu0 0
      %449 = vmatprep.subr.bf16.mxu0 0
      %450 = vmatpush2.bf16.msra.mxu0 0
      %451 = vmatprep.subr.bf16.mxu0 0
      %452 = vmatpush2.bf16.msra.mxu0 0
      %453 = vmatprep.subr.bf16.mxu0 0
      %454 = vmatpush2.bf16.msra.mxu0 0
      %455 = vmatprep.subr.bf16.mxu0 0
      %456 = vmatpush2.bf16.msra.mxu0 0
      %457 = vmatprep.subr.bf16.mxu0 0
      %458 = vmatpush2.bf16.msra.mxu0 0
      %459 = vmatprep.subr.bf16.mxu0 0
      %460 = vmatpush2.bf16.msra.mxu0 0
      %461 = vmatprep.mubr.bf16.mxu0 0
      %462 = vmatmul.mubr.bf16.gmra.mxu0 %v427
      %v463 = vpop.f32.mrf.mxu0
      %v464 = vadd.f32 0.0, %v463
      %v465 = vpop.f32.mrf.mxu0
      %v466 = vpop.f32.mrf.mxu0
      %v467 = vpop.f32.mrf.mxu0
      %468 = vdwg.mxu0
      %470 = vrot.lane.b32.xlu0 %v412, 32
      %v471 = vpop.permute.xlu0 %470
      %v476 = vunpack.c.l.b16 %v155
      %v477 = vunpack.c.l.b16 %v156
      %v478 = vunpack.c.l.b16 %v157
      %v479 = vunpack.c.l.b16 %v158
      %v480 = vpack.c.b16 %v477, %v476
      %v481 = vpack.c.b16 %v479, %v478
      %v485 = vsel %vm251, %v471, 0
      %487 = vmatprep.subr.bf16.mxu0 0
      %488 = vmatpush1.bf16.msra.mxu0 0
      %489 = vmatprep.subr.bf16.mxu0 0
      %490 = vmatpush1.bf16.msra.mxu0 0
      %491 = vmatprep.subr.bf16.mxu0 0
      %492 = vmatpush1.bf16.msra.mxu0 0
      %493 = vmatprep.subr.bf16.mxu0 0
      %494 = vmatpush1.bf16.msra.mxu0 0
      %495 = vmatprep.subr.bf16.mxu0 0
      %496 = vmatpush1.bf16.msra.mxu0 0
      %497 = vmatprep.subr.bf16.mxu0 0
      %498 = vmatpush1.bf16.msra.mxu0 0
      %499 = vmatprep.subr.bf16.mxu0 0
      %500 = vmatpush1.bf16.msra.mxu0 %v481
      %501 = vmatprep.subr.bf16.mxu0 0
      %502 = vmatpush1.bf16.msra.mxu0 %v480
      %503 = vmatprep.subr.bf16.mxu0 0
      %504 = vmatpush2.bf16.msra.mxu0 0
      %505 = vmatprep.subr.bf16.mxu0 0
      %506 = vmatpush2.bf16.msra.mxu0 0
      %507 = vmatprep.subr.bf16.mxu0 0
      %508 = vmatpush2.bf16.msra.mxu0 0
      %509 = vmatprep.subr.bf16.mxu0 0
      %510 = vmatpush2.bf16.msra.mxu0 0
      %511 = vmatprep.subr.bf16.mxu0 0
      %512 = vmatpush2.bf16.msra.mxu0 0
      %513 = vmatprep.subr.bf16.mxu0 0
      %514 = vmatpush2.bf16.msra.mxu0 0
      %515 = vmatprep.subr.bf16.mxu0 0
      %516 = vmatpush2.bf16.msra.mxu0 0
      %517 = vmatprep.subr.bf16.mxu0 0
      %518 = vmatpush2.bf16.msra.mxu0 0
      %519 = vmatprep.mubr.bf16.mxu0 0
      %520 = vmatmul.mubr.bf16.gmra.mxu0 %v485
      %v521 = vpop.f32.mrf.mxu0
      %v522 = vadd.f32 %v464, %v521
      %v523 = vpop.f32.mrf.mxu0
      %v524 = vpop.f32.mrf.mxu0
      %v525 = vpop.f32.mrf.mxu0
      %526 = vdwg.mxu0
      %v527 = vadd.f32 %v522, %v192
      %v528 = vxor.u32 %v527, 2147483648
      %v529 = vmul.f32 %v528, 1.442695
      %v530 = vpow.pop %v529
      %v531 = vadd.f32 %v530, 1.0
      %v532 = vrcp.pop %v531
      %v533 = vmul.f32 1.0, %v532
      %v534 = vtanh.pop %v527
      %536 = vrot.lane.b32.xlu0 %v230, 32
      %v537 = vpop.permute.xlu0 %536
      %v539 = vmul.f32 %v533, %v537
      %541 = vrot.lane.b32.xlu0 %v534, 64
      %v542 = vpop.permute.xlu0 %541
      %v544 = vmul.f32 %v533, %v542
      %546 = vrot.lane.b32.xlu0 %v544, 32
      %v547 = vpop.permute.xlu0 %546
      %v549 = vadd.f32 %v539, %v547
      %v550 = vtanh.pop %v549
      %552 = vrot.lane.b32.xlu0 %v550, 64
      %v553 = vpop.permute.xlu0 %552
      %v555 = vmul.f32 %v533, %v553
      %v556 = vpack.c.bf16 %v555, %v555
      %v557 = vpack.c.bf16 %v231, %v231
      %v562 = vunpack.c.l.b16 %v151
      %v563 = vunpack.c.l.b16 %v152
      %v564 = vunpack.c.l.b16 %v153
      %v565 = vunpack.c.l.b16 %v154
      %v566 = vpack.c.b16 %v563, %v562
      %v567 = vpack.c.b16 %v565, %v564
      %v571 = vsel %vm251, %v557, 0
      %573 = vmatprep.subr.bf16.mxu0 0
      %574 = vmatpush1.bf16.msra.mxu0 0
      %575 = vmatprep.subr.bf16.mxu0 0
      %576 = vmatpush1.bf16.msra.mxu0 0
      %577 = vmatprep.subr.bf16.mxu0 0
      %578 = vmatpush1.bf16.msra.mxu0 0
      %579 = vmatprep.subr.bf16.mxu0 0
      %580 = vmatpush1.bf16.msra.mxu0 0
      %581 = vmatprep.subr.bf16.mxu0 0
      %582 = vmatpush1.bf16.msra.mxu0 0
      %583 = vmatprep.subr.bf16.mxu0 0
      %584 = vmatpush1.bf16.msra.mxu0 0
      %585 = vmatprep.subr.bf16.mxu0 0
      %586 = vmatpush1.bf16.msra.mxu0 %v567
      %587 = vmatprep.subr.bf16.mxu0 0
      %588 = vmatpush1.bf16.msra.mxu0 %v566
      %589 = vmatprep.subr.bf16.mxu0 0
      %590 = vmatpush2.bf16.msra.mxu0 0
      %591 = vmatprep.subr.bf16.mxu0 0
      %592 = vmatpush2.bf16.msra.mxu0 0
      %593 = vmatprep.subr.bf16.mxu0 0
      %594 = vmatpush2.bf16.msra.mxu0 0
      %595 = vmatprep.subr.bf16.mxu0 0
      %596 = vmatpush2.bf16.msra.mxu0 0
      %597 = vmatprep.subr.bf16.mxu0 0
      %598 = vmatpush2.bf16.msra.mxu0 0
      %599 = vmatprep.subr.bf16.mxu0 0
      %600 = vmatpush2.bf16.msra.mxu0 0
      %601 = vmatprep.subr.bf16.mxu0 0
      %602 = vmatpush2.bf16.msra.mxu0 0
      %603 = vmatprep.subr.bf16.mxu0 0
      %604 = vmatpush2.bf16.msra.mxu0 0
      %605 = vmatprep.mubr.bf16.mxu0 0
      %606 = vmatmul.mubr.bf16.gmra.mxu0 %v571
      %v607 = vpop.f32.mrf.mxu0
      %v608 = vadd.f32 0.0, %v607
      %v609 = vpop.f32.mrf.mxu0
      %v610 = vpop.f32.mrf.mxu0
      %v611 = vpop.f32.mrf.mxu0
      %612 = vdwg.mxu0
      %614 = vrot.lane.b32.xlu0 %v556, 32
      %v615 = vpop.permute.xlu0 %614
      %v620 = vunpack.c.l.b16 %v160
      %v621 = vunpack.c.l.b16 %v161
      %v622 = vunpack.c.l.b16 %v162
      %v623 = vunpack.c.l.b16 %v163
      %v624 = vpack.c.b16 %v621, %v620
      %v625 = vpack.c.b16 %v623, %v622
      %v629 = vsel %vm251, %v615, 0
      %631 = vmatprep.subr.bf16.mxu0 0
      %632 = vmatpush1.bf16.msra.mxu0 0
      %633 = vmatprep.subr.bf16.mxu0 0
      %634 = vmatpush1.bf16.msra.mxu0 0
      %635 = vmatprep.subr.bf16.mxu0 0
      %636 = vmatpush1.bf16.msra.mxu0 0
      %637 = vmatprep.subr.bf16.mxu0 0
      %638 = vmatpush1.bf16.msra.mxu0 0
      %639 = vmatprep.subr.bf16.mxu0 0
      %640 = vmatpush1.bf16.msra.mxu0 0
      %641 = vmatprep.subr.bf16.mxu0 0
      %642 = vmatpush1.bf16.msra.mxu0 0
      %643 = vmatprep.subr.bf16.mxu0 0
      %644 = vmatpush1.bf16.msra.mxu0 %v625
      %645 = vmatprep.subr.bf16.mxu0 0
      %646 = vmatpush1.bf16.msra.mxu0 %v624
      %647 = vmatprep.subr.bf16.mxu0 0
      %648 = vmatpush2.bf16.msra.mxu0 0
      %649 = vmatprep.subr.bf16.mxu0 0
      %650 = vmatpush2.bf16.msra.mxu0 0
      %651 = vmatprep.subr.bf16.mxu0 0
      %652 = vmatpush2.bf16.msra.mxu0 0
      %653 = vmatprep.subr.bf16.mxu0 0
      %654 = vmatpush2.bf16.msra.mxu0 0
      %655 = vmatprep.subr.bf16.mxu0 0
      %656 = vmatpush2.bf16.msra.mxu0 0
      %657 = vmatprep.subr.bf16.mxu0 0
      %658 = vmatpush2.bf16.msra.mxu0 0
      %659 = vmatprep.subr.bf16.mxu0 0
      %660 = vmatpush2.bf16.msra.mxu0 0
      %661 = vmatprep.subr.bf16.mxu0 0
      %662 = vmatpush2.bf16.msra.mxu0 0
      %663 = vmatprep.mubr.bf16.mxu0 0
      %664 = vmatmul.mubr.bf16.gmra.mxu0 %v629
      %v665 = vpop.f32.mrf.mxu0
      %v666 = vadd.f32 %v608, %v665
      %v667 = vpop.f32.mrf.mxu0
      %v668 = vpop.f32.mrf.mxu0
      %v669 = vpop.f32.mrf.mxu0
      %670 = vdwg.mxu0
      %v671 = vadd.f32 %v666, %v196
      %v672 = vxor.u32 %v671, 2147483648
      %v673 = vmul.f32 %v672, 1.442695
      %v674 = vpow.pop %v673
      %v675 = vadd.f32 %v674, 1.0
      %v676 = vrcp.pop %v675
      %v677 = vmul.f32 1.0, %v676
      %v678 = vtanh.pop %v671
      %680 = vrot.lane.b32.xlu0 %v232, 32
      %v681 = vpop.permute.xlu0 %680
      %v683 = vmul.f32 %v677, %v681
      %685 = vrot.lane.b32.xlu0 %v678, 64
      %v686 = vpop.permute.xlu0 %685
      %v688 = vmul.f32 %v677, %v686
      %690 = vrot.lane.b32.xlu0 %v688, 32
      %v691 = vpop.permute.xlu0 %690
      %v693 = vadd.f32 %v683, %v691
      %v694 = vtanh.pop %v693
      %696 = vrot.lane.b32.xlu0 %v694, 64
      %v697 = vpop.permute.xlu0 %696
      %v699 = vmul.f32 %v677, %v697
      %v700 = vpack.c.bf16 %v699, %v699
      %702 = vrot.lane.b32.xlu0 %v700, 32
      %v703 = vpop.permute.xlu0 %702
      %v708 = vunpack.c.l.b16 %v164
      %v709 = vunpack.c.l.b16 %v165
      %v710 = vunpack.c.l.b16 %v166
      %v711 = vunpack.c.l.b16 %v167
      %v712 = vpack.c.b16 %v709, %v708
      %v713 = vpack.c.b16 %v711, %v710
      %v717 = vsel %vm251, %v703, 0
      %719 = vmatprep.subr.bf16.mxu0 0
      %720 = vmatpush1.bf16.msra.mxu0 0
      %721 = vmatprep.subr.bf16.mxu0 0
      %722 = vmatpush1.bf16.msra.mxu0 0
      %723 = vmatprep.subr.bf16.mxu0 0
      %724 = vmatpush1.bf16.msra.mxu0 0
      %725 = vmatprep.subr.bf16.mxu0 0
      %726 = vmatpush1.bf16.msra.mxu0 0
      %727 = vmatprep.subr.bf16.mxu0 0
      %728 = vmatpush1.bf16.msra.mxu0 0
      %729 = vmatprep.subr.bf16.mxu0 0
      %730 = vmatpush1.bf16.msra.mxu0 0
      %731 = vmatprep.subr.bf16.mxu0 0
      %732 = vmatpush1.bf16.msra.mxu0 %v713
      %733 = vmatprep.subr.bf16.mxu0 0
      %734 = vmatpush1.bf16.msra.mxu0 %v712
      %735 = vmatprep.subr.bf16.mxu0 0
      %736 = vmatpush2.bf16.msra.mxu0 0
      %737 = vmatprep.subr.bf16.mxu0 0
      %738 = vmatpush2.bf16.msra.mxu0 0
      %739 = vmatprep.subr.bf16.mxu0 0
      %740 = vmatpush2.bf16.msra.mxu0 0
      %741 = vmatprep.subr.bf16.mxu0 0
      %742 = vmatpush2.bf16.msra.mxu0 0
      %743 = vmatprep.subr.bf16.mxu0 0
      %744 = vmatpush2.bf16.msra.mxu0 0
      %745 = vmatprep.subr.bf16.mxu0 0
      %746 = vmatpush2.bf16.msra.mxu0 0
      %747 = vmatprep.subr.bf16.mxu0 0
      %748 = vmatpush2.bf16.msra.mxu0 0
      %749 = vmatprep.subr.bf16.mxu0 0
      %750 = vmatpush2.bf16.msra.mxu0 0
      %751 = vmatprep.mubr.bf16.mxu0 0
      %752 = vmatmul.mubr.bf16.gmra.mxu0 %v717
      %v753 = vpop.f32.mrf.mxu0
      %v754 = vadd.f32 %v202, %v753
      %v755 = vpop.f32.mrf.mxu0
      %v756 = vpop.f32.mrf.mxu0
      %v757 = vpop.f32.mrf.mxu0
      %758 = vdwg.mxu0
      %v759 = vmul.f32 %v754, %v754
      %v760 = vpack.c.bf16 %v759, %v759
      %v777 = vunpack.c.l.b16 %v168
      %v778 = vunpack.c.l.b16 %v169
      %v779 = vunpack.c.l.b16 %v170
      %v780 = vunpack.c.l.b16 %v171
      %v781 = vunpack.c.l.b16 %v172
      %v782 = vunpack.c.l.b16 %v173
      %v783 = vunpack.c.l.b16 %v174
      %v784 = vunpack.c.l.b16 %v175
      %v785 = vunpack.c.l.b16 %v176
      %v786 = vunpack.c.l.b16 %v177
      %v787 = vunpack.c.l.b16 %v178
      %v788 = vunpack.c.l.b16 %v179
      %v789 = vunpack.c.l.b16 %v180
      %v790 = vunpack.c.l.b16 %v181
      %v791 = vunpack.c.l.b16 %v182
      %v792 = vunpack.c.l.b16 %v183
      %v793 = vpack.c.b16 %v778, %v777
      %v794 = vpack.c.b16 %v780, %v779
      %v795 = vpack.c.b16 %v782, %v781
      %v796 = vpack.c.b16 %v784, %v783
      %v797 = vpack.c.b16 %v786, %v785
      %v798 = vpack.c.b16 %v788, %v787
      %v799 = vpack.c.b16 %v790, %v789
      %v800 = vpack.c.b16 %v792, %v791
      %809 = vmatprep.subr.bf16.mxu0 0
      %810 = vmatpush1.bf16.msra.mxu0 %v800
      %811 = vmatprep.subr.bf16.mxu0 0
      %812 = vmatpush1.bf16.msra.mxu0 %v799
      %813 = vmatprep.subr.bf16.mxu0 0
      %814 = vmatpush1.bf16.msra.mxu0 %v798
      %815 = vmatprep.subr.bf16.mxu0 0
      %816 = vmatpush1.bf16.msra.mxu0 %v797
      %817 = vmatprep.subr.bf16.mxu0 0
      %818 = vmatpush1.bf16.msra.mxu0 %v796
      %819 = vmatprep.subr.bf16.mxu0 0
      %820 = vmatpush1.bf16.msra.mxu0 %v795
      %821 = vmatprep.subr.bf16.mxu0 0
      %822 = vmatpush1.bf16.msra.mxu0 %v794
      %823 = vmatprep.subr.bf16.mxu0 0
      %824 = vmatpush1.bf16.msra.mxu0 %v793
      %825 = vmatprep.subr.bf16.mxu0 0
      %826 = vmatpush2.bf16.msra.mxu0 0
      %827 = vmatprep.subr.bf16.mxu0 0
      %828 = vmatpush2.bf16.msra.mxu0 0
      %829 = vmatprep.subr.bf16.mxu0 0
      %830 = vmatpush2.bf16.msra.mxu0 0
      %831 = vmatprep.subr.bf16.mxu0 0
      %832 = vmatpush2.bf16.msra.mxu0 0
      %833 = vmatprep.subr.bf16.mxu0 0
      %834 = vmatpush2.bf16.msra.mxu0 0
      %835 = vmatprep.subr.bf16.mxu0 0
      %836 = vmatpush2.bf16.msra.mxu0 0
      %837 = vmatprep.subr.bf16.mxu0 0
      %838 = vmatpush2.bf16.msra.mxu0 0
      %839 = vmatprep.subr.bf16.mxu0 0
      %840 = vmatpush2.bf16.msra.mxu0 0
      %841 = vmatprep.mubr.bf16.mxu0 0
      %842 = vmatmul.mubr.bf16.gmra.mxu0 %v760
      %v843 = vpop.f32.mrf.mxu0
      %v844 = vadd.f32 0.0, %v843
      %v845 = vpop.f32.mrf.mxu0
      %v846 = vpop.f32.mrf.mxu0
      %v847 = vpop.f32.mrf.mxu0
      %848 = vdwg.mxu0
      %v849 = vrsqrt.pop %v844
      %v850 = vmul.f32 %v844, %v849
      %vm851 = vcmp.eq.f32.partialorder %v844, inf
      %v852 = vsel %vm851, %v844, %v850
      %vm853 = vcmp.eq.f32.partialorder %v844, 0.0
      %v854 = vand.u32 %v844, 2147483648
      %v855 = vsel %vm853, %v854, %v852
      %v856 = vadd.f32 %v855, 1e-08
      %v857 = vrcp.pop %v856
      %v858 = vmul.f32 %v754, %v857
      %v859 = vsel %vm208, %v754, %v858
      %s860 = smul.u32 %s234, 8
      %s861 = scalar_lea.vmem [#allocation15], %s860
      %862 = vst [vmem:[%s861] sm:$0xff] %v859
      %s863 = sadd.s32 %s234, 1
      %s864 = smul.addr %s863, 4
      %s865 = scalar_lea.vmem [#allocation4], %s864
      %v866 = vld [vmem:[%s865] sm:$0xf]
      %867 = vmatprep.subr.bf16.mxu0 0
      %868 = vmatpush1.bf16.msra.mxu0 0
      %869 = vmatprep.subr.bf16.mxu0 0
      %870 = vmatpush1.bf16.msra.mxu0 0
      %871 = vmatprep.subr.bf16.mxu0 0
      %872 = vmatpush1.bf16.msra.mxu0 0
      %873 = vmatprep.subr.bf16.mxu0 0
      %874 = vmatpush1.bf16.msra.mxu0 0
      %875 = vmatprep.subr.bf16.mxu0 0
      %876 = vmatpush1.bf16.msra.mxu0 0
      %877 = vmatprep.subr.bf16.mxu0 0
      %878 = vmatpush1.bf16.msra.mxu0 0
      %879 = vmatprep.subr.bf16.mxu0 0
      %880 = vmatpush1.bf16.msra.mxu0 %v248
      %881 = vmatprep.subr.bf16.mxu0 0
      %882 = vmatpush1.bf16.msra.mxu0 %v247
      %883 = vmatprep.subr.bf16.mxu0 0
      %884 = vmatpush2.bf16.msra.mxu0 0
      %885 = vmatprep.subr.bf16.mxu0 0
      %886 = vmatpush2.bf16.msra.mxu0 0
      %887 = vmatprep.subr.bf16.mxu0 0
      %888 = vmatpush2.bf16.msra.mxu0 0
      %889 = vmatprep.subr.bf16.mxu0 0
      %890 = vmatpush2.bf16.msra.mxu0 0
      %891 = vmatprep.subr.bf16.mxu0 0
      %892 = vmatpush2.bf16.msra.mxu0 0
      %893 = vmatprep.subr.bf16.mxu0 0
      %894 = vmatpush2.bf16.msra.mxu0 0
      %895 = vmatprep.subr.bf16.mxu0 0
      %896 = vmatpush2.bf16.msra.mxu0 0
      %897 = vmatprep.subr.bf16.mxu0 0
      %898 = vmatpush2.bf16.msra.mxu0 0
      %899 = vmatprep.mubr.bf16.mxu0 0
      %900 = vmatmul.mubr.bf16.gmra.mxu0 %v485
      %v901 = vpop.f32.mrf.mxu0
      %v902 = vadd.f32 0.0, %v901
      %v903 = vpop.f32.mrf.mxu0
      %v904 = vpop.f32.mrf.mxu0
      %v905 = vpop.f32.mrf.mxu0
      %906 = vdwg.mxu0
      %907 = vmatprep.subr.bf16.mxu0 0
      %908 = vmatpush1.bf16.msra.mxu0 %v334
      %909 = vmatprep.subr.bf16.mxu0 0
      %910 = vmatpush1.bf16.msra.mxu0 %v333
      %911 = vmatprep.subr.bf16.mxu0 0
      %912 = vmatpush1.bf16.msra.mxu0 %v332
      %913 = vmatprep.subr.bf16.mxu0 0
      %914 = vmatpush1.bf16.msra.mxu0 %v331
      %915 = vmatprep.subr.bf16.mxu0 0
      %916 = vmatpush1.bf16.msra.mxu0 %v330
      %917 = vmatprep.subr.bf16.mxu0 0
      %918 = vmatpush1.bf16.msra.mxu0 %v329
      %919 = vmatprep.subr.bf16.mxu0 0
      %920 = vmatpush1.bf16.msra.mxu0 %v328
      %921 = vmatprep.subr.bf16.mxu0 0
      %922 = vmatpush1.bf16.msra.mxu0 %v327
      %923 = vmatprep.subr.bf16.mxu0 0
      %924 = vmatpush2.bf16.msra.mxu0 0
      %925 = vmatprep.subr.bf16.mxu0 0
      %926 = vmatpush2.bf16.msra.mxu0 0
      %927 = vmatprep.subr.bf16.mxu0 0
      %928 = vmatpush2.bf16.msra.mxu0 0
      %929 = vmatprep.subr.bf16.mxu0 0
      %930 = vmatpush2.bf16.msra.mxu0 0
      %931 = vmatprep.subr.bf16.mxu0 0
      %932 = vmatpush2.bf16.msra.mxu0 0
      %933 = vmatprep.subr.bf16.mxu0 0
      %934 = vmatpush2.bf16.msra.mxu0 0
      %935 = vmatprep.subr.bf16.mxu0 0
      %936 = vmatpush2.bf16.msra.mxu0 0
      %937 = vmatprep.subr.bf16.mxu0 0
      %938 = vmatpush2.bf16.msra.mxu0 0
      %939 = vmatprep.mubr.bf16.mxu0 0
      %940 = vmatmul.mubr.bf16.gmra.mxu0 %v866
      %v941 = vpop.f32.mrf.mxu0
      %v942 = vadd.f32 %v902, %v941
      %v943 = vpop.f32.mrf.mxu0
      %v944 = vpop.f32.mrf.mxu0
      %v945 = vpop.f32.mrf.mxu0
      %946 = vdwg.mxu0
      %v947 = vadd.f32 %v942, %v188
      %v948 = vxor.u32 %v947, 2147483648
      %v949 = vmul.f32 %v948, 1.442695
      %v950 = vpow.pop %v949
      %v951 = vadd.f32 %v950, 1.0
      %v952 = vrcp.pop %v951
      %v953 = vmul.f32 1.0, %v952
      %v954 = vtanh.pop %v947
      %v955 = vmul.f32 %v953, %v405
      %957 = vrot.lane.b32.xlu0 %v954, 64
      %v958 = vpop.permute.xlu0 %957
      %v960 = vmul.f32 %v953, %v958
      %962 = vrot.lane.b32.xlu0 %v960, 32
      %v963 = vpop.permute.xlu0 %962
      %v965 = vadd.f32 %v955, %v963
      %v966 = vtanh.pop %v965
      %968 = vrot.lane.b32.xlu0 %v966, 64
      %v969 = vpop.permute.xlu0 %968
      %v971 = vmul.f32 %v953, %v969
      %v972 = vpack.c.bf16 %v971, %v971
      %973 = vmatprep.subr.bf16.mxu0 0
      %974 = vmatpush1.bf16.msra.mxu0 0
      %975 = vmatprep.subr.bf16.mxu0 0
      %976 = vmatpush1.bf16.msra.mxu0 0
      %977 = vmatprep.subr.bf16.mxu0 0
      %978 = vmatpush1.bf16.msra.mxu0 0
      %979 = vmatprep.subr.bf16.mxu0 0
      %980 = vmatpush1.bf16.msra.mxu0 0
      %981 = vmatprep.subr.bf16.mxu0 0
      %982 = vmatpush1.bf16.msra.mxu0 0
      %983 = vmatprep.subr.bf16.mxu0 0
      %984 = vmatpush1.bf16.msra.mxu0 0
      %985 = vmatprep.subr.bf16.mxu0 0
      %986 = vmatpush1.bf16.msra.mxu0 %v423
      %987 = vmatprep.subr.bf16.mxu0 0
      %988 = vmatpush1.bf16.msra.mxu0 %v422
      %989 = vmatprep.subr.bf16.mxu0 0
      %990 = vmatpush2.bf16.msra.mxu0 0
      %991 = vmatprep.subr.bf16.mxu0 0
      %992 = vmatpush2.bf16.msra.mxu0 0
      %993 = vmatprep.subr.bf16.mxu0 0
      %994 = vmatpush2.bf16.msra.mxu0 0
      %995 = vmatprep.subr.bf16.mxu0 0
      %996 = vmatpush2.bf16.msra.mxu0 0
      %997 = vmatprep.subr.bf16.mxu0 0
      %998 = vmatpush2.bf16.msra.mxu0 0
      %999 = vmatprep.subr.bf16.mxu0 0
      %1000 = vmatpush2.bf16.msra.mxu0 0
      %1001 = vmatprep.subr.bf16.mxu0 0
      %1002 = vmatpush2.bf16.msra.mxu0 0
      %1003 = vmatprep.subr.bf16.mxu0 0
      %1004 = vmatpush2.bf16.msra.mxu0 0
      %1005 = vmatprep.mubr.bf16.mxu0 0
      %1006 = vmatmul.mubr.bf16.gmra.mxu0 %v629
      %v1007 = vpop.f32.mrf.mxu0
      %v1008 = vadd.f32 0.0, %v1007
      %v1009 = vpop.f32.mrf.mxu0
      %v1010 = vpop.f32.mrf.mxu0
      %v1011 = vpop.f32.mrf.mxu0
      %1012 = vdwg.mxu0
      %1014 = vrot.lane.b32.xlu0 %v972, 32
      %v1015 = vpop.permute.xlu0 %1014
      %v1017 = vsel %vm251, %v1015, 0
      %1019 = vmatprep.subr.bf16.mxu0 0
      %1020 = vmatpush1.bf16.msra.mxu0 0
      %1021 = vmatprep.subr.bf16.mxu0 0
      %1022 = vmatpush1.bf16.msra.mxu0 0
      %1023 = vmatprep.subr.bf16.mxu0 0
      %1024 = vmatpush1.bf16.msra.mxu0 0
      %1025 = vmatprep.subr.bf16.mxu0 0
      %1026 = vmatpush1.bf16.msra.mxu0 0
      %1027 = vmatprep.subr.bf16.mxu0 0
      %1028 = vmatpush1.bf16.msra.mxu0 0
      %1029 = vmatprep.subr.bf16.mxu0 0
      %1030 = vmatpush1.bf16.msra.mxu0 0
      %1031 = vmatprep.subr.bf16.mxu0 0
      %1032 = vmatpush1.bf16.msra.mxu0 %v481
      %1033 = vmatprep.subr.bf16.mxu0 0
      %1034 = vmatpush1.bf16.msra.mxu0 %v480
      %1035 = vmatprep.subr.bf16.mxu0 0
      %1036 = vmatpush2.bf16.msra.mxu0 0
      %1037 = vmatprep.subr.bf16.mxu0 0
      %1038 = vmatpush2.bf16.msra.mxu0 0
      %1039 = vmatprep.subr.bf16.mxu0 0
      %1040 = vmatpush2.bf16.msra.mxu0 0
      %1041 = vmatprep.subr.bf16.mxu0 0
      %1042 = vmatpush2.bf16.msra.mxu0 0
      %1043 = vmatprep.subr.bf16.mxu0 0
      %1044 = vmatpush2.bf16.msra.mxu0 0
      %1045 = vmatprep.subr.bf16.mxu0 0
      %1046 = vmatpush2.bf16.msra.mxu0 0
      %1047 = vmatprep.subr.bf16.mxu0 0
      %1048 = vmatpush2.bf16.msra.mxu0 0
      %1049 = vmatprep.subr.bf16.mxu0 0
      %1050 = vmatpush2.bf16.msra.mxu0 0
      %1051 = vmatprep.mubr.bf16.mxu0 0
      %1052 = vmatmul.mubr.bf16.gmra.mxu0 %v1017
      %v1053 = vpop.f32.mrf.mxu0
      %v1054 = vadd.f32 %v1008, %v1053
      %v1055 = vpop.f32.mrf.mxu0
      %v1056 = vpop.f32.mrf.mxu0
      %v1057 = vpop.f32.mrf.mxu0
      %1058 = vdwg.mxu0
      %v1059 = vadd.f32 %v1054, %v192
      %v1060 = vxor.u32 %v1059, 2147483648
      %v1061 = vmul.f32 %v1060, 1.442695
      %v1062 = vpow.pop %v1061
      %v1063 = vadd.f32 %v1062, 1.0
      %v1064 = vrcp.pop %v1063
      %v1065 = vmul.f32 1.0, %v1064
      %v1066 = vtanh.pop %v1059
      %v1067 = vmul.f32 %v1065, %v549
      %1069 = vrot.lane.b32.xlu0 %v1066, 64
      %v1070 = vpop.permute.xlu0 %1069
      %v1072 = vmul.f32 %v1065, %v1070
      %1074 = vrot.lane.b32.xlu0 %v1072, 32
      %v1075 = vpop.permute.xlu0 %1074
      %v1077 = vadd.f32 %v1067, %v1075
      %v1078 = vtanh.pop %v1077
      %1080 = vrot.lane.b32.xlu0 %v1078, 64
      %v1081 = vpop.permute.xlu0 %1080
      %v1083 = vmul.f32 %v1065, %v1081
      %v1084 = vpack.c.bf16 %v1083, %v1083
      %1085 = vmatprep.subr.bf16.mxu0 0
      %1086 = vmatpush1.bf16.msra.mxu0 0
      %1087 = vmatprep.subr.bf16.mxu0 0
      %1088 = vmatpush1.bf16.msra.mxu0 0
      %1089 = vmatprep.subr.bf16.mxu0 0
      %1090 = vmatpush1.bf16.msra.mxu0 0
      %1091 = vmatprep.subr.bf16.mxu0 0
      %1092 = vmatpush1.bf16.msra.mxu0 0
      %1093 = vmatprep.subr.bf16.mxu0 0
      %1094 = vmatpush1.bf16.msra.mxu0 0
      %1095 = vmatprep.subr.bf16.mxu0 0
      %1096 = vmatpush1.bf16.msra.mxu0 0
      %1097 = vmatprep.subr.bf16.mxu0 0
      %1098 = vmatpush1.bf16.msra.mxu0 %v567
      %1099 = vmatprep.subr.bf16.mxu0 0
      %1100 = vmatpush1.bf16.msra.mxu0 %v566
      %1101 = vmatprep.subr.bf16.mxu0 0
      %1102 = vmatpush2.bf16.msra.mxu0 0
      %1103 = vmatprep.subr.bf16.mxu0 0
      %1104 = vmatpush2.bf16.msra.mxu0 0
      %1105 = vmatprep.subr.bf16.mxu0 0
      %1106 = vmatpush2.bf16.msra.mxu0 0
      %1107 = vmatprep.subr.bf16.mxu0 0
      %1108 = vmatpush2.bf16.msra.mxu0 0
      %1109 = vmatprep.subr.bf16.mxu0 0
      %1110 = vmatpush2.bf16.msra.mxu0 0
      %1111 = vmatprep.subr.bf16.mxu0 0
      %1112 = vmatpush2.bf16.msra.mxu0 0
      %1113 = vmatprep.subr.bf16.mxu0 0
      %1114 = vmatpush2.bf16.msra.mxu0 0
      %1115 = vmatprep.subr.bf16.mxu0 0
      %1116 = vmatpush2.bf16.msra.mxu0 0
      %1117 = vmatprep.mubr.bf16.mxu0 0
      %1118 = vmatmul.mubr.bf16.gmra.mxu0 %v717
      %v1119 = vpop.f32.mrf.mxu0
      %v1120 = vadd.f32 0.0, %v1119
      %v1121 = vpop.f32.mrf.mxu0
      %v1122 = vpop.f32.mrf.mxu0
      %v1123 = vpop.f32.mrf.mxu0
      %1124 = vdwg.mxu0
      %1126 = vrot.lane.b32.xlu0 %v1084, 32
      %v1127 = vpop.permute.xlu0 %1126
      %v1129 = vsel %vm251, %v1127, 0
      %1131 = vmatprep.subr.bf16.mxu0 0
      %1132 = vmatpush1.bf16.msra.mxu0 0
      %1133 = vmatprep.subr.bf16.mxu0 0
      %1134 = vmatpush1.bf16.msra.mxu0 0
      %1135 = vmatprep.subr.bf16.mxu0 0
      %1136 = vmatpush1.bf16.msra.mxu0 0
      %1137 = vmatprep.subr.bf16.mxu0 0
      %1138 = vmatpush1.bf16.msra.mxu0 0
      %1139 = vmatprep.subr.bf16.mxu0 0
      %1140 = vmatpush1.bf16.msra.mxu0 0
      %1141 = vmatprep.subr.bf16.mxu0 0
      %1142 = vmatpush1.bf16.msra.mxu0 0
      %1143 = vmatprep.subr.bf16.mxu0 0
      %1144 = vmatpush1.bf16.msra.mxu0 %v625
      %1145 = vmatprep.subr.bf16.mxu0 0
      %1146 = vmatpush1.bf16.msra.mxu0 %v624
      %1147 = vmatprep.subr.bf16.mxu0 0
      %1148 = vmatpush2.bf16.msra.mxu0 0
      %1149 = vmatprep.subr.bf16.mxu0 0
      %1150 = vmatpush2.bf16.msra.mxu0 0
      %1151 = vmatprep.subr.bf16.mxu0 0
      %1152 = vmatpush2.bf16.msra.mxu0 0
      %1153 = vmatprep.subr.bf16.mxu0 0
      %1154 = vmatpush2.bf16.msra.mxu0 0
      %1155 = vmatprep.subr.bf16.mxu0 0
      %1156 = vmatpush2.bf16.msra.mxu0 0
      %1157 = vmatprep.subr.bf16.mxu0 0
      %1158 = vmatpush2.bf16.msra.mxu0 0
      %1159 = vmatprep.subr.bf16.mxu0 0
      %1160 = vmatpush2.bf16.msra.mxu0 0
      %1161 = vmatprep.subr.bf16.mxu0 0
      %1162 = vmatpush2.bf16.msra.mxu0 0
      %1163 = vmatprep.mubr.bf16.mxu0 0
      %1164 = vmatmul.mubr.bf16.gmra.mxu0 %v1129
      %v1165 = vpop.f32.mrf.mxu0
      %v1166 = vadd.f32 %v1120, %v1165
      %v1167 = vpop.f32.mrf.mxu0
      %v1168 = vpop.f32.mrf.mxu0
      %v1169 = vpop.f32.mrf.mxu0
      %1170 = vdwg.mxu0
      %v1171 = vadd.f32 %v1166, %v196
      %v1172 = vxor.u32 %v1171, 2147483648
      %v1173 = vmul.f32 %v1172, 1.442695
      %v1174 = vpow.pop %v1173
      %v1175 = vadd.f32 %v1174, 1.0
      %v1176 = vrcp.pop %v1175
      %v1177 = vmul.f32 1.0, %v1176
      %v1178 = vtanh.pop %v1171
      %v1179 = vmul.f32 %v1177, %v693
      %1181 = vrot.lane.b32.xlu0 %v1178, 64
      %v1182 = vpop.permute.xlu0 %1181
      %v1184 = vmul.f32 %v1177, %v1182
      %1186 = vrot.lane.b32.xlu0 %v1184, 32
      %v1187 = vpop.permute.xlu0 %1186
      %v1189 = vadd.f32 %v1179, %v1187
      %v1190 = vtanh.pop %v1189
      %1192 = vrot.lane.b32.xlu0 %v1190, 64
      %v1193 = vpop.permute.xlu0 %1192
      %v1195 = vmul.f32 %v1177, %v1193
      %v1196 = vpack.c.bf16 %v1195, %v1195
      %1198 = vrot.lane.b32.xlu0 %v1196, 32
      %v1199 = vpop.permute.xlu0 %1198
      %v1201 = vsel %vm251, %v1199, 0
      %1203 = vmatprep.subr.bf16.mxu0 0
      %1204 = vmatpush1.bf16.msra.mxu0 0
      %1205 = vmatprep.subr.bf16.mxu0 0
      %1206 = vmatpush1.bf16.msra.mxu0 0
      %1207 = vmatprep.subr.bf16.mxu0 0
      %1208 = vmatpush1.bf16.msra.mxu0 0
      %1209 = vmatprep.subr.bf16.mxu0 0
      %1210 = vmatpush1.bf16.msra.mxu0 0
      %1211 = vmatprep.subr.bf16.mxu0 0
      %1212 = vmatpush1.bf16.msra.mxu0 0
      %1213 = vmatprep.subr.bf16.mxu0 0
      %1214 = vmatpush1.bf16.msra.mxu0 0
      %1215 = vmatprep.subr.bf16.mxu0 0
      %1216 = vmatpush1.bf16.msra.mxu0 %v713
      %1217 = vmatprep.subr.bf16.mxu0 0
      %1218 = vmatpush1.bf16.msra.mxu0 %v712
      %1219 = vmatprep.subr.bf16.mxu0 0
      %1220 = vmatpush2.bf16.msra.mxu0 0
      %1221 = vmatprep.subr.bf16.mxu0 0
      %1222 = vmatpush2.bf16.msra.mxu0 0
      %1223 = vmatprep.subr.bf16.mxu0 0
      %1224 = vmatpush2.bf16.msra.mxu0 0
      %1225 = vmatprep.subr.bf16.mxu0 0
      %1226 = vmatpush2.bf16.msra.mxu0 0
      %1227 = vmatprep.subr.bf16.mxu0 0
      %1228 = vmatpush2.bf16.msra.mxu0 0
      %1229 = vmatprep.subr.bf16.mxu0 0
      %1230 = vmatpush2.bf16.msra.mxu0 0
      %1231 = vmatprep.subr.bf16.mxu0 0
      %1232 = vmatpush2.bf16.msra.mxu0 0
      %1233 = vmatprep.subr.bf16.mxu0 0
      %1234 = vmatpush2.bf16.msra.mxu0 0
      %1235 = vmatprep.mubr.bf16.mxu0 0
      %1236 = vmatmul.mubr.bf16.gmra.mxu0 %v1201
      %v1237 = vpop.f32.mrf.mxu0
      %v1238 = vadd.f32 %v202, %v1237
      %v1239 = vpop.f32.mrf.mxu0
      %v1240 = vpop.f32.mrf.mxu0
      %v1241 = vpop.f32.mrf.mxu0
      %1242 = vdwg.mxu0
      %v1243 = vmul.f32 %v1238, %v1238
      %v1244 = vpack.c.bf16 %v1243, %v1243
      %1245 = vmatprep.subr.bf16.mxu0 0
      %1246 = vmatpush1.bf16.msra.mxu0 %v800
      %1247 = vmatprep.subr.bf16.mxu0 0
      %1248 = vmatpush1.bf16.msra.mxu0 %v799
      %1249 = vmatprep.subr.bf16.mxu0 0
      %1250 = vmatpush1.bf16.msra.mxu0 %v798
      %1251 = vmatprep.subr.bf16.mxu0 0
      %1252 = vmatpush1.bf16.msra.mxu0 %v797
      %1253 = vmatprep.subr.bf16.mxu0 0
      %1254 = vmatpush1.bf16.msra.mxu0 %v796
      %1255 = vmatprep.subr.bf16.mxu0 0
      %1256 = vmatpush1.bf16.msra.mxu0 %v795
      %1257 = vmatprep.subr.bf16.mxu0 0
      %1258 = vmatpush1.bf16.msra.mxu0 %v794
      %1259 = vmatprep.subr.bf16.mxu0 0
      %1260 = vmatpush1.bf16.msra.mxu0 %v793
      %1261 = vmatprep.subr.bf16.mxu0 0
      %1262 = vmatpush2.bf16.msra.mxu0 0
      %1263 = vmatprep.subr.bf16.mxu0 0
      %1264 = vmatpush2.bf16.msra.mxu0 0
      %1265 = vmatprep.subr.bf16.mxu0 0
      %1266 = vmatpush2.bf16.msra.mxu0 0
      %1267 = vmatprep.subr.bf16.mxu0 0
      %1268 = vmatpush2.bf16.msra.mxu0 0
      %1269 = vmatprep.subr.bf16.mxu0 0
      %1270 = vmatpush2.bf16.msra.mxu0 0
      %1271 = vmatprep.subr.bf16.mxu0 0
      %1272 = vmatpush2.bf16.msra.mxu0 0
      %1273 = vmatprep.subr.bf16.mxu0 0
      %1274 = vmatpush2.bf16.msra.mxu0 0
      %1275 = vmatprep.subr.bf16.mxu0 0
      %1276 = vmatpush2.bf16.msra.mxu0 0
      %1277 = vmatprep.mubr.bf16.mxu0 0
      %1278 = vmatmul.mubr.bf16.gmra.mxu0 %v1244
      %v1279 = vpop.f32.mrf.mxu0
      %v1280 = vadd.f32 0.0, %v1279
      %v1281 = vpop.f32.mrf.mxu0
      %v1282 = vpop.f32.mrf.mxu0
      %v1283 = vpop.f32.mrf.mxu0
      %1284 = vdwg.mxu0
      %v1285 = vrsqrt.pop %v1280
      %v1286 = vmul.f32 %v1280, %v1285
      %vm1287 = vcmp.eq.f32.partialorder %v1280, inf
      %v1288 = vsel %vm1287, %v1280, %v1286
      %vm1289 = vcmp.eq.f32.partialorder %v1280, 0.0
      %v1290 = vand.u32 %v1280, 2147483648
      %v1291 = vsel %vm1289, %v1290, %v1288
      %v1292 = vadd.f32 %v1291, 1e-08
      %v1293 = vrcp.pop %v1292
      %v1294 = vmul.f32 %v1238, %v1293
      %v1295 = vsel %vm208, %v1238, %v1294
      %s1296 = smul.u32 %s863, 8
      %s1297 = scalar_lea.vmem [#allocation15], %s1296
      %1298 = vst [vmem:[%s1297] sm:$0xff] %v1295
      %s1299 = sadd.s32 %s234, 2
      %s1300 = smul.addr %s1299, 4
      %s1301 = scalar_lea.vmem [#allocation4], %s1300
      %v1302 = vld [vmem:[%s1301] sm:$0xf]
      %1303 = vmatprep.subr.bf16.mxu0 0
      %1304 = vmatpush1.bf16.msra.mxu0 0
      %1305 = vmatprep.subr.bf16.mxu0 0
      %1306 = vmatpush1.bf16.msra.mxu0 0
      %1307 = vmatprep.subr.bf16.mxu0 0
      %1308 = vmatpush1.bf16.msra.mxu0 0
      %1309 = vmatprep.subr.bf16.mxu0 0
      %1310 = vmatpush1.bf16.msra.mxu0 0
      %1311 = vmatprep.subr.bf16.mxu0 0
      %1312 = vmatpush1.bf16.msra.mxu0 0
      %1313 = vmatprep.subr.bf16.mxu0 0
      %1314 = vmatpush1.bf16.msra.mxu0 0
      %1315 = vmatprep.subr.bf16.mxu0 0
      %1316 = vmatpush1.bf16.msra.mxu0 %v248
      %1317 = vmatprep.subr.bf16.mxu0 0
      %1318 = vmatpush1.bf16.msra.mxu0 %v247
      %1319 = vmatprep.subr.bf16.mxu0 0
      %1320 = vmatpush2.bf16.msra.mxu0 0
      %1321 = vmatprep.subr.bf16.mxu0 0
      %1322 = vmatpush2.bf16.msra.mxu0 0
      %1323 = vmatprep.subr.bf16.mxu0 0
      %1324 = vmatpush2.bf16.msra.mxu0 0
      %1325 = vmatprep.subr.bf16.mxu0 0
      %1326 = vmatpush2.bf16.msra.mxu0 0
      %1327 = vmatprep.subr.bf16.mxu0 0
      %1328 = vmatpush2.bf16.msra.mxu0 0
      %1329 = vmatprep.subr.bf16.mxu0 0
      %1330 = vmatpush2.bf16.msra.mxu0 0
      %1331 = vmatprep.subr.bf16.mxu0 0
      %1332 = vmatpush2.bf16.msra.mxu0 0
      %1333 = vmatprep.subr.bf16.mxu0 0
      %1334 = vmatpush2.bf16.msra.mxu0 0
      %1335 = vmatprep.mubr.bf16.mxu0 0
      %1336 = vmatmul.mubr.bf16.gmra.mxu0 %v1017
      %v1337 = vpop.f32.mrf.mxu0
      %v1338 = vadd.f32 0.0, %v1337
      %v1339 = vpop.f32.mrf.mxu0
      %v1340 = vpop.f32.mrf.mxu0
      %v1341 = vpop.f32.mrf.mxu0
      %1342 = vdwg.mxu0
      %1343 = vmatprep.subr.bf16.mxu0 0
      %1344 = vmatpush1.bf16.msra.mxu0 %v334
      %1345 = vmatprep.subr.bf16.mxu0 0
      %1346 = vmatpush1.bf16.msra.mxu0 %v333
      %1347 = vmatprep.subr.bf16.mxu0 0
      %1348 = vmatpush1.bf16.msra.mxu0 %v332
      %1349 = vmatprep.subr.bf16.mxu0 0
      %1350 = vmatpush1.bf16.msra.mxu0 %v331
      %1351 = vmatprep.subr.bf16.mxu0 0
      %1352 = vmatpush1.bf16.msra.mxu0 %v330
      %1353 = vmatprep.subr.bf16.mxu0 0
      %1354 = vmatpush1.bf16.msra.mxu0 %v329
      %1355 = vmatprep.subr.bf16.mxu0 0
      %1356 = vmatpush1.bf16.msra.mxu0 %v328
      %1357 = vmatprep.subr.bf16.mxu0 0
      %1358 = vmatpush1.bf16.msra.mxu0 %v327
      %1359 = vmatprep.subr.bf16.mxu0 0
      %1360 = vmatpush2.bf16.msra.mxu0 0
      %1361 = vmatprep.subr.bf16.mxu0 0
      %1362 = vmatpush2.bf16.msra.mxu0 0
      %1363 = vmatprep.subr.bf16.mxu0 0
      %1364 = vmatpush2.bf16.msra.mxu0 0
      %1365 = vmatprep.subr.bf16.mxu0 0
      %1366 = vmatpush2.bf16.msra.mxu0 0
      %1367 = vmatprep.subr.bf16.mxu0 0
      %1368 = vmatpush2.bf16.msra.mxu0 0
      %1369 = vmatprep.subr.bf16.mxu0 0
      %1370 = vmatpush2.bf16.msra.mxu0 0
      %1371 = vmatprep.subr.bf16.mxu0 0
      %1372 = vmatpush2.bf16.msra.mxu0 0
      %1373 = vmatprep.subr.bf16.mxu0 0
      %1374 = vmatpush2.bf16.msra.mxu0 0
      %1375 = vmatprep.mubr.bf16.mxu0 0
      %1376 = vmatmul.mubr.bf16.gmra.mxu0 %v1302
      %v1377 = vpop.f32.mrf.mxu0
      %v1378 = vadd.f32 %v1338, %v1377
      %v1379 = vpop.f32.mrf.mxu0
      %v1380 = vpop.f32.mrf.mxu0
      %v1381 = vpop.f32.mrf.mxu0
      %1382 = vdwg.mxu0
      %v1383 = vadd.f32 %v1378, %v188
      %v1384 = vxor.u32 %v1383, 2147483648
      %v1385 = vmul.f32 %v1384, 1.442695
      %v1386 = vpow.pop %v1385
      %v1387 = vadd.f32 %v1386, 1.0
      %v1388 = vrcp.pop %v1387
      %v1389 = vmul.f32 1.0, %v1388
      %v1390 = vtanh.pop %v1383
      %v1391 = vmul.f32 %v1389, %v965
      %1393 = vrot.lane.b32.xlu0 %v1390, 64
      %v1394 = vpop.permute.xlu0 %1393
      %v1396 = vmul.f32 %v1389, %v1394
      %1398 = vrot.lane.b32.xlu0 %v1396, 32
      %v1399 = vpop.permute.xlu0 %1398
      %v1401 = vadd.f32 %v1391, %v1399
      %v1402 = vtanh.pop %v1401
      %1404 = vrot.lane.b32.xlu0 %v1402, 64
      %v1405 = vpop.permute.xlu0 %1404
      %v1407 = vmul.f32 %v1389, %v1405
      %v1408 = vpack.c.bf16 %v1407, %v1407
      %1409 = vmatprep.subr.bf16.mxu0 0
      %1410 = vmatpush1.bf16.msra.mxu0 0
      %1411 = vmatprep.subr.bf16.mxu0 0
      %1412 = vmatpush1.bf16.msra.mxu0 0
      %1413 = vmatprep.subr.bf16.mxu0 0
      %1414 = vmatpush1.bf16.msra.mxu0 0
      %1415 = vmatprep.subr.bf16.mxu0 0
      %1416 = vmatpush1.bf16.msra.mxu0 0
      %1417 = vmatprep.subr.bf16.mxu0 0
      %1418 = vmatpush1.bf16.msra.mxu0 0
      %1419 = vmatprep.subr.bf16.mxu0 0
      %1420 = vmatpush1.bf16.msra.mxu0 0
      %1421 = vmatprep.subr.bf16.mxu0 0
      %1422 = vmatpush1.bf16.msra.mxu0 %v423
      %1423 = vmatprep.subr.bf16.mxu0 0
      %1424 = vmatpush1.bf16.msra.mxu0 %v422
      %1425 = vmatprep.subr.bf16.mxu0 0
      %1426 = vmatpush2.bf16.msra.mxu0 0
      %1427 = vmatprep.subr.bf16.mxu0 0
      %1428 = vmatpush2.bf16.msra.mxu0 0
      %1429 = vmatprep.subr.bf16.mxu0 0
      %1430 = vmatpush2.bf16.msra.mxu0 0
      %1431 = vmatprep.subr.bf16.mxu0 0
      %1432 = vmatpush2.bf16.msra.mxu0 0
      %1433 = vmatprep.subr.bf16.mxu0 0
      %1434 = vmatpush2.bf16.msra.mxu0 0
      %1435 = vmatprep.subr.bf16.mxu0 0
      %1436 = vmatpush2.bf16.msra.mxu0 0
      %1437 = vmatprep.subr.bf16.mxu0 0
      %1438 = vmatpush2.bf16.msra.mxu0 0
      %1439 = vmatprep.subr.bf16.mxu0 0
      %1440 = vmatpush2.bf16.msra.mxu0 0
      %1441 = vmatprep.mubr.bf16.mxu0 0
      %1442 = vmatmul.mubr.bf16.gmra.mxu0 %v1129
      %v1443 = vpop.f32.mrf.mxu0
      %v1444 = vadd.f32 0.0, %v1443
      %v1445 = vpop.f32.mrf.mxu0
      %v1446 = vpop.f32.mrf.mxu0
      %v1447 = vpop.f32.mrf.mxu0
      %1448 = vdwg.mxu0
      %1450 = vrot.lane.b32.xlu0 %v1408, 32
      %v1451 = vpop.permute.xlu0 %1450
      %v1453 = vsel %vm251, %v1451, 0
      %1455 = vmatprep.subr.bf16.mxu0 0
      %1456 = vmatpush1.bf16.msra.mxu0 0
      %1457 = vmatprep.subr.bf16.mxu0 0
      %1458 = vmatpush1.bf16.msra.mxu0 0
      %1459 = vmatprep.subr.bf16.mxu0 0
      %1460 = vmatpush1.bf16.msra.mxu0 0
      %1461 = vmatprep.subr.bf16.mxu0 0
      %1462 = vmatpush1.bf16.msra.mxu0 0
      %1463 = vmatprep.subr.bf16.mxu0 0
      %1464 = vmatpush1.bf16.msra.mxu0 0
      %1465 = vmatprep.subr.bf16.mxu0 0
      %1466 = vmatpush1.bf16.msra.mxu0 0
      %1467 = vmatprep.subr.bf16.mxu0 0
      %1468 = vmatpush1.bf16.msra.mxu0 %v481
      %1469 = vmatprep.subr.bf16.mxu0 0
      %1470 = vmatpush1.bf16.msra.mxu0 %v480
      %1471 = vmatprep.subr.bf16.mxu0 0
      %1472 = vmatpush2.bf16.msra.mxu0 0
      %1473 = vmatprep.subr.bf16.mxu0 0
      %1474 = vmatpush2.bf16.msra.mxu0 0
      %1475 = vmatprep.subr.bf16.mxu0 0
      %1476 = vmatpush2.bf16.msra.mxu0 0
      %1477 = vmatprep.subr.bf16.mxu0 0
      %1478 = vmatpush2.bf16.msra.mxu0 0
      %1479 = vmatprep.subr.bf16.mxu0 0
      %1480 = vmatpush2.bf16.msra.mxu0 0
      %1481 = vmatprep.subr.bf16.mxu0 0
      %1482 = vmatpush2.bf16.msra.mxu0 0
      %1483 = vmatprep.subr.bf16.mxu0 0
      %1484 = vmatpush2.bf16.msra.mxu0 0
      %1485 = vmatprep.subr.bf16.mxu0 0
      %1486 = vmatpush2.bf16.msra.mxu0 0
      %1487 = vmatprep.mubr.bf16.mxu0 0
      %1488 = vmatmul.mubr.bf16.gmra.mxu0 %v1453
      %v1489 = vpop.f32.mrf.mxu0
      %v1490 = vadd.f32 %v1444, %v1489
      %v1491 = vpop.f32.mrf.mxu0
      %v1492 = vpop.f32.mrf.mxu0
      %v1493 = vpop.f32.mrf.mxu0
      %1494 = vdwg.mxu0
      %v1495 = vadd.f32 %v1490, %v192
      %v1496 = vxor.u32 %v1495, 2147483648
      %v1497 = vmul.f32 %v1496, 1.442695
      %v1498 = vpow.pop %v1497
      %v1499 = vadd.f32 %v1498, 1.0
      %v1500 = vrcp.pop %v1499
      %v1501 = vmul.f32 1.0, %v1500
      %v1502 = vtanh.pop %v1495
      %v1503 = vmul.f32 %v1501, %v1077
      %1505 = vrot.lane.b32.xlu0 %v1502, 64
      %v1506 = vpop.permute.xlu0 %1505
      %v1508 = vmul.f32 %v1501, %v1506
      %1510 = vrot.lane.b32.xlu0 %v1508, 32
      %v1511 = vpop.permute.xlu0 %1510
      %v1513 = vadd.f32 %v1503, %v1511
      %v1514 = vtanh.pop %v1513
      %1516 = vrot.lane.b32.xlu0 %v1514, 64
      %v1517 = vpop.permute.xlu0 %1516
      %v1519 = vmul.f32 %v1501, %v1517
      %v1520 = vpack.c.bf16 %v1519, %v1519
      %1521 = vmatprep.subr.bf16.mxu0 0
      %1522 = vmatpush1.bf16.msra.mxu0 0
      %1523 = vmatprep.subr.bf16.mxu0 0
      %1524 = vmatpush1.bf16.msra.mxu0 0
      %1525 = vmatprep.subr.bf16.mxu0 0
      %1526 = vmatpush1.bf16.msra.mxu0 0
      %1527 = vmatprep.subr.bf16.mxu0 0
      %1528 = vmatpush1.bf16.msra.mxu0 0
      %1529 = vmatprep.subr.bf16.mxu0 0
      %1530 = vmatpush1.bf16.msra.mxu0 0
      %1531 = vmatprep.subr.bf16.mxu0 0
      %1532 = vmatpush1.bf16.msra.mxu0 0
      %1533 = vmatprep.subr.bf16.mxu0 0
      %1534 = vmatpush1.bf16.msra.mxu0 %v567
      %1535 = vmatprep.subr.bf16.mxu0 0
      %1536 = vmatpush1.bf16.msra.mxu0 %v566
      %1537 = vmatprep.subr.bf16.mxu0 0
      %1538 = vmatpush2.bf16.msra.mxu0 0
      %1539 = vmatprep.subr.bf16.mxu0 0
      %1540 = vmatpush2.bf16.msra.mxu0 0
      %1541 = vmatprep.subr.bf16.mxu0 0
      %1542 = vmatpush2.bf16.msra.mxu0 0
      %1543 = vmatprep.subr.bf16.mxu0 0
      %1544 = vmatpush2.bf16.msra.mxu0 0
      %1545 = vmatprep.subr.bf16.mxu0 0
      %1546 = vmatpush2.bf16.msra.mxu0 0
      %1547 = vmatprep.subr.bf16.mxu0 0
      %1548 = vmatpush2.bf16.msra.mxu0 0
      %1549 = vmatprep.subr.bf16.mxu0 0
      %1550 = vmatpush2.bf16.msra.mxu0 0
      %1551 = vmatprep.subr.bf16.mxu0 0
      %1552 = vmatpush2.bf16.msra.mxu0 0
      %1553 = vmatprep.mubr.bf16.mxu0 0
      %1554 = vmatmul.mubr.bf16.gmra.mxu0 %v1201
      %v1555 = vpop.f32.mrf.mxu0
      %v1556 = vadd.f32 0.0, %v1555
      %v1557 = vpop.f32.mrf.mxu0
      %v1558 = vpop.f32.mrf.mxu0
      %v1559 = vpop.f32.mrf.mxu0
      %1560 = vdwg.mxu0
      %1562 = vrot.lane.b32.xlu0 %v1520, 32
      %v1563 = vpop.permute.xlu0 %1562
      %v1565 = vsel %vm251, %v1563, 0
      %1567 = vmatprep.subr.bf16.mxu0 0
      %1568 = vmatpush1.bf16.msra.mxu0 0
      %1569 = vmatprep.subr.bf16.mxu0 0
      %1570 = vmatpush1.bf16.msra.mxu0 0
      %1571 = vmatprep.subr.bf16.mxu0 0
      %1572 = vmatpush1.bf16.msra.mxu0 0
      %1573 = vmatprep.subr.bf16.mxu0 0
      %1574 = vmatpush1.bf16.msra.mxu0 0
      %1575 = vmatprep.subr.bf16.mxu0 0
      %1576 = vmatpush1.bf16.msra.mxu0 0
      %1577 = vmatprep.subr.bf16.mxu0 0
      %1578 = vmatpush1.bf16.msra.mxu0 0
      %1579 = vmatprep.subr.bf16.mxu0 0
      %1580 = vmatpush1.bf16.msra.mxu0 %v625
      %1581 = vmatprep.subr.bf16.mxu0 0
      %1582 = vmatpush1.bf16.msra.mxu0 %v624
      %1583 = vmatprep.subr.bf16.mxu0 0
      %1584 = vmatpush2.bf16.msra.mxu0 0
      %1585 = vmatprep.subr.bf16.mxu0 0
      %1586 = vmatpush2.bf16.msra.mxu0 0
      %1587 = vmatprep.subr.bf16.mxu0 0
      %1588 = vmatpush2.bf16.msra.mxu0 0
      %1589 = vmatprep.subr.bf16.mxu0 0
      %1590 = vmatpush2.bf16.msra.mxu0 0
      %1591 = vmatprep.subr.bf16.mxu0 0
      %1592 = vmatpush2.bf16.msra.mxu0 0
      %1593 = vmatprep.subr.bf16.mxu0 0
      %1594 = vmatpush2.bf16.msra.mxu0 0
      %1595 = vmatprep.subr.bf16.mxu0 0
      %1596 = vmatpush2.bf16.msra.mxu0 0
      %1597 = vmatprep.subr.bf16.mxu0 0
      %1598 = vmatpush2.bf16.msra.mxu0 0
      %1599 = vmatprep.mubr.bf16.mxu0 0
      %1600 = vmatmul.mubr.bf16.gmra.mxu0 %v1565
      %v1601 = vpop.f32.mrf.mxu0
      %v1602 = vadd.f32 %v1556, %v1601
      %v1603 = vpop.f32.mrf.mxu0
      %v1604 = vpop.f32.mrf.mxu0
      %v1605 = vpop.f32.mrf.mxu0
      %1606 = vdwg.mxu0
      %v1607 = vadd.f32 %v1602, %v196
      %v1608 = vxor.u32 %v1607, 2147483648
      %v1609 = vmul.f32 %v1608, 1.442695
      %v1610 = vpow.pop %v1609
      %v1611 = vadd.f32 %v1610, 1.0
      %v1612 = vrcp.pop %v1611
      %v1613 = vmul.f32 1.0, %v1612
      %v1614 = vtanh.pop %v1607
      %v1615 = vmul.f32 %v1613, %v1189
      %1617 = vrot.lane.b32.xlu0 %v1614, 64
      %v1618 = vpop.permute.xlu0 %1617
      %v1620 = vmul.f32 %v1613, %v1618
      %1622 = vrot.lane.b32.xlu0 %v1620, 32
      %v1623 = vpop.permute.xlu0 %1622
      %v1625 = vadd.f32 %v1615, %v1623
      %v1626 = vtanh.pop %v1625
      %1628 = vrot.lane.b32.xlu0 %v1626, 64
      %v1629 = vpop.permute.xlu0 %1628
      %v1631 = vmul.f32 %v1613, %v1629
      %v1632 = vpack.c.bf16 %v1631, %v1631
      %1634 = vrot.lane.b32.xlu0 %v1632, 32
      %v1635 = vpop.permute.xlu0 %1634
      %v1637 = vsel %vm251, %v1635, 0
      %1639 = vmatprep.subr.bf16.mxu0 0
      %1640 = vmatpush1.bf16.msra.mxu0 0
      %1641 = vmatprep.subr.bf16.mxu0 0
      %1642 = vmatpush1.bf16.msra.mxu0 0
      %1643 = vmatprep.subr.bf16.mxu0 0
      %1644 = vmatpush1.bf16.msra.mxu0 0
      %1645 = vmatprep.subr.bf16.mxu0 0
      %1646 = vmatpush1.bf16.msra.mxu0 0
      %1647 = vmatprep.subr.bf16.mxu0 0
      %1648 = vmatpush1.bf16.msra.mxu0 0
      %1649 = vmatprep.subr.bf16.mxu0 0
      %1650 = vmatpush1.bf16.msra.mxu0 0
      %1651 = vmatprep.subr.bf16.mxu0 0
      %1652 = vmatpush1.bf16.msra.mxu0 %v713
      %1653 = vmatprep.subr.bf16.mxu0 0
      %1654 = vmatpush1.bf16.msra.mxu0 %v712
      %1655 = vmatprep.subr.bf16.mxu0 0
      %1656 = vmatpush2.bf16.msra.mxu0 0
      %1657 = vmatprep.subr.bf16.mxu0 0
      %1658 = vmatpush2.bf16.msra.mxu0 0
      %1659 = vmatprep.subr.bf16.mxu0 0
      %1660 = vmatpush2.bf16.msra.mxu0 0
      %1661 = vmatprep.subr.bf16.mxu0 0
      %1662 = vmatpush2.bf16.msra.mxu0 0
      %1663 = vmatprep.subr.bf16.mxu0 0
      %1664 = vmatpush2.bf16.msra.mxu0 0
      %1665 = vmatprep.subr.bf16.mxu0 0
      %1666 = vmatpush2.bf16.msra.mxu0 0
      %1667 = vmatprep.subr.bf16.mxu0 0
      %1668 = vmatpush2.bf16.msra.mxu0 0
      %1669 = vmatprep.subr.bf16.mxu0 0
      %1670 = vmatpush2.bf16.msra.mxu0 0
      %1671 = vmatprep.mubr.bf16.mxu0 0
      %1672 = vmatmul.mubr.bf16.gmra.mxu0 %v1637
      %v1673 = vpop.f32.mrf.mxu0
      %v1674 = vadd.f32 %v202, %v1673
      %v1675 = vpop.f32.mrf.mxu0
      %v1676 = vpop.f32.mrf.mxu0
      %v1677 = vpop.f32.mrf.mxu0
      %1678 = vdwg.mxu0
      %v1679 = vmul.f32 %v1674, %v1674
      %v1680 = vpack.c.bf16 %v1679, %v1679
      %1681 = vmatprep.subr.bf16.mxu0 0
      %1682 = vmatpush1.bf16.msra.mxu0 %v800
      %1683 = vmatprep.subr.bf16.mxu0 0
      %1684 = vmatpush1.bf16.msra.mxu0 %v799
      %1685 = vmatprep.subr.bf16.mxu0 0
      %1686 = vmatpush1.bf16.msra.mxu0 %v798
      %1687 = vmatprep.subr.bf16.mxu0 0
      %1688 = vmatpush1.bf16.msra.mxu0 %v797
      %1689 = vmatprep.subr.bf16.mxu0 0
      %1690 = vmatpush1.bf16.msra.mxu0 %v796
      %1691 = vmatprep.subr.bf16.mxu0 0
      %1692 = vmatpush1.bf16.msra.mxu0 %v795
      %1693 = vmatprep.subr.bf16.mxu0 0
      %1694 = vmatpush1.bf16.msra.mxu0 %v794
      %1695 = vmatprep.subr.bf16.mxu0 0
      %1696 = vmatpush1.bf16.msra.mxu0 %v793
      %1697 = vmatprep.subr.bf16.mxu0 0
      %1698 = vmatpush2.bf16.msra.mxu0 0
      %1699 = vmatprep.subr.bf16.mxu0 0
      %1700 = vmatpush2.bf16.msra.mxu0 0
      %1701 = vmatprep.subr.bf16.mxu0 0
      %1702 = vmatpush2.bf16.msra.mxu0 0
      %1703 = vmatprep.subr.bf16.mxu0 0
      %1704 = vmatpush2.bf16.msra.mxu0 0
      %1705 = vmatprep.subr.bf16.mxu0 0
      %1706 = vmatpush2.bf16.msra.mxu0 0
      %1707 = vmatprep.subr.bf16.mxu0 0
      %1708 = vmatpush2.bf16.msra.mxu0 0
      %1709 = vmatprep.subr.bf16.mxu0 0
      %1710 = vmatpush2.bf16.msra.mxu0 0
      %1711 = vmatprep.subr.bf16.mxu0 0
      %1712 = vmatpush2.bf16.msra.mxu0 0
      %1713 = vmatprep.mubr.bf16.mxu0 0
      %1714 = vmatmul.mubr.bf16.gmra.mxu0 %v1680
      %v1715 = vpop.f32.mrf.mxu0
      %v1716 = vadd.f32 0.0, %v1715
      %v1717 = vpop.f32.mrf.mxu0
      %v1718 = vpop.f32.mrf.mxu0
      %v1719 = vpop.f32.mrf.mxu0
      %1720 = vdwg.mxu0
      %v1721 = vrsqrt.pop %v1716
      %v1722 = vmul.f32 %v1716, %v1721
      %vm1723 = vcmp.eq.f32.partialorder %v1716, inf
      %v1724 = vsel %vm1723, %v1716, %v1722
      %vm1725 = vcmp.eq.f32.partialorder %v1716, 0.0
      %v1726 = vand.u32 %v1716, 2147483648
      %v1727 = vsel %vm1725, %v1726, %v1724
      %v1728 = vadd.f32 %v1727, 1e-08
      %v1729 = vrcp.pop %v1728
      %v1730 = vmul.f32 %v1674, %v1729
      %v1731 = vsel %vm208, %v1674, %v1730
      %s1732 = smul.u32 %s1299, 8
      %s1733 = scalar_lea.vmem [#allocation15], %s1732
      %1734 = vst [vmem:[%s1733] sm:$0xff] %v1731
      %v1735 = vpack.c.bf16 %v1731, %v1731
      %1736 = vmatprep.subr.bf16.mxu0 0
      %1737 = vmatpush1.bf16.msra.mxu0 0
      %1738 = vmatprep.subr.bf16.mxu0 0
      %1739 = vmatpush1.bf16.msra.mxu0 0
      %1740 = vmatprep.subr.bf16.mxu0 0
      %1741 = vmatpush1.bf16.msra.mxu0 0
      %1742 = vmatprep.subr.bf16.mxu0 0
      %1743 = vmatpush1.bf16.msra.mxu0 0
      %1744 = vmatprep.subr.bf16.mxu0 0
      %1745 = vmatpush1.bf16.msra.mxu0 0
      %1746 = vmatprep.subr.bf16.mxu0 0
      %1747 = vmatpush1.bf16.msra.mxu0 0
      %1748 = vmatprep.subr.bf16.mxu0 0
      %1749 = vmatpush1.bf16.msra.mxu0 %v248
      %1750 = vmatprep.subr.bf16.mxu0 0
      %1751 = vmatpush1.bf16.msra.mxu0 %v247
      %1752 = vmatprep.subr.bf16.mxu0 0
      %1753 = vmatpush2.bf16.msra.mxu0 0
      %1754 = vmatprep.subr.bf16.mxu0 0
      %1755 = vmatpush2.bf16.msra.mxu0 0
      %1756 = vmatprep.subr.bf16.mxu0 0
      %1757 = vmatpush2.bf16.msra.mxu0 0
      %1758 = vmatprep.subr.bf16.mxu0 0
      %1759 = vmatpush2.bf16.msra.mxu0 0
      %1760 = vmatprep.subr.bf16.mxu0 0
      %1761 = vmatpush2.bf16.msra.mxu0 0
      %1762 = vmatprep.subr.bf16.mxu0 0
      %1763 = vmatpush2.bf16.msra.mxu0 0
      %1764 = vmatprep.subr.bf16.mxu0 0
      %1765 = vmatpush2.bf16.msra.mxu0 0
      %1766 = vmatprep.subr.bf16.mxu0 0
      %1767 = vmatpush2.bf16.msra.mxu0 0
      %1768 = vmatprep.mubr.bf16.mxu0 0
      %1769 = vmatmul.mubr.bf16.gmra.mxu0 %v1453
      %v1770 = vpop.f32.mrf.mxu0
      %v1771 = vadd.f32 0.0, %v1770
      %v1772 = vpop.f32.mrf.mxu0
      %v1773 = vpop.f32.mrf.mxu0
      %v1774 = vpop.f32.mrf.mxu0
      %1775 = vdwg.mxu0
      %1776 = vmatprep.subr.bf16.mxu0 0
      %1777 = vmatpush1.bf16.msra.mxu0 %v334
      %1778 = vmatprep.subr.bf16.mxu0 0
      %1779 = vmatpush1.bf16.msra.mxu0 %v333
      %1780 = vmatprep.subr.bf16.mxu0 0
      %1781 = vmatpush1.bf16.msra.mxu0 %v332
      %1782 = vmatprep.subr.bf16.mxu0 0
      %1783 = vmatpush1.bf16.msra.mxu0 %v331
      %1784 = vmatprep.subr.bf16.mxu0 0
      %1785 = vmatpush1.bf16.msra.mxu0 %v330
      %1786 = vmatprep.subr.bf16.mxu0 0
      %1787 = vmatpush1.bf16.msra.mxu0 %v329
      %1788 = vmatprep.subr.bf16.mxu0 0
      %1789 = vmatpush1.bf16.msra.mxu0 %v328
      %1790 = vmatprep.subr.bf16.mxu0 0
      %1791 = vmatpush1.bf16.msra.mxu0 %v327
      %1792 = vmatprep.subr.bf16.mxu0 0
      %1793 = vmatpush2.bf16.msra.mxu0 0
      %1794 = vmatprep.subr.bf16.mxu0 0
      %1795 = vmatpush2.bf16.msra.mxu0 0
      %1796 = vmatprep.subr.bf16.mxu0 0
      %1797 = vmatpush2.bf16.msra.mxu0 0
      %1798 = vmatprep.subr.bf16.mxu0 0
      %1799 = vmatpush2.bf16.msra.mxu0 0
      %1800 = vmatprep.subr.bf16.mxu0 0
      %1801 = vmatpush2.bf16.msra.mxu0 0
      %1802 = vmatprep.subr.bf16.mxu0 0
      %1803 = vmatpush2.bf16.msra.mxu0 0
      %1804 = vmatprep.subr.bf16.mxu0 0
      %1805 = vmatpush2.bf16.msra.mxu0 0
      %1806 = vmatprep.subr.bf16.mxu0 0
      %1807 = vmatpush2.bf16.msra.mxu0 0
      %1808 = vmatprep.mubr.bf16.mxu0 0
      %1809 = vmatmul.mubr.bf16.gmra.mxu0 %v1735
      %v1810 = vpop.f32.mrf.mxu0
      %v1811 = vadd.f32 %v1771, %v1810
      %v1812 = vpop.f32.mrf.mxu0
      %v1813 = vpop.f32.mrf.mxu0
      %v1814 = vpop.f32.mrf.mxu0
      %1815 = vdwg.mxu0
      %v1816 = vadd.f32 %v1811, %v188
      %v1817 = vxor.u32 %v1816, 2147483648
      %v1818 = vmul.f32 %v1817, 1.442695
      %v1819 = vpow.pop %v1818
      %v1820 = vadd.f32 %v1819, 1.0
      %v1821 = vrcp.pop %v1820
      %v1822 = vmul.f32 1.0, %v1821
      %v1823 = vtanh.pop %v1816
      %v1824 = vmul.f32 %v1822, %v1401
      %1826 = vrot.lane.b32.xlu0 %v1823, 64
      %v1827 = vpop.permute.xlu0 %1826
      %v1829 = vmul.f32 %v1822, %v1827
      %1831 = vrot.lane.b32.xlu0 %v1829, 32
      %v1832 = vpop.permute.xlu0 %1831
      %v1834 = vadd.f32 %v1824, %v1832
      %v1835 = vtanh.pop %v1834
      %1837 = vrot.lane.b32.xlu0 %v1835, 64
      %v1838 = vpop.permute.xlu0 %1837
      %v1840 = vmul.f32 %v1822, %v1838
      %v1841 = vpack.c.bf16 %v1840, %v1840
      %1842 = vmatprep.subr.bf16.mxu0 0
      %1843 = vmatpush1.bf16.msra.mxu0 0
      %1844 = vmatprep.subr.bf16.mxu0 0
      %1845 = vmatpush1.bf16.msra.mxu0 0
      %1846 = vmatprep.subr.bf16.mxu0 0
      %1847 = vmatpush1.bf16.msra.mxu0 0
      %1848 = vmatprep.subr.bf16.mxu0 0
      %1849 = vmatpush1.bf16.msra.mxu0 0
      %1850 = vmatprep.subr.bf16.mxu0 0
      %1851 = vmatpush1.bf16.msra.mxu0 0
      %1852 = vmatprep.subr.bf16.mxu0 0
      %1853 = vmatpush1.bf16.msra.mxu0 0
      %1854 = vmatprep.subr.bf16.mxu0 0
      %1855 = vmatpush1.bf16.msra.mxu0 %v423
      %1856 = vmatprep.subr.bf16.mxu0 0
      %1857 = vmatpush1.bf16.msra.mxu0 %v422
      %1858 = vmatprep.subr.bf16.mxu0 0
      %1859 = vmatpush2.bf16.msra.mxu0 0
      %1860 = vmatprep.subr.bf16.mxu0 0
      %1861 = vmatpush2.bf16.msra.mxu0 0
      %1862 = vmatprep.subr.bf16.mxu0 0
      %1863 = vmatpush2.bf16.msra.mxu0 0
      %1864 = vmatprep.subr.bf16.mxu0 0
      %1865 = vmatpush2.bf16.msra.mxu0 0
      %1866 = vmatprep.subr.bf16.mxu0 0
      %1867 = vmatpush2.bf16.msra.mxu0 0
      %1868 = vmatprep.subr.bf16.mxu0 0
      %1869 = vmatpush2.bf16.msra.mxu0 0
      %1870 = vmatprep.subr.bf16.mxu0 0
      %1871 = vmatpush2.bf16.msra.mxu0 0
      %1872 = vmatprep.subr.bf16.mxu0 0
      %1873 = vmatpush2.bf16.msra.mxu0 0
      %1874 = vmatprep.mubr.bf16.mxu0 0
      %1875 = vmatmul.mubr.bf16.gmra.mxu0 %v1565
      %v1876 = vpop.f32.mrf.mxu0
      %v1877 = vadd.f32 0.0, %v1876
      %v1878 = vpop.f32.mrf.mxu0
      %v1879 = vpop.f32.mrf.mxu0
      %v1880 = vpop.f32.mrf.mxu0
      %1881 = vdwg.mxu0
      %1883 = vrot.lane.b32.xlu0 %v1841, 32
      %v1884 = vpop.permute.xlu0 %1883
      %v1886 = vsel %vm251, %v1884, 0
      %1888 = vmatprep.subr.bf16.mxu0 0
      %1889 = vmatpush1.bf16.msra.mxu0 0
      %1890 = vmatprep.subr.bf16.mxu0 0
      %1891 = vmatpush1.bf16.msra.mxu0 0
      %1892 = vmatprep.subr.bf16.mxu0 0
      %1893 = vmatpush1.bf16.msra.mxu0 0
      %1894 = vmatprep.subr.bf16.mxu0 0
      %1895 = vmatpush1.bf16.msra.mxu0 0
      %1896 = vmatprep.subr.bf16.mxu0 0
      %1897 = vmatpush1.bf16.msra.mxu0 0
      %1898 = vmatprep.subr.bf16.mxu0 0
      %1899 = vmatpush1.bf16.msra.mxu0 0
      %1900 = vmatprep.subr.bf16.mxu0 0
      %1901 = vmatpush1.bf16.msra.mxu0 %v481
      %1902 = vmatprep.subr.bf16.mxu0 0
      %1903 = vmatpush1.bf16.msra.mxu0 %v480
      %1904 = vmatprep.subr.bf16.mxu0 0
      %1905 = vmatpush2.bf16.msra.mxu0 0
      %1906 = vmatprep.subr.bf16.mxu0 0
      %1907 = vmatpush2.bf16.msra.mxu0 0
      %1908 = vmatprep.subr.bf16.mxu0 0
      %1909 = vmatpush2.bf16.msra.mxu0 0
      %1910 = vmatprep.subr.bf16.mxu0 0
      %1911 = vmatpush2.bf16.msra.mxu0 0
      %1912 = vmatprep.subr.bf16.mxu0 0
      %1913 = vmatpush2.bf16.msra.mxu0 0
      %1914 = vmatprep.subr.bf16.mxu0 0
      %1915 = vmatpush2.bf16.msra.mxu0 0
      %1916 = vmatprep.subr.bf16.mxu0 0
      %1917 = vmatpush2.bf16.msra.mxu0 0
      %1918 = vmatprep.subr.bf16.mxu0 0
      %1919 = vmatpush2.bf16.msra.mxu0 0
      %1920 = vmatprep.mubr.bf16.mxu0 0
      %1921 = vmatmul.mubr.bf16.gmra.mxu0 %v1886
      %v1922 = vpop.f32.mrf.mxu0
      %v1923 = vadd.f32 %v1877, %v1922
      %v1924 = vpop.f32.mrf.mxu0
      %v1925 = vpop.f32.mrf.mxu0
      %v1926 = vpop.f32.mrf.mxu0
      %1927 = vdwg.mxu0
      %v1928 = vadd.f32 %v1923, %v192
      %v1929 = vxor.u32 %v1928, 2147483648
      %v1930 = vmul.f32 %v1929, 1.442695
      %v1931 = vpow.pop %v1930
      %v1932 = vadd.f32 %v1931, 1.0
      %v1933 = vrcp.pop %v1932
      %v1934 = vmul.f32 1.0, %v1933
      %v1935 = vtanh.pop %v1928
      %v1936 = vmul.f32 %v1934, %v1513
      %1938 = vrot.lane.b32.xlu0 %v1935, 64
      %v1939 = vpop.permute.xlu0 %1938
      %v1941 = vmul.f32 %v1934, %v1939
      %1943 = vrot.lane.b32.xlu0 %v1941, 32
      %v1944 = vpop.permute.xlu0 %1943
      %v1946 = vadd.f32 %v1936, %v1944
      %v1947 = vtanh.pop %v1946
      %1949 = vrot.lane.b32.xlu0 %v1947, 64
      %v1950 = vpop.permute.xlu0 %1949
      %v1952 = vmul.f32 %v1934, %v1950
      %v1953 = vpack.c.bf16 %v1952, %v1952
      %1954 = vmatprep.subr.bf16.mxu0 0
      %1955 = vmatpush1.bf16.msra.mxu0 0
      %1956 = vmatprep.subr.bf16.mxu0 0
      %1957 = vmatpush1.bf16.msra.mxu0 0
      %1958 = vmatprep.subr.bf16.mxu0 0
      %1959 = vmatpush1.bf16.msra.mxu0 0
      %1960 = vmatprep.subr.bf16.mxu0 0
      %1961 = vmatpush1.bf16.msra.mxu0 0
      %1962 = vmatprep.subr.bf16.mxu0 0
      %1963 = vmatpush1.bf16.msra.mxu0 0
      %1964 = vmatprep.subr.bf16.mxu0 0
      %1965 = vmatpush1.bf16.msra.mxu0 0
      %1966 = vmatprep.subr.bf16.mxu0 0
      %1967 = vmatpush1.bf16.msra.mxu0 %v567
      %1968 = vmatprep.subr.bf16.mxu0 0
      %1969 = vmatpush1.bf16.msra.mxu0 %v566
      %1970 = vmatprep.subr.bf16.mxu0 0
      %1971 = vmatpush2.bf16.msra.mxu0 0
      %1972 = vmatprep.subr.bf16.mxu0 0
      %1973 = vmatpush2.bf16.msra.mxu0 0
      %1974 = vmatprep.subr.bf16.mxu0 0
      %1975 = vmatpush2.bf16.msra.mxu0 0
      %1976 = vmatprep.subr.bf16.mxu0 0
      %1977 = vmatpush2.bf16.msra.mxu0 0
      %1978 = vmatprep.subr.bf16.mxu0 0
      %1979 = vmatpush2.bf16.msra.mxu0 0
      %1980 = vmatprep.subr.bf16.mxu0 0
      %1981 = vmatpush2.bf16.msra.mxu0 0
      %1982 = vmatprep.subr.bf16.mxu0 0
      %1983 = vmatpush2.bf16.msra.mxu0 0
      %1984 = vmatprep.subr.bf16.mxu0 0
      %1985 = vmatpush2.bf16.msra.mxu0 0
      %1986 = vmatprep.mubr.bf16.mxu0 0
      %1987 = vmatmul.mubr.bf16.gmra.mxu0 %v1637
      %v1988 = vpop.f32.mrf.mxu0
      %v1989 = vadd.f32 0.0, %v1988
      %v1990 = vpop.f32.mrf.mxu0
      %v1991 = vpop.f32.mrf.mxu0
      %v1992 = vpop.f32.mrf.mxu0
      %1993 = vdwg.mxu0
      %1995 = vrot.lane.b32.xlu0 %v1953, 32
      %v1996 = vpop.permute.xlu0 %1995
      %v1998 = vsel %vm251, %v1996, 0
      %2000 = vmatprep.subr.bf16.mxu0 0
      %2001 = vmatpush1.bf16.msra.mxu0 0
      %2002 = vmatprep.subr.bf16.mxu0 0
      %2003 = vmatpush1.bf16.msra.mxu0 0
      %2004 = vmatprep.subr.bf16.mxu0 0
      %2005 = vmatpush1.bf16.msra.mxu0 0
      %2006 = vmatprep.subr.bf16.mxu0 0
      %2007 = vmatpush1.bf16.msra.mxu0 0
      %2008 = vmatprep.subr.bf16.mxu0 0
      %2009 = vmatpush1.bf16.msra.mxu0 0
      %2010 = vmatprep.subr.bf16.mxu0 0
      %2011 = vmatpush1.bf16.msra.mxu0 0
      %2012 = vmatprep.subr.bf16.mxu0 0
      %2013 = vmatpush1.bf16.msra.mxu0 %v625
      %2014 = vmatprep.subr.bf16.mxu0 0
      %2015 = vmatpush1.bf16.msra.mxu0 %v624
      %2016 = vmatprep.subr.bf16.mxu0 0
      %2017 = vmatpush2.bf16.msra.mxu0 0
      %2018 = vmatprep.subr.bf16.mxu0 0
      %2019 = vmatpush2.bf16.msra.mxu0 0
      %2020 = vmatprep.subr.bf16.mxu0 0
      %2021 = vmatpush2.bf16.msra.mxu0 0
      %2022 = vmatprep.subr.bf16.mxu0 0
      %2023 = vmatpush2.bf16.msra.mxu0 0
      %2024 = vmatprep.subr.bf16.mxu0 0
      %2025 = vmatpush2.bf16.msra.mxu0 0
      %2026 = vmatprep.subr.bf16.mxu0 0
      %2027 = vmatpush2.bf16.msra.mxu0 0
      %2028 = vmatprep.subr.bf16.mxu0 0
      %2029 = vmatpush2.bf16.msra.mxu0 0
      %2030 = vmatprep.subr.bf16.mxu0 0
      %2031 = vmatpush2.bf16.msra.mxu0 0
      %2032 = vmatprep.mubr.bf16.mxu0 0
      %2033 = vmatmul.mubr.bf16.gmra.mxu0 %v1998
      %v2034 = vpop.f32.mrf.mxu0
      %v2035 = vadd.f32 %v1989, %v2034
      %v2036 = vpop.f32.mrf.mxu0
      %v2037 = vpop.f32.mrf.mxu0
      %v2038 = vpop.f32.mrf.mxu0
      %2039 = vdwg.mxu0
      %v2040 = vadd.f32 %v2035, %v196
      %v2041 = vxor.u32 %v2040, 2147483648
      %v2042 = vmul.f32 %v2041, 1.442695
      %v2043 = vpow.pop %v2042
      %v2044 = vadd.f32 %v2043, 1.0
      %v2045 = vrcp.pop %v2044
      %v2046 = vmul.f32 1.0, %v2045
      %v2047 = vtanh.pop %v2040
      %v2048 = vmul.f32 %v2046, %v1625
      %2050 = vrot.lane.b32.xlu0 %v2047, 64
      %v2051 = vpop.permute.xlu0 %2050
      %v2053 = vmul.f32 %v2046, %v2051
      %2055 = vrot.lane.b32.xlu0 %v2053, 32
      %v2056 = vpop.permute.xlu0 %2055
      %v2058 = vadd.f32 %v2048, %v2056
      %v2059 = vtanh.pop %v2058
      %2061 = vrot.lane.b32.xlu0 %v2059, 64
      %v2062 = vpop.permute.xlu0 %2061
      %v2064 = vmul.f32 %v2046, %v2062
      %v2065 = vpack.c.bf16 %v2064, %v2064
      %2067 = vrot.lane.b32.xlu0 %v2065, 32
      %v2068 = vpop.permute.xlu0 %2067
      %v2070 = vsel %vm251, %v2068, 0
      %2072 = vmatprep.subr.bf16.mxu0 0
      %2073 = vmatpush1.bf16.msra.mxu0 0
      %2074 = vmatprep.subr.bf16.mxu0 0
      %2075 = vmatpush1.bf16.msra.mxu0 0
      %2076 = vmatprep.subr.bf16.mxu0 0
      %2077 = vmatpush1.bf16.msra.mxu0 0
      %2078 = vmatprep.subr.bf16.mxu0 0
      %2079 = vmatpush1.bf16.msra.mxu0 0
      %2080 = vmatprep.subr.bf16.mxu0 0
      %2081 = vmatpush1.bf16.msra.mxu0 0
      %2082 = vmatprep.subr.bf16.mxu0 0
      %2083 = vmatpush1.bf16.msra.mxu0 0
      %2084 = vmatprep.subr.bf16.mxu0 0
      %2085 = vmatpush1.bf16.msra.mxu0 %v713
      %2086 = vmatprep.subr.bf16.mxu0 0
      %2087 = vmatpush1.bf16.msra.mxu0 %v712
      %2088 = vmatprep.subr.bf16.mxu0 0
      %2089 = vmatpush2.bf16.msra.mxu0 0
      %2090 = vmatprep.subr.bf16.mxu0 0
      %2091 = vmatpush2.bf16.msra.mxu0 0
      %2092 = vmatprep.subr.bf16.mxu0 0
      %2093 = vmatpush2.bf16.msra.mxu0 0
      %2094 = vmatprep.subr.bf16.mxu0 0
      %2095 = vmatpush2.bf16.msra.mxu0 0
      %2096 = vmatprep.subr.bf16.mxu0 0
      %2097 = vmatpush2.bf16.msra.mxu0 0
      %2098 = vmatprep.subr.bf16.mxu0 0
      %2099 = vmatpush2.bf16.msra.mxu0 0
      %2100 = vmatprep.subr.bf16.mxu0 0
      %2101 = vmatpush2.bf16.msra.mxu0 0
      %2102 = vmatprep.subr.bf16.mxu0 0
      %2103 = vmatpush2.bf16.msra.mxu0 0
      %2104 = vmatprep.mubr.bf16.mxu0 0
      %2105 = vmatmul.mubr.bf16.gmra.mxu0 %v2070
      %v2106 = vpop.f32.mrf.mxu0
      %v2107 = vadd.f32 %v202, %v2106
      %v2108 = vpop.f32.mrf.mxu0
      %v2109 = vpop.f32.mrf.mxu0
      %v2110 = vpop.f32.mrf.mxu0
      %2111 = vdwg.mxu0
      %v2112 = vmul.f32 %v2107, %v2107
      %v2113 = vpack.c.bf16 %v2112, %v2112
      %2114 = vmatprep.subr.bf16.mxu0 0
      %2115 = vmatpush1.bf16.msra.mxu0 %v800
      %2116 = vmatprep.subr.bf16.mxu0 0
      %2117 = vmatpush1.bf16.msra.mxu0 %v799
      %2118 = vmatprep.subr.bf16.mxu0 0
      %2119 = vmatpush1.bf16.msra.mxu0 %v798
      %2120 = vmatprep.subr.bf16.mxu0 0
      %2121 = vmatpush1.bf16.msra.mxu0 %v797
      %2122 = vmatprep.subr.bf16.mxu0 0
      %2123 = vmatpush1.bf16.msra.mxu0 %v796
      %2124 = vmatprep.subr.bf16.mxu0 0
      %2125 = vmatpush1.bf16.msra.mxu0 %v795
      %2126 = vmatprep.subr.bf16.mxu0 0
      %2127 = vmatpush1.bf16.msra.mxu0 %v794
      %2128 = vmatprep.subr.bf16.mxu0 0
      %2129 = vmatpush1.bf16.msra.mxu0 %v793
      %2130 = vmatprep.subr.bf16.mxu0 0
      %2131 = vmatpush2.bf16.msra.mxu0 0
      %2132 = vmatprep.subr.bf16.mxu0 0
      %2133 = vmatpush2.bf16.msra.mxu0 0
      %2134 = vmatprep.subr.bf16.mxu0 0
      %2135 = vmatpush2.bf16.msra.mxu0 0
      %2136 = vmatprep.subr.bf16.mxu0 0
      %2137 = vmatpush2.bf16.msra.mxu0 0
      %2138 = vmatprep.subr.bf16.mxu0 0
      %2139 = vmatpush2.bf16.msra.mxu0 0
      %2140 = vmatprep.subr.bf16.mxu0 0
      %2141 = vmatpush2.bf16.msra.mxu0 0
      %2142 = vmatprep.subr.bf16.mxu0 0
      %2143 = vmatpush2.bf16.msra.mxu0 0
      %2144 = vmatprep.subr.bf16.mxu0 0
      %2145 = vmatpush2.bf16.msra.mxu0 0
      %2146 = vmatprep.mubr.bf16.mxu0 0
      %2147 = vmatmul.mubr.bf16.gmra.mxu0 %v2113
      %v2148 = vpop.f32.mrf.mxu0
      %v2149 = vadd.f32 0.0, %v2148
      %v2150 = vpop.f32.mrf.mxu0
      %v2151 = vpop.f32.mrf.mxu0
      %v2152 = vpop.f32.mrf.mxu0
      %2153 = vdwg.mxu0
      %v2154 = vrsqrt.pop %v2149
      %v2155 = vmul.f32 %v2149, %v2154
      %vm2156 = vcmp.eq.f32.partialorder %v2149, inf
      %v2157 = vsel %vm2156, %v2149, %v2155
      %vm2158 = vcmp.eq.f32.partialorder %v2149, 0.0
      %v2159 = vand.u32 %v2149, 2147483648
      %v2160 = vsel %vm2158, %v2159, %v2157
      %v2161 = vadd.f32 %v2160, 1e-08
      %v2162 = vrcp.pop %v2161
      %v2163 = vmul.f32 %v2107, %v2162
      %v2164 = vsel %vm208, %v2107, %v2163
      %s2165 = sadd.s32 %s234, 3
      %s2166 = smul.u32 %s2165, 8
      %s2167 = scalar_lea.vmem [#allocation15], %s2166
      %2168 = vst [vmem:[%s2167] sm:$0xff] %v2164
      %v2169 = vpack.c.bf16 %v2164, %v2164
      %2170 = vmatprep.subr.bf16.mxu0 0
      %2171 = vmatpush1.bf16.msra.mxu0 0
      %2172 = vmatprep.subr.bf16.mxu0 0
      %2173 = vmatpush1.bf16.msra.mxu0 0
      %2174 = vmatprep.subr.bf16.mxu0 0
      %2175 = vmatpush1.bf16.msra.mxu0 0
      %2176 = vmatprep.subr.bf16.mxu0 0
      %2177 = vmatpush1.bf16.msra.mxu0 0
      %2178 = vmatprep.subr.bf16.mxu0 0
      %2179 = vmatpush1.bf16.msra.mxu0 0
      %2180 = vmatprep.subr.bf16.mxu0 0
      %2181 = vmatpush1.bf16.msra.mxu0 0
      %2182 = vmatprep.subr.bf16.mxu0 0
      %2183 = vmatpush1.bf16.msra.mxu0 %v248
      %2184 = vmatprep.subr.bf16.mxu0 0
      %2185 = vmatpush1.bf16.msra.mxu0 %v247
      %2186 = vmatprep.subr.bf16.mxu0 0
      %2187 = vmatpush2.bf16.msra.mxu0 0
      %2188 = vmatprep.subr.bf16.mxu0 0
      %2189 = vmatpush2.bf16.msra.mxu0 0
      %2190 = vmatprep.subr.bf16.mxu0 0
      %2191 = vmatpush2.bf16.msra.mxu0 0
      %2192 = vmatprep.subr.bf16.mxu0 0
      %2193 = vmatpush2.bf16.msra.mxu0 0
      %2194 = vmatprep.subr.bf16.mxu0 0
      %2195 = vmatpush2.bf16.msra.mxu0 0
      %2196 = vmatprep.subr.bf16.mxu0 0
      %2197 = vmatpush2.bf16.msra.mxu0 0
      %2198 = vmatprep.subr.bf16.mxu0 0
      %2199 = vmatpush2.bf16.msra.mxu0 0
      %2200 = vmatprep.subr.bf16.mxu0 0
      %2201 = vmatpush2.bf16.msra.mxu0 0
      %2202 = vmatprep.mubr.bf16.mxu0 0
      %2203 = vmatmul.mubr.bf16.gmra.mxu0 %v1886
      %v2204 = vpop.f32.mrf.mxu0
      %v2205 = vadd.f32 0.0, %v2204
      %v2206 = vpop.f32.mrf.mxu0
      %v2207 = vpop.f32.mrf.mxu0
      %v2208 = vpop.f32.mrf.mxu0
      %2209 = vdwg.mxu0
      %2210 = vmatprep.subr.bf16.mxu0 0
      %2211 = vmatpush1.bf16.msra.mxu0 %v334
      %2212 = vmatprep.subr.bf16.mxu0 0
      %2213 = vmatpush1.bf16.msra.mxu0 %v333
      %2214 = vmatprep.subr.bf16.mxu0 0
      %2215 = vmatpush1.bf16.msra.mxu0 %v332
      %2216 = vmatprep.subr.bf16.mxu0 0
      %2217 = vmatpush1.bf16.msra.mxu0 %v331
      %2218 = vmatprep.subr.bf16.mxu0 0
      %2219 = vmatpush1.bf16.msra.mxu0 %v330
      %2220 = vmatprep.subr.bf16.mxu0 0
      %2221 = vmatpush1.bf16.msra.mxu0 %v329
      %2222 = vmatprep.subr.bf16.mxu0 0
      %2223 = vmatpush1.bf16.msra.mxu0 %v328
      %2224 = vmatprep.subr.bf16.mxu0 0
      %2225 = vmatpush1.bf16.msra.mxu0 %v327
      %2226 = vmatprep.subr.bf16.mxu0 0
      %2227 = vmatpush2.bf16.msra.mxu0 0
      %2228 = vmatprep.subr.bf16.mxu0 0
      %2229 = vmatpush2.bf16.msra.mxu0 0
      %2230 = vmatprep.subr.bf16.mxu0 0
      %2231 = vmatpush2.bf16.msra.mxu0 0
      %2232 = vmatprep.subr.bf16.mxu0 0
      %2233 = vmatpush2.bf16.msra.mxu0 0
      %2234 = vmatprep.subr.bf16.mxu0 0
      %2235 = vmatpush2.bf16.msra.mxu0 0
      %2236 = vmatprep.subr.bf16.mxu0 0
      %2237 = vmatpush2.bf16.msra.mxu0 0
      %2238 = vmatprep.subr.bf16.mxu0 0
      %2239 = vmatpush2.bf16.msra.mxu0 0
      %2240 = vmatprep.subr.bf16.mxu0 0
      %2241 = vmatpush2.bf16.msra.mxu0 0
      %2242 = vmatprep.mubr.bf16.mxu0 0
      %2243 = vmatmul.mubr.bf16.gmra.mxu0 %v2169
      %v2244 = vpop.f32.mrf.mxu0
      %v2245 = vadd.f32 %v2205, %v2244
      %v2246 = vpop.f32.mrf.mxu0
      %v2247 = vpop.f32.mrf.mxu0
      %v2248 = vpop.f32.mrf.mxu0
      %2249 = vdwg.mxu0
      %v2250 = vadd.f32 %v2245, %v188
      %v2251 = vxor.u32 %v2250, 2147483648
      %v2252 = vmul.f32 %v2251, 1.442695
      %v2253 = vpow.pop %v2252
      %v2254 = vadd.f32 %v2253, 1.0
      %v2255 = vrcp.pop %v2254
      %v2256 = vmul.f32 1.0, %v2255
      %v2257 = vtanh.pop %v2250
      %v2258 = vmul.f32 %v2256, %v1834
      %2260 = vrot.lane.b32.xlu0 %v2257, 64
      %v2261 = vpop.permute.xlu0 %2260
      %v2263 = vmul.f32 %v2256, %v2261
      %2265 = vrot.lane.b32.xlu0 %v2263, 32
      %v2266 = vpop.permute.xlu0 %2265
      %v2268 = vadd.f32 %v2258, %v2266
      %v2269 = vtanh.pop %v2268
      %2271 = vrot.lane.b32.xlu0 %v2269, 64
      %v2272 = vpop.permute.xlu0 %2271
      %v2274 = vmul.f32 %v2256, %v2272
      %v2275 = vpack.c.bf16 %v2274, %v2274
      %2276 = vmatprep.subr.bf16.mxu0 0
      %2277 = vmatpush1.bf16.msra.mxu0 0
      %2278 = vmatprep.subr.bf16.mxu0 0
      %2279 = vmatpush1.bf16.msra.mxu0 0
      %2280 = vmatprep.subr.bf16.mxu0 0
      %2281 = vmatpush1.bf16.msra.mxu0 0
      %2282 = vmatprep.subr.bf16.mxu0 0
      %2283 = vmatpush1.bf16.msra.mxu0 0
      %2284 = vmatprep.subr.bf16.mxu0 0
      %2285 = vmatpush1.bf16.msra.mxu0 0
      %2286 = vmatprep.subr.bf16.mxu0 0
      %2287 = vmatpush1.bf16.msra.mxu0 0
      %2288 = vmatprep.subr.bf16.mxu0 0
      %2289 = vmatpush1.bf16.msra.mxu0 %v423
      %2290 = vmatprep.subr.bf16.mxu0 0
      %2291 = vmatpush1.bf16.msra.mxu0 %v422
      %2292 = vmatprep.subr.bf16.mxu0 0
      %2293 = vmatpush2.bf16.msra.mxu0 0
      %2294 = vmatprep.subr.bf16.mxu0 0
      %2295 = vmatpush2.bf16.msra.mxu0 0
      %2296 = vmatprep.subr.bf16.mxu0 0
      %2297 = vmatpush2.bf16.msra.mxu0 0
      %2298 = vmatprep.subr.bf16.mxu0 0
      %2299 = vmatpush2.bf16.msra.mxu0 0
      %2300 = vmatprep.subr.bf16.mxu0 0
      %2301 = vmatpush2.bf16.msra.mxu0 0
      %2302 = vmatprep.subr.bf16.mxu0 0
      %2303 = vmatpush2.bf16.msra.mxu0 0
      %2304 = vmatprep.subr.bf16.mxu0 0
      %2305 = vmatpush2.bf16.msra.mxu0 0
      %2306 = vmatprep.subr.bf16.mxu0 0
      %2307 = vmatpush2.bf16.msra.mxu0 0
      %2308 = vmatprep.mubr.bf16.mxu0 0
      %2309 = vmatmul.mubr.bf16.gmra.mxu0 %v1998
      %v2310 = vpop.f32.mrf.mxu0
      %v2311 = vadd.f32 0.0, %v2310
      %v2312 = vpop.f32.mrf.mxu0
      %v2313 = vpop.f32.mrf.mxu0
      %v2314 = vpop.f32.mrf.mxu0
      %2315 = vdwg.mxu0
      %2317 = vrot.lane.b32.xlu0 %v2275, 32
      %v2318 = vpop.permute.xlu0 %2317
      %v2320 = vsel %vm251, %v2318, 0
      %2322 = vmatprep.subr.bf16.mxu0 0
      %2323 = vmatpush1.bf16.msra.mxu0 0
      %2324 = vmatprep.subr.bf16.mxu0 0
      %2325 = vmatpush1.bf16.msra.mxu0 0
      %2326 = vmatprep.subr.bf16.mxu0 0
      %2327 = vmatpush1.bf16.msra.mxu0 0
      %2328 = vmatprep.subr.bf16.mxu0 0
      %2329 = vmatpush1.bf16.msra.mxu0 0
      %2330 = vmatprep.subr.bf16.mxu0 0
      %2331 = vmatpush1.bf16.msra.mxu0 0
      %2332 = vmatprep.subr.bf16.mxu0 0
      %2333 = vmatpush1.bf16.msra.mxu0 0
      %2334 = vmatprep.subr.bf16.mxu0 0
      %2335 = vmatpush1.bf16.msra.mxu0 %v481
      %2336 = vmatprep.subr.bf16.mxu0 0
      %2337 = vmatpush1.bf16.msra.mxu0 %v480
      %2338 = vmatprep.subr.bf16.mxu0 0
      %2339 = vmatpush2.bf16.msra.mxu0 0
      %2340 = vmatprep.subr.bf16.mxu0 0
      %2341 = vmatpush2.bf16.msra.mxu0 0
      %2342 = vmatprep.subr.bf16.mxu0 0
      %2343 = vmatpush2.bf16.msra.mxu0 0
      %2344 = vmatprep.subr.bf16.mxu0 0
      %2345 = vmatpush2.bf16.msra.mxu0 0
      %2346 = vmatprep.subr.bf16.mxu0 0
      %2347 = vmatpush2.bf16.msra.mxu0 0
      %2348 = vmatprep.subr.bf16.mxu0 0
      %2349 = vmatpush2.bf16.msra.mxu0 0
      %2350 = vmatprep.subr.bf16.mxu0 0
      %2351 = vmatpush2.bf16.msra.mxu0 0
      %2352 = vmatprep.subr.bf16.mxu0 0
      %2353 = vmatpush2.bf16.msra.mxu0 0
      %2354 = vmatprep.mubr.bf16.mxu0 0
      %2355 = vmatmul.mubr.bf16.gmra.mxu0 %v2320
      %v2356 = vpop.f32.mrf.mxu0
      %v2357 = vadd.f32 %v2311, %v2356
      %v2358 = vpop.f32.mrf.mxu0
      %v2359 = vpop.f32.mrf.mxu0
      %v2360 = vpop.f32.mrf.mxu0
      %2361 = vdwg.mxu0
      %v2362 = vadd.f32 %v2357, %v192
      %v2363 = vxor.u32 %v2362, 2147483648
      %v2364 = vmul.f32 %v2363, 1.442695
      %v2365 = vpow.pop %v2364
      %v2366 = vadd.f32 %v2365, 1.0
      %v2367 = vrcp.pop %v2366
      %v2368 = vmul.f32 1.0, %v2367
      %v2369 = vtanh.pop %v2362
      %v2370 = vmul.f32 %v2368, %v1946
      %2372 = vrot.lane.b32.xlu0 %v2369, 64
      %v2373 = vpop.permute.xlu0 %2372
      %v2375 = vmul.f32 %v2368, %v2373
      %2377 = vrot.lane.b32.xlu0 %v2375, 32
      %v2378 = vpop.permute.xlu0 %2377
      %v2380 = vadd.f32 %v2370, %v2378
      %v2381 = vtanh.pop %v2380
      %2383 = vrot.lane.b32.xlu0 %v2381, 64
      %v2384 = vpop.permute.xlu0 %2383
      %v2386 = vmul.f32 %v2368, %v2384
      %v2387 = vpack.c.bf16 %v2386, %v2386
      %2388 = vmatprep.subr.bf16.mxu0 0
      %2389 = vmatpush1.bf16.msra.mxu0 0
      %2390 = vmatprep.subr.bf16.mxu0 0
      %2391 = vmatpush1.bf16.msra.mxu0 0
      %2392 = vmatprep.subr.bf16.mxu0 0
      %2393 = vmatpush1.bf16.msra.mxu0 0
      %2394 = vmatprep.subr.bf16.mxu0 0
      %2395 = vmatpush1.bf16.msra.mxu0 0
      %2396 = vmatprep.subr.bf16.mxu0 0
      %2397 = vmatpush1.bf16.msra.mxu0 0
      %2398 = vmatprep.subr.bf16.mxu0 0
      %2399 = vmatpush1.bf16.msra.mxu0 0
      %2400 = vmatprep.subr.bf16.mxu0 0
      %2401 = vmatpush1.bf16.msra.mxu0 %v567
      %2402 = vmatprep.subr.bf16.mxu0 0
      %2403 = vmatpush1.bf16.msra.mxu0 %v566
      %2404 = vmatprep.subr.bf16.mxu0 0
      %2405 = vmatpush2.bf16.msra.mxu0 0
      %2406 = vmatprep.subr.bf16.mxu0 0
      %2407 = vmatpush2.bf16.msra.mxu0 0
      %2408 = vmatprep.subr.bf16.mxu0 0
      %2409 = vmatpush2.bf16.msra.mxu0 0
      %2410 = vmatprep.subr.bf16.mxu0 0
      %2411 = vmatpush2.bf16.msra.mxu0 0
      %2412 = vmatprep.subr.bf16.mxu0 0
      %2413 = vmatpush2.bf16.msra.mxu0 0
      %2414 = vmatprep.subr.bf16.mxu0 0
      %2415 = vmatpush2.bf16.msra.mxu0 0
      %2416 = vmatprep.subr.bf16.mxu0 0
      %2417 = vmatpush2.bf16.msra.mxu0 0
      %2418 = vmatprep.subr.bf16.mxu0 0
      %2419 = vmatpush2.bf16.msra.mxu0 0
      %2420 = vmatprep.mubr.bf16.mxu0 0
      %2421 = vmatmul.mubr.bf16.gmra.mxu0 %v2070
      %v2422 = vpop.f32.mrf.mxu0
      %v2423 = vadd.f32 0.0, %v2422
      %v2424 = vpop.f32.mrf.mxu0
      %v2425 = vpop.f32.mrf.mxu0
      %v2426 = vpop.f32.mrf.mxu0
      %2427 = vdwg.mxu0
      %2429 = vrot.lane.b32.xlu0 %v2387, 32
      %v2430 = vpop.permute.xlu0 %2429
      %v2432 = vsel %vm251, %v2430, 0
      %2434 = vmatprep.subr.bf16.mxu0 0
      %2435 = vmatpush1.bf16.msra.mxu0 0
      %2436 = vmatprep.subr.bf16.mxu0 0
      %2437 = vmatpush1.bf16.msra.mxu0 0
      %2438 = vmatprep.subr.bf16.mxu0 0
      %2439 = vmatpush1.bf16.msra.mxu0 0
      %2440 = vmatprep.subr.bf16.mxu0 0
      %2441 = vmatpush1.bf16.msra.mxu0 0
      %2442 = vmatprep.subr.bf16.mxu0 0
      %2443 = vmatpush1.bf16.msra.mxu0 0
      %2444 = vmatprep.subr.bf16.mxu0 0
      %2445 = vmatpush1.bf16.msra.mxu0 0
      %2446 = vmatprep.subr.bf16.mxu0 0
      %2447 = vmatpush1.bf16.msra.mxu0 %v625
      %2448 = vmatprep.subr.bf16.mxu0 0
      %2449 = vmatpush1.bf16.msra.mxu0 %v624
      %2450 = vmatprep.subr.bf16.mxu0 0
      %2451 = vmatpush2.bf16.msra.mxu0 0
      %2452 = vmatprep.subr.bf16.mxu0 0
      %2453 = vmatpush2.bf16.msra.mxu0 0
      %2454 = vmatprep.subr.bf16.mxu0 0
      %2455 = vmatpush2.bf16.msra.mxu0 0
      %2456 = vmatprep.subr.bf16.mxu0 0
      %2457 = vmatpush2.bf16.msra.mxu0 0
      %2458 = vmatprep.subr.bf16.mxu0 0
      %2459 = vmatpush2.bf16.msra.mxu0 0
      %2460 = vmatprep.subr.bf16.mxu0 0
      %2461 = vmatpush2.bf16.msra.mxu0 0
      %2462 = vmatprep.subr.bf16.mxu0 0
      %2463 = vmatpush2.bf16.msra.mxu0 0
      %2464 = vmatprep.subr.bf16.mxu0 0
      %2465 = vmatpush2.bf16.msra.mxu0 0
      %2466 = vmatprep.mubr.bf16.mxu0 0
      %2467 = vmatmul.mubr.bf16.gmra.mxu0 %v2432
      %v2468 = vpop.f32.mrf.mxu0
      %v2469 = vadd.f32 %v2423, %v2468
      %v2470 = vpop.f32.mrf.mxu0
      %v2471 = vpop.f32.mrf.mxu0
      %v2472 = vpop.f32.mrf.mxu0
      %2473 = vdwg.mxu0
      %v2474 = vadd.f32 %v2469, %v196
      %v2475 = vxor.u32 %v2474, 2147483648
      %v2476 = vmul.f32 %v2475, 1.442695
      %v2477 = vpow.pop %v2476
      %v2478 = vadd.f32 %v2477, 1.0
      %v2479 = vrcp.pop %v2478
      %v2480 = vmul.f32 1.0, %v2479
      %v2481 = vtanh.pop %v2474
      %v2482 = vmul.f32 %v2480, %v2058
      %2484 = vrot.lane.b32.xlu0 %v2481, 64
      %v2485 = vpop.permute.xlu0 %2484
      %v2487 = vmul.f32 %v2480, %v2485
      %2489 = vrot.lane.b32.xlu0 %v2487, 32
      %v2490 = vpop.permute.xlu0 %2489
      %v2492 = vadd.f32 %v2482, %v2490
      %v2493 = vtanh.pop %v2492
      %2495 = vrot.lane.b32.xlu0 %v2493, 64
      %v2496 = vpop.permute.xlu0 %2495
      %v2498 = vmul.f32 %v2480, %v2496
      %v2499 = vpack.c.bf16 %v2498, %v2498
      %2501 = vrot.lane.b32.xlu0 %v2499, 32
      %v2502 = vpop.permute.xlu0 %2501
      %v2504 = vsel %vm251, %v2502, 0
      %2506 = vmatprep.subr.bf16.mxu0 0
      %2507 = vmatpush1.bf16.msra.mxu0 0
      %2508 = vmatprep.subr.bf16.mxu0 0
      %2509 = vmatpush1.bf16.msra.mxu0 0
      %2510 = vmatprep.subr.bf16.mxu0 0
      %2511 = vmatpush1.bf16.msra.mxu0 0
      %2512 = vmatprep.subr.bf16.mxu0 0
      %2513 = vmatpush1.bf16.msra.mxu0 0
      %2514 = vmatprep.subr.bf16.mxu0 0
      %2515 = vmatpush1.bf16.msra.mxu0 0
      %2516 = vmatprep.subr.bf16.mxu0 0
      %2517 = vmatpush1.bf16.msra.mxu0 0
      %2518 = vmatprep.subr.bf16.mxu0 0
      %2519 = vmatpush1.bf16.msra.mxu0 %v713
      %2520 = vmatprep.subr.bf16.mxu0 0
      %2521 = vmatpush1.bf16.msra.mxu0 %v712
      %2522 = vmatprep.subr.bf16.mxu0 0
      %2523 = vmatpush2.bf16.msra.mxu0 0
      %2524 = vmatprep.subr.bf16.mxu0 0
      %2525 = vmatpush2.bf16.msra.mxu0 0
      %2526 = vmatprep.subr.bf16.mxu0 0
      %2527 = vmatpush2.bf16.msra.mxu0 0
      %2528 = vmatprep.subr.bf16.mxu0 0
      %2529 = vmatpush2.bf16.msra.mxu0 0
      %2530 = vmatprep.subr.bf16.mxu0 0
      %2531 = vmatpush2.bf16.msra.mxu0 0
      %2532 = vmatprep.subr.bf16.mxu0 0
      %2533 = vmatpush2.bf16.msra.mxu0 0
      %2534 = vmatprep.subr.bf16.mxu0 0
      %2535 = vmatpush2.bf16.msra.mxu0 0
      %2536 = vmatprep.subr.bf16.mxu0 0
      %2537 = vmatpush2.bf16.msra.mxu0 0
      %2538 = vmatprep.mubr.bf16.mxu0 0
      %2539 = vmatmul.mubr.bf16.gmra.mxu0 %v2504
      %v2540 = vpop.f32.mrf.mxu0
      %v2541 = vadd.f32 %v202, %v2540
      %v2542 = vpop.f32.mrf.mxu0
      %v2543 = vpop.f32.mrf.mxu0
      %v2544 = vpop.f32.mrf.mxu0
      %2545 = vdwg.mxu0
      %v2546 = vmul.f32 %v2541, %v2541
      %v2547 = vpack.c.bf16 %v2546, %v2546
      %2548 = vmatprep.subr.bf16.mxu0 0
      %2549 = vmatpush1.bf16.msra.mxu0 %v800
      %2550 = vmatprep.subr.bf16.mxu0 0
      %2551 = vmatpush1.bf16.msra.mxu0 %v799
      %2552 = vmatprep.subr.bf16.mxu0 0
      %2553 = vmatpush1.bf16.msra.mxu0 %v798
      %2554 = vmatprep.subr.bf16.mxu0 0
      %2555 = vmatpush1.bf16.msra.mxu0 %v797
      %2556 = vmatprep.subr.bf16.mxu0 0
      %2557 = vmatpush1.bf16.msra.mxu0 %v796
      %2558 = vmatprep.subr.bf16.mxu0 0
      %2559 = vmatpush1.bf16.msra.mxu0 %v795
      %2560 = vmatprep.subr.bf16.mxu0 0
      %2561 = vmatpush1.bf16.msra.mxu0 %v794
      %2562 = vmatprep.subr.bf16.mxu0 0
      %2563 = vmatpush1.bf16.msra.mxu0 %v793
      %2564 = vmatprep.subr.bf16.mxu0 0
      %2565 = vmatpush2.bf16.msra.mxu0 0
      %2566 = vmatprep.subr.bf16.mxu0 0
      %2567 = vmatpush2.bf16.msra.mxu0 0
      %2568 = vmatprep.subr.bf16.mxu0 0
      %2569 = vmatpush2.bf16.msra.mxu0 0
      %2570 = vmatprep.subr.bf16.mxu0 0
      %2571 = vmatpush2.bf16.msra.mxu0 0
      %2572 = vmatprep.subr.bf16.mxu0 0
      %2573 = vmatpush2.bf16.msra.mxu0 0
      %2574 = vmatprep.subr.bf16.mxu0 0
      %2575 = vmatpush2.bf16.msra.mxu0 0
      %2576 = vmatprep.subr.bf16.mxu0 0
      %2577 = vmatpush2.bf16.msra.mxu0 0
      %2578 = vmatprep.subr.bf16.mxu0 0
      %2579 = vmatpush2.bf16.msra.mxu0 0
      %2580 = vmatprep.mubr.bf16.mxu0 0
      %2581 = vmatmul.mubr.bf16.gmra.mxu0 %v2547
      %v2582 = vpop.f32.mrf.mxu0
      %v2583 = vadd.f32 0.0, %v2582
      %v2584 = vpop.f32.mrf.mxu0
      %v2585 = vpop.f32.mrf.mxu0
      %v2586 = vpop.f32.mrf.mxu0
      %2587 = vdwg.mxu0
      %v2588 = vrsqrt.pop %v2583
      %v2589 = vmul.f32 %v2583, %v2588
      %vm2590 = vcmp.eq.f32.partialorder %v2583, inf
      %v2591 = vsel %vm2590, %v2583, %v2589
      %vm2592 = vcmp.eq.f32.partialorder %v2583, 0.0
      %v2593 = vand.u32 %v2583, 2147483648
      %v2594 = vsel %vm2592, %v2593, %v2591
      %v2595 = vadd.f32 %v2594, 1e-08
      %v2596 = vrcp.pop %v2595
      %v2597 = vmul.f32 %v2541, %v2596
      %v2598 = vsel %vm208, %v2541, %v2597
      %s2599 = sadd.s32 %s234, 4
      %s2600 = smul.u32 %s2599, 8
      %s2601 = scalar_lea.vmem [#allocation15], %s2600
      %2602 = vst [vmem:[%s2601] sm:$0xff] %v2598
      %2604 = vrot.lane.b32.xlu0 %v2274, 32
      %v2605 = vpop.permute.xlu0 %2604
      %2608 = vrot.lane.b32.xlu0 %v2268, 96
      %v2609 = vpop.permute.xlu0 %2608
      %2612 = vrot.lane.b32.xlu0 %v2386, 32
      %v2613 = vpop.permute.xlu0 %2612
      %2616 = vrot.lane.b32.xlu0 %v2380, 96
      %v2617 = vpop.permute.xlu0 %2616
      %2620 = vrot.lane.b32.xlu0 %v2498, 32
      %v2621 = vpop.permute.xlu0 %2620
      %2624 = vrot.lane.b32.xlu0 %v2492, 96
      %v2625 = vpop.permute.xlu0 %2624
    $region66: #{tpu_custom_call.1} parent=1 // loop_footer
      %s226 = sadd.s32 1, %s222
    $region67: #{tpu_custom_call.1} parent=1 // loop_footer_branch
      %221 = sbr.rel target = $region63
    $region68: #{tpu_custom_call.1} parent=1 // loop_exit
      _
    %vm2627 = vcmask 261120
    %2628 = vst.msk [vmem:[#allocation2] sm:$0xff] %vm2627, %v227
    %2629 = vst.msk [vmem:[%s210] sm:$0xff] %vm2627, %v228
    %2630 = vst.msk [vmem:[%s212] sm:$0xff] %vm2627, %v229
    %2631 = vst.msk [vmem:[%s214] sm:$0xff] %vm2627, %v230
    %2632 = vst.msk [vmem:[%s216] sm:$0xff] %vm2627, %v231
    %2633 = vst.msk [vmem:[%s218] sm:$0xff] %vm2627, %v232
    %2634 = vst [vmem:[#allocation3] sm:$0xff] %v233
    // Predicated region
    $region69: #{tpu_custom_call.1} parent=1 // pred_check
      _
    $region70: #{tpu_custom_call.1} parent=1 // pred_check_branch
      %2636 = sbr.rel (0) target = $region72
    $region71: #{tpu_custom_call.1} parent=1 // pred_region
      %s2638 = ssub.s32 1280, 1280
      %2639 = vsyncadd [#allocation6], %s2638
      %s2640 = sshll.u32 [#allocation15], 4
      %s2641 = int_to_ptr.vmem [resolvable:$true] %s2640
      %2646 = dma.vmem_to_hbm [thread:$0]  %s2641, 1280, %s8, [#allocation6], 128, 128, 8
    $region72: #{tpu_custom_call.1} parent=1 // pred_fallthru
      _
    // Predicated region
    $region73: #{tpu_custom_call.1} parent=1 // pred_check
      _
    $region74: #{tpu_custom_call.1} parent=1 // pred_check_branch
      %2648 = sbr.rel (0) target = $region76
    $region75: #{tpu_custom_call.1} parent=1 // pred_region
      %2649 = dma.done [#allocation6], 1280
    $region76: #{tpu_custom_call.1} parent=1 // pred_fallthru
      _
    %2650 = vsyncpa [#allocation5], 1
    %2651 = vsyncpa [#allocation8], 1
    %2652 = vsyncpa [#allocation11], 1
    %2653 = vsyncpa [#allocation14], 1
    %2654 = vsyncpa [#allocation6], 1

</llo_original>
